<compile_context>
chip_gen: v7x
topology: tpu7x:2x2x1
jax: 0.10.0
libtpu: 0.0.40
codegen_flags: <defaults>
</compile_context>

<pallas_src>
import math

import jax
import jax.numpy as jnp
import numpy as np
from jax.experimental import pallas as pl
from jax.experimental.pallas import tpu as pltpu

# ----- small configuration consistent with TransformerModel structure -----
INPUT_DIM = 12                       # module default 26
EMBEDDING_DIM = 30                   # module default 256
HIDDEN_DIM = EMBEDDING_DIM + 2       # = 32 (embedding + 2 meta features)
HEAD_DIM = 8                         # hidden_dim_attention (module default 64)
N_HEADS = 4                          # module default 8
N_LAYERS = 2                         # module default 3
N_TASKS = 8                          # module default 40
FC_HIDDEN = 128
PROJ_DIM = N_HEADS * HEAD_DIM        # = 32
SEQ_LEN = 8
BATCH = 2
BS = BATCH * SEQ_LEN                 # = 16 (batch folded into sublanes)
LN_EPS = 1e-5


def transformer_kernel(seq_ref, metas_ref, emb_ref, pe_ref,
                       wqkv_ref, bqkv_ref, wo_ref, bo_ref, ln_g_ref, ln_b_ref,
                       fc1_hi_ref, fc1_lo_ref, fc1_b_ref, fc2_w_ref, fc2_b_ref,
                       out_ref):
    inv_sqrt_d = 1.0 / math.sqrt(HEAD_DIM)

    emb = emb_ref[...]                                       # (INPUT_DIM, H), last 2 cols zero
    pe = pe_ref[...]                                         # (S, H)
    col = jax.lax.broadcasted_iota(jnp.int32, (1, HIDDEN_DIM), 1)

    # ---- batch folded into sublanes: X is (B*S, H) ----
    # one-hot rows, both batches stacked along sublanes -> ONE embedding matmul
    seq01 = jnp.concatenate([seq_ref[:, 0, :], seq_ref[:, 1, :]], axis=0)   # (B*S, INPUT_DIM)

    # per-batch bias = positional encoding + metas folded into lanes 30/31
    bias_rows = []
    for b in range(BATCH):                                   # B=2, unrolled
        m0 = metas_ref[b, 0]                                 # SMEM scalars
        m1 = metas_ref[b, 1]
        meta_row = (jnp.where(col == EMBEDDING_DIM, m0, 0.0)
                    + jnp.where(col == EMBEDDING_DIM + 1, m1, 0.0))   # (1, H)
        bias_rows.append(pe + meta_row)                      # (S, H)
    bias = jnp.concatenate(bias_rows, axis=0)                # (B*S, H)

    x = jnp.dot(seq01, emb, preferred_element_type=jnp.float32) + bias      # (B*S, H)

    # ---- attention layers (residual + LayerNorm), batch-fused ----
    for l in range(N_LAYERS):
        # fused QKV: one (16,32)@(32,96) matmul per layer
        qkv = (jnp.dot(x, wqkv_ref[l], preferred_element_type=jnp.float32)
               + bqkv_ref[l:l + 1])                          # (B*S, 3*PROJ)
        q = qkv[:, 0:PROJ_DIM]
        k = qkv[:, PROJ_DIM:2 * PROJ_DIM]
        v = qkv[:, 2 * PROJ_DIM:3 * PROJ_DIM]
        wo = wo_ref[l]                                       # (PROJ, H)

        proj = jnp.zeros((BS, HIDDEN_DIM), jnp.float32)
        for h in range(N_HEADS):
            sl = slice(h * HEAD_DIM, (h + 1) * HEAD_DIM)
            ctxs = []
            for b in range(BATCH):                           # scores must stay per-batch
                rs = slice(b * SEQ_LEN, (b + 1) * SEQ_LEN)   # vreg-aligned sublane slice
                qh, kh, vh = q[rs, sl], k[rs, sl], v[rs, sl]
                s = jnp.einsum('qd,kd->qk', qh, kh,
                               preferred_element_type=jnp.float32) * inv_sqrt_d
                s = s - jnp.max(s, axis=-1, keepdims=True)
                e = jnp.exp(s)
                p = e / jnp.sum(e, axis=-1, keepdims=True)   # exact (correctness-test path)
                ctxs.append(jnp.dot(p, vh, preferred_element_type=jnp.float32))  # (S, D)
            ctx = jnp.concatenate(ctxs, axis=0)              # (B*S, HEAD_DIM)
            # per-head output projection folded; += chain -> MRB accumulate on v7x
            proj = proj + jnp.dot(ctx, wo[sl, :], preferred_element_type=jnp.float32)

        y = x + proj + bo_ref[l:l + 1]                       # residual
        mean = jnp.mean(y, axis=-1, keepdims=True)
        var = jnp.mean((y - mean) ** 2, axis=-1, keepdims=True)
        x = ((y - mean) * jax.lax.rsqrt(var + LN_EPS)
             * ln_g_ref[l:l + 1] + ln_b_ref[l:l + 1])        # (B*S, H)

    # ---- interval MLP head: full-height matmuls + static sublane shift ----
    h_hi = jnp.dot(x, fc1_hi_ref[...], preferred_element_type=jnp.float32)  # (B*S, FC)
    h_lo = jnp.dot(x, fc1_lo_ref[...], preferred_element_type=jnp.float32)  # (B*S, FC)
    # h1[j] = h_hi[j+1] + h_lo[j]; row j == SEQ_LEN-1 (j=7) mixes batch 0 and
    # batch 1 and is garbage -- it is dropped below and MUST never be stored.
    h1 = h_hi[1:, :] + h_lo[:-1, :] + fc1_b_ref[...]         # (B*S-1, FC)
    h1 = jnp.maximum(h1, 0.0)
    out2 = (jnp.dot(h1, fc2_w_ref[...], preferred_element_type=jnp.float32)
            + fc2_b_ref[...])                                # (B*S-1, N_TASKS)

    # lane-dense (S-1, B*N_TASKS) output slab; garbage row SEQ_LEN-1 skipped
    out_ref[:, :N_TASKS] = out2[:SEQ_LEN - 1, :].astype(out_ref.dtype)   # batch 0
    out_ref[:, N_TASKS:] = out2[SEQ_LEN:, :].astype(out_ref.dtype)       # batch 1


def transformer_forward(sequence_sbd, metas_b2, params):
    """sequence_sbd: (S, B, INPUT_DIM), metas_b2: (B, 2).  Returns (S-1, B, N_TASKS)."""
    def full(shape):
        n = len(shape)
        return pl.BlockSpec(shape, lambda i, _n=n: (0,) * _n)

    in_specs = [
        full((SEQ_LEN, BATCH, INPUT_DIM)),                               # sequence (seq-major)
        pl.BlockSpec(memory_space=pltpu.MemorySpace.SMEM),               # metas -> SMEM scalars
        full((INPUT_DIM, HIDDEN_DIM)),                                   # embedding W (zero-padded)
        full((SEQ_LEN, HIDDEN_DIM)),                                     # positional enc
        full((N_LAYERS, HIDDEN_DIM, 3 * PROJ_DIM)),                      # fused Wqkv
        full((N_LAYERS, 3 * PROJ_DIM)),                                  # fused bqkv
        full((N_LAYERS, PROJ_DIM, HIDDEN_DIM)),                          # wo
        full((N_LAYERS, HIDDEN_DIM)),                                    # bo
        full((N_LAYERS, HIDDEN_DIM)),                                    # ln gamma
        full((N_LAYERS, HIDDEN_DIM)),                                    # ln beta
        full((HIDDEN_DIM, FC_HIDDEN)),                                   # fc1 W (rows for x[1:])
        full((HIDDEN_DIM, FC_HIDDEN)),                                   # fc1 W (rows for x[:-1])
        full((1, FC_HIDDEN)),                                            # fc1 b
        full((FC_HIDDEN, N_TASKS)),                                      # fc2 W
        full((1, N_TASKS)),                                              # fc2 b
    ]

    out = pl.pallas_call(
        transformer_kernel,
        out_shape=jax.ShapeDtypeStruct((SEQ_LEN - 1, BATCH * N_TASKS), jnp.float32),
        grid=(1,),
        in_specs=in_specs,
        out_specs=full((SEQ_LEN - 1, BATCH * N_TASKS)),
        compiler_params=pltpu.CompilerParams(dimension_semantics=("arbitrary",)),
    )(sequence_sbd, metas_b2, *params)
    # free contiguous reshape: lanes [0:8) = batch 0, [8:16) = batch 1
    return out.reshape(SEQ_LEN - 1, BATCH, N_TASKS)


def sinusoidal_pe(seq_len, dim):
    pos = np.arange(seq_len, dtype=np.float32)[:, None]
    div = np.exp(np.arange(0, dim, 2, dtype=np.float32) * -(math.log(10000.0) / dim))
    pe = np.zeros((seq_len, dim), np.float32)
    pe[:, 0::2] = np.sin(pos * div)
    pe[:, 1::2] = np.cos(pos * div)
    return jnp.asarray(pe)


def init_params(key):
    ks = jax.random.split(key, 13)
    s = 0.05
    emb = jax.random.normal(ks[0], (INPUT_DIM, EMBEDDING_DIM), jnp.float32) * s
    emb_pad = jnp.pad(emb, ((0, 0), (0, HIDDEN_DIM - EMBEDDING_DIM)))   # zero meta lanes
    pe = sinusoidal_pe(SEQ_LEN, HIDDEN_DIM)
    wq = jax.random.normal(ks[1], (N_LAYERS, HIDDEN_DIM, PROJ_DIM), jnp.float32) * s
    bq = jax.random.normal(ks[2], (N_LAYERS, PROJ_DIM), jnp.float32) * s
    wk = jax.random.normal(ks[3], (N_LAYERS, HIDDEN_DIM, PROJ_DIM), jnp.float32) * s
    bk = jax.random.normal(ks[4], (N_LAYERS, PROJ_DIM), jnp.float32) * s
    wv = jax.random.normal(ks[5], (N_LAYERS, HIDDEN_DIM, PROJ_DIM), jnp.float32) * s
    bv = jax.random.normal(ks[6], (N_LAYERS, PROJ_DIM), jnp.float32) * s
    # lane-wise fused QKV projection
    wqkv = jnp.concatenate([wq, wk, wv], axis=2)            # (L, H, 3*PROJ)
    bqkv = jnp.concatenate([bq, bk, bv], axis=1)            # (L, 3*PROJ)
    wo = jax.random.normal(ks[7], (N_LAYERS, PROJ_DIM, HIDDEN_DIM), jnp.float32) * s
    bo = jax.random.normal(ks[8], (N_LAYERS, HIDDEN_DIM), jnp.float32) * s
    ln_g = jnp.ones((N_LAYERS, HIDDEN_DIM), jnp.float32)
    ln_b = jnp.zeros((N_LAYERS, HIDDEN_DIM), jnp.float32)
    fc1_w = jax.random.normal(ks[9], (2 * HIDDEN_DIM, FC_HIDDEN), jnp.float32) * s
    fc1_hi = fc1_w[:HIDDEN_DIM]          # multiplies x[1:]
    fc1_lo = fc1_w[HIDDEN_DIM:]          # multiplies x[:-1]
    fc1_b = jax.random.normal(ks[10], (1, FC_HIDDEN), jnp.float32) * s
    fc2_w = jax.random.normal(ks[11], (FC_HIDDEN, N_TASKS), jnp.float32) * s
    fc2_b = jax.random.normal(ks[12], (1, N_TASKS), jnp.float32) * s
    return (emb_pad, pe, wqkv, bqkv, wo, bo, ln_g, ln_b,
            fc1_hi, fc1_lo, fc1_b, fc2_w, fc2_b)


def reference_forward(sequence_sbd, metas_b2, params):
    """Faithful pure-JAX reference at HIGHEST matmul precision."""
    (emb_pad, pe, wqkv, bqkv, wo, bo, ln_g, ln_b,
     fc1_hi, fc1_lo, fc1_b, fc2_w, fc2_b) = params
    emb = emb_pad[:, :EMBEDDING_DIM]
    fc1_w = jnp.concatenate([fc1_hi, fc1_lo], axis=0)
    hp = jax.lax.Precision.HIGHEST
    outs = []
    for b in range(BATCH):
        seq = sequence_sbd[:, b, :]
        x = jnp.concatenate(
            [jnp.dot(seq, emb, precision=hp),
             jnp.broadcast_to(metas_b2[b][None, :], (SEQ_LEN, 2))], axis=1)
        x = x + pe
        for l in range(N_LAYERS):
            qkv = jnp.dot(x, wqkv[l], precision=hp) + bqkv[l]
            q = qkv[:, 0:PROJ_DIM]
            k = qkv[:, PROJ_DIM:2 * PROJ_DIM]
            v = qkv[:, 2 * PROJ_DIM:3 * PROJ_DIM]
            hs = []
            for h in range(N_HEADS):
                sl = slice(h * HEAD_DIM, (h + 1) * HEAD_DIM)
                sc = jnp.dot(q[:, sl], k[:, sl].T, precision=hp) / math.sqrt(HEAD_DIM)
                hs.append(jnp.dot(jax.nn.softmax(sc, axis=-1), v[:, sl], precision=hp))
            proj = jnp.dot(jnp.concatenate(hs, axis=1), wo[l], precision=hp) + bo[l]
            y = x + proj
            mean = jnp.mean(y, -1, keepdims=True)
            var = jnp.mean((y - mean) ** 2, -1, keepdims=True)
            x = (y - mean) * jax.lax.rsqrt(var + LN_EPS) * ln_g[l] + ln_b[l]
        intervals = jnp.concatenate([x[1:], x[:-1]], axis=1)
        h1 = jnp.maximum(jnp.dot(intervals, fc1_w, precision=hp) + fc1_b, 0.0)
        outs.append(jnp.dot(h1, fc2_w, precision=hp) + fc2_b)
    return jnp.stack(outs, axis=1)   # (S-1, B, N_TASKS)


if __name__ == "__main__":
    key = jax.random.PRNGKey(0)
    k_tok, k_meta, k_par = jax.random.split(key, 3)

    tokens = jax.random.randint(k_tok, (SEQ_LEN, BATCH), 0, INPUT_DIM)
    sequence = jax.nn.one_hot(tokens, INPUT_DIM, dtype=jnp.float32)   # (S, B, INPUT_DIM)
    metas = jax.random.normal(k_meta, (BATCH, 2), jnp.float32)        # (B, 2)
    params = init_params(k_par)

    out = transformer_forward(sequence, metas, params)
    out = jax.block_until_ready(out)
    assert out.shape == (SEQ_LEN - 1, BATCH, N_TASKS)

    ref = reference_forward(sequence, metas, params)
    # kernel runs at default (single-pass) MXU precision, reference at HIGHEST
    # -> compare with a looser 2e-2 tolerance (softmax uses exact division).
    np.testing.assert_allclose(np.asarray(out), np.asarray(ref), rtol=2e-2, atol=2e-2)

    print("KERNEL_OK")
</pallas_src>

<mosaic_0001>
module attributes {stable_mosaic.version = 11 : i64} {
  func.func @transformer_kernel(%arg0: i32, %arg1: memref<8x2x12xf32, #tpu.memory_space<vmem>>, %arg2: memref<2x2xf32, #tpu.memory_space<smem>>, %arg3: memref<12x32xf32, #tpu.memory_space<vmem>>, %arg4: memref<8x32xf32, #tpu.memory_space<vmem>>, %arg5: memref<2x32x96xf32, #tpu.memory_space<vmem>>, %arg6: memref<2x96xf32, #tpu.memory_space<vmem>>, %arg7: memref<2x32x32xf32, #tpu.memory_space<vmem>>, %arg8: memref<2x32xf32, #tpu.memory_space<vmem>>, %arg9: memref<2x32xf32, #tpu.memory_space<vmem>>, %arg10: memref<2x32xf32, #tpu.memory_space<vmem>>, %arg11: memref<32x128xf32, #tpu.memory_space<vmem>>, %arg12: memref<32x128xf32, #tpu.memory_space<vmem>>, %arg13: memref<1x128xf32, #tpu.memory_space<vmem>>, %arg14: memref<128x8xf32, #tpu.memory_space<vmem>>, %arg15: memref<1x8xf32, #tpu.memory_space<vmem>>, %arg16: memref<7x16xf32, #tpu.memory_space<vmem>>) attributes {dimension_semantics = [#tpu.dimension_semantics<arbitrary>], iteration_bounds = array<i64: 1>, scalar_prefetch = 0 : i64, scratch_operands = 0 : i64, tpu.core_type = #tpu.core_type<tc>, window_params = [{pipeline_mode = #tpu.pipeline_mode<synchronous>, transform_indices = @transform_0, window_bounds = array<i64: 8, 2, 12>}, {transform_indices = @transform_1, window_bounds = array<i64: 2, 2>}, {pipeline_mode = #tpu.pipeline_mode<synchronous>, transform_indices = @transform_2, window_bounds = array<i64: 12, 32>}, {pipeline_mode = #tpu.pipeline_mode<synchronous>, transform_indices = @transform_3, window_bounds = array<i64: 8, 32>}, {pipeline_mode = #tpu.pipeline_mode<synchronous>, transform_indices = @transform_4, window_bounds = array<i64: 2, 32, 96>}, {pipeline_mode = #tpu.pipeline_mode<synchronous>, transform_indices = @transform_5, window_bounds = array<i64: 2, 96>}, {pipeline_mode = #tpu.pipeline_mode<synchronous>, transform_indices = @transform_6, window_bounds = array<i64: 2, 32, 32>}, {pipeline_mode = #tpu.pipeline_mode<synchronous>, transform_indices = @transform_7, window_bounds = array<i64: 2, 32>}, {pipeline_mode = #tpu.pipeline_mode<synchronous>, transform_indices = @transform_8, window_bounds = array<i64: 2, 32>}, {pipeline_mode = #tpu.pipeline_mode<synchronous>, transform_indices = @transform_9, window_bounds = array<i64: 2, 32>}, {pipeline_mode = #tpu.pipeline_mode<synchronous>, transform_indices = @transform_10, window_bounds = array<i64: 32, 128>}, {pipeline_mode = #tpu.pipeline_mode<synchronous>, transform_indices = @transform_11, window_bounds = array<i64: 32, 128>}, {pipeline_mode = #tpu.pipeline_mode<synchronous>, transform_indices = @transform_12, window_bounds = array<i64: 1, 128>}, {pipeline_mode = #tpu.pipeline_mode<synchronous>, transform_indices = @transform_13, window_bounds = array<i64: 128, 8>}, {pipeline_mode = #tpu.pipeline_mode<synchronous>, transform_indices = @transform_14, window_bounds = array<i64: 1, 8>}, {pipeline_mode = #tpu.pipeline_mode<synchronous>, transform_indices = @transform_15, window_bounds = array<i64: 7, 16>}]} {
    %c0 = arith.constant 0 : index
    %c0_0 = arith.constant 0 : index
    %0 = vector.load %arg3[%c0, %c0_0] : memref<12x32xf32, #tpu.memory_space<vmem>>, vector<12x32xf32>
    %c0_1 = arith.constant 0 : index
    %c0_2 = arith.constant 0 : index
    %1 = vector.load %arg4[%c0_1, %c0_2] : memref<8x32xf32, #tpu.memory_space<vmem>>, vector<8x32xf32>
    %2 = tpu.iota {dimensions = array<i32: 1>} : vector<1x32xi32>
    %c0_3 = arith.constant 0 : index
    %c0_4 = arith.constant 0 : index
    %c0_5 = arith.constant 0 : index
    %3 = vector.load %arg1[%c0_3, %c0_4, %c0_5] : memref<8x2x12xf32, #tpu.memory_space<vmem>>, vector<8x1x12xf32>
    %4 = vector.shape_cast %3 : vector<8x1x12xf32> to vector<8x12xf32>
    %c0_6 = arith.constant 0 : index
    %c1 = arith.constant 1 : index
    %c0_7 = arith.constant 0 : index
    %5 = vector.load %arg1[%c0_6, %c1, %c0_7] : memref<8x2x12xf32, #tpu.memory_space<vmem>>, vector<8x1x12xf32>
    %6 = vector.shape_cast %5 : vector<8x1x12xf32> to vector<8x12xf32>
    %7 = tpu.concatenate %4, %6 in 0 : vector<8x12xf32>, vector<8x12xf32> -> vector<16x12xf32>
    %c0_8 = arith.constant 0 : index
    %c0_9 = arith.constant 0 : index
    %8 = memref.load %arg2[%c0_8, %c0_9] : memref<2x2xf32, #tpu.memory_space<smem>>
    %c0_10 = arith.constant 0 : index
    %c1_11 = arith.constant 1 : index
    %9 = memref.load %arg2[%c0_10, %c1_11] : memref<2x2xf32, #tpu.memory_space<smem>>
    %c30_i32 = arith.constant 30 : i32
    %10 = vector.broadcast %c30_i32 : i32 to vector<1x32xi32>
    %11 = arith.cmpi eq, %2, %10 : vector<1x32xi32>
    %cst = arith.constant 0.000000e+00 : f32
    %12 = vector.broadcast %8 : f32 to vector<1x32xf32>
    %13 = vector.broadcast %cst : f32 to vector<1x32xf32>
    %14 = arith.select %11, %12, %13 : vector<1x32xi1>, vector<1x32xf32>
    %c31_i32 = arith.constant 31 : i32
    %15 = vector.broadcast %c31_i32 : i32 to vector<1x32xi32>
    %16 = arith.cmpi eq, %2, %15 : vector<1x32xi32>
    %cst_12 = arith.constant 0.000000e+00 : f32
    %17 = vector.broadcast %9 : f32 to vector<1x32xf32>
    %18 = vector.broadcast %cst_12 : f32 to vector<1x32xf32>
    %19 = arith.select %16, %17, %18 : vector<1x32xi1>, vector<1x32xf32>
    %20 = arith.addf %14, %19 : vector<1x32xf32>
    %21 = vector.broadcast %20 : vector<1x32xf32> to vector<8x32xf32>
    %22 = arith.addf %1, %21 : vector<8x32xf32>
    %c1_13 = arith.constant 1 : index
    %c0_14 = arith.constant 0 : index
    %23 = memref.load %arg2[%c1_13, %c0_14] : memref<2x2xf32, #tpu.memory_space<smem>>
    %c1_15 = arith.constant 1 : index
    %c1_16 = arith.constant 1 : index
    %24 = memref.load %arg2[%c1_15, %c1_16] : memref<2x2xf32, #tpu.memory_space<smem>>
    %c30_i32_17 = arith.constant 30 : i32
    %25 = vector.broadcast %c30_i32_17 : i32 to vector<1x32xi32>
    %26 = arith.cmpi eq, %2, %25 : vector<1x32xi32>
    %cst_18 = arith.constant 0.000000e+00 : f32
    %27 = vector.broadcast %23 : f32 to vector<1x32xf32>
    %28 = vector.broadcast %cst_18 : f32 to vector<1x32xf32>
    %29 = arith.select %26, %27, %28 : vector<1x32xi1>, vector<1x32xf32>
    %c31_i32_19 = arith.constant 31 : i32
    %30 = vector.broadcast %c31_i32_19 : i32 to vector<1x32xi32>
    %31 = arith.cmpi eq, %2, %30 : vector<1x32xi32>
    %cst_20 = arith.constant 0.000000e+00 : f32
    %32 = vector.broadcast %24 : f32 to vector<1x32xf32>
    %33 = vector.broadcast %cst_20 : f32 to vector<1x32xf32>
    %34 = arith.select %31, %32, %33 : vector<1x32xi1>, vector<1x32xf32>
    %35 = arith.addf %29, %34 : vector<1x32xf32>
    %36 = vector.broadcast %35 : vector<1x32xf32> to vector<8x32xf32>
    %37 = arith.addf %1, %36 : vector<8x32xf32>
    %38 = tpu.concatenate %22, %37 in 0 : vector<8x32xf32>, vector<8x32xf32> -> vector<16x32xf32>
    %cst_21 = arith.constant dense<0.000000e+00> : vector<16x32xf32>
    %39 = tpu.matmul %7, %0, %cst_21 {dimension_numbers = #tpu.dot_dimension_numbers<[1], [0], [0], [1], [0, 0, 1, 1], [], []>} : vector<16x12xf32>, vector<12x32xf32>, vector<16x32xf32> -> vector<16x32xf32>
    %40 = arith.addf %39, %38 : vector<16x32xf32>
    %c0_22 = arith.constant 0 : index
    %c0_23 = arith.constant 0 : index
    %c0_24 = arith.constant 0 : index
    %41 = vector.load %arg5[%c0_22, %c0_23, %c0_24] : memref<2x32x96xf32, #tpu.memory_space<vmem>>, vector<1x32x96xf32>
    %42 = vector.shape_cast %41 : vector<1x32x96xf32> to vector<32x96xf32>
    %cst_25 = arith.constant dense<0.000000e+00> : vector<16x96xf32>
    %43 = tpu.matmul %40, %42, %cst_25 {dimension_numbers = #tpu.dot_dimension_numbers<[1], [0], [0], [1], [0, 0, 1, 1], [], []>} : vector<16x32xf32>, vector<32x96xf32>, vector<16x96xf32> -> vector<16x96xf32>
    %c0_26 = arith.constant 0 : index
    %c0_27 = arith.constant 0 : index
    %44 = vector.load %arg6[%c0_26, %c0_27] : memref<2x96xf32, #tpu.memory_space<vmem>>, vector<1x96xf32>
    %45 = vector.broadcast %44 : vector<1x96xf32> to vector<16x96xf32>
    %46 = arith.addf %43, %45 : vector<16x96xf32>
    %47 = vector.extract_strided_slice %46 {offsets = [0, 0], sizes = [16, 32], strides = [1, 1]} : vector<16x96xf32> to vector<16x32xf32>
    %48 = vector.extract_strided_slice %46 {offsets = [0, 32], sizes = [16, 32], strides = [1, 1]} : vector<16x96xf32> to vector<16x32xf32>
    %49 = vector.extract_strided_slice %46 {offsets = [0, 64], sizes = [16, 32], strides = [1, 1]} : vector<16x96xf32> to vector<16x32xf32>
    %c0_28 = arith.constant 0 : index
    %c0_29 = arith.constant 0 : index
    %c0_30 = arith.constant 0 : index
    %50 = vector.load %arg7[%c0_28, %c0_29, %c0_30] : memref<2x32x32xf32, #tpu.memory_space<vmem>>, vector<1x32x32xf32>
    %51 = vector.shape_cast %50 : vector<1x32x32xf32> to vector<32x32xf32>
    %cst_31 = arith.constant 0.000000e+00 : f32
    %52 = vector.broadcast %cst_31 : f32 to vector<16x32xf32>
    %53 = vector.extract_strided_slice %47 {offsets = [0, 0], sizes = [8, 8], strides = [1, 1]} : vector<16x32xf32> to vector<8x8xf32>
    %54 = vector.extract_strided_slice %48 {offsets = [0, 0], sizes = [8, 8], strides = [1, 1]} : vector<16x32xf32> to vector<8x8xf32>
    %55 = vector.extract_strided_slice %49 {offsets = [0, 0], sizes = [8, 8], strides = [1, 1]} : vector<16x32xf32> to vector<8x8xf32>
    "tpu.trace_start"() <{level = 10 : i32, message = "qd,kd->qk"}> : () -> ()
    %cst_32 = arith.constant dense<0.000000e+00> : vector<8x8xf32>
    %56 = tpu.matmul %53, %54, %cst_32 {dimension_numbers = #tpu.dot_dimension_numbers<[1], [1], [0], [0], [0, 0, 1, 0], [], []>} : vector<8x8xf32>, vector<8x8xf32>, vector<8x8xf32> -> vector<8x8xf32>
    "tpu.trace_stop"() : () -> ()
    %cst_33 = arith.constant 0.353553385 : f32
    %57 = vector.broadcast %cst_33 : f32 to vector<8x8xf32>
    %58 = arith.mulf %56, %57 : vector<8x8xf32>
    %cst_34 = arith.constant dense<0xFF800000> : vector<8xf32>
    %59 = vector.multi_reduction <maximumf>, %58, %cst_34 [1] : vector<8x8xf32> to vector<8xf32>
    %60 = vector.shape_cast %59 : vector<8xf32> to vector<8x1xf32>
    %61 = vector.broadcast %60 : vector<8x1xf32> to vector<8x8xf32>
    %62 = arith.subf %58, %61 : vector<8x8xf32>
    %63 = math.exp %62 : vector<8x8xf32>
    %cst_35 = arith.constant dense<0.000000e+00> : vector<8xf32>
    %64 = vector.multi_reduction <add>, %63, %cst_35 [1] : vector<8x8xf32> to vector<8xf32>
    %65 = vector.shape_cast %64 : vector<8xf32> to vector<8x1xf32>
    %66 = vector.broadcast %65 : vector<8x1xf32> to vector<8x8xf32>
    %67 = arith.divf %63, %66 : vector<8x8xf32>
    %cst_36 = arith.constant dense<0.000000e+00> : vector<8x8xf32>
    %68 = tpu.matmul %67, %55, %cst_36 {dimension_numbers = #tpu.dot_dimension_numbers<[1], [0], [0], [1], [0, 0, 1, 1], [], []>} : vector<8x8xf32>, vector<8x8xf32>, vector<8x8xf32> -> vector<8x8xf32>
    %69 = vector.extract_strided_slice %47 {offsets = [8, 0], sizes = [8, 8], strides = [1, 1]} : vector<16x32xf32> to vector<8x8xf32>
    %70 = vector.extract_strided_slice %48 {offsets = [8, 0], sizes = [8, 8], strides = [1, 1]} : vector<16x32xf32> to vector<8x8xf32>
    %71 = vector.extract_strided_slice %49 {offsets = [8, 0], sizes = [8, 8], strides = [1, 1]} : vector<16x32xf32> to vector<8x8xf32>
    "tpu.trace_start"() <{level = 10 : i32, message = "qd,kd->qk"}> : () -> ()
    %cst_37 = arith.constant dense<0.000000e+00> : vector<8x8xf32>
    %72 = tpu.matmul %69, %70, %cst_37 {dimension_numbers = #tpu.dot_dimension_numbers<[1], [1], [0], [0], [0, 0, 1, 0], [], []>} : vector<8x8xf32>, vector<8x8xf32>, vector<8x8xf32> -> vector<8x8xf32>
    "tpu.trace_stop"() : () -> ()
    %cst_38 = arith.constant 0.353553385 : f32
    %73 = vector.broadcast %cst_38 : f32 to vector<8x8xf32>
    %74 = arith.mulf %72, %73 : vector<8x8xf32>
    %cst_39 = arith.constant dense<0xFF800000> : vector<8xf32>
    %75 = vector.multi_reduction <maximumf>, %74, %cst_39 [1] : vector<8x8xf32> to vector<8xf32>
    %76 = vector.shape_cast %75 : vector<8xf32> to vector<8x1xf32>
    %77 = vector.broadcast %76 : vector<8x1xf32> to vector<8x8xf32>
    %78 = arith.subf %74, %77 : vector<8x8xf32>
    %79 = math.exp %78 : vector<8x8xf32>
    %cst_40 = arith.constant dense<0.000000e+00> : vector<8xf32>
    %80 = vector.multi_reduction <add>, %79, %cst_40 [1] : vector<8x8xf32> to vector<8xf32>
    %81 = vector.shape_cast %80 : vector<8xf32> to vector<8x1xf32>
    %82 = vector.broadcast %81 : vector<8x1xf32> to vector<8x8xf32>
    %83 = arith.divf %79, %82 : vector<8x8xf32>
    %cst_41 = arith.constant dense<0.000000e+00> : vector<8x8xf32>
    %84 = tpu.matmul %83, %71, %cst_41 {dimension_numbers = #tpu.dot_dimension_numbers<[1], [0], [0], [1], [0, 0, 1, 1], [], []>} : vector<8x8xf32>, vector<8x8xf32>, vector<8x8xf32> -> vector<8x8xf32>
    %85 = tpu.concatenate %68, %84 in 0 : vector<8x8xf32>, vector<8x8xf32> -> vector<16x8xf32>
    %86 = vector.extract_strided_slice %51 {offsets = [0, 0], sizes = [8, 32], strides = [1, 1]} : vector<32x32xf32> to vector<8x32xf32>
    %cst_42 = arith.constant dense<0.000000e+00> : vector<16x32xf32>
    %87 = tpu.matmul %85, %86, %cst_42 {dimension_numbers = #tpu.dot_dimension_numbers<[1], [0], [0], [1], [0, 0, 1, 1], [], []>} : vector<16x8xf32>, vector<8x32xf32>, vector<16x32xf32> -> vector<16x32xf32>
    %88 = arith.addf %52, %87 : vector<16x32xf32>
    %89 = vector.extract_strided_slice %47 {offsets = [0, 8], sizes = [8, 8], strides = [1, 1]} : vector<16x32xf32> to vector<8x8xf32>
    %90 = vector.extract_strided_slice %48 {offsets = [0, 8], sizes = [8, 8], strides = [1, 1]} : vector<16x32xf32> to vector<8x8xf32>
    %91 = vector.extract_strided_slice %49 {offsets = [0, 8], sizes = [8, 8], strides = [1, 1]} : vector<16x32xf32> to vector<8x8xf32>
    "tpu.trace_start"() <{level = 10 : i32, message = "qd,kd->qk"}> : () -> ()
    %cst_43 = arith.constant dense<0.000000e+00> : vector<8x8xf32>
    %92 = tpu.matmul %89, %90, %cst_43 {dimension_numbers = #tpu.dot_dimension_numbers<[1], [1], [0], [0], [0, 0, 1, 0], [], []>} : vector<8x8xf32>, vector<8x8xf32>, vector<8x8xf32> -> vector<8x8xf32>
    "tpu.trace_stop"() : () -> ()
    %cst_44 = arith.constant 0.353553385 : f32
    %93 = vector.broadcast %cst_44 : f32 to vector<8x8xf32>
    %94 = arith.mulf %92, %93 : vector<8x8xf32>
    %cst_45 = arith.constant dense<0xFF800000> : vector<8xf32>
    %95 = vector.multi_reduction <maximumf>, %94, %cst_45 [1] : vector<8x8xf32> to vector<8xf32>
    %96 = vector.shape_cast %95 : vector<8xf32> to vector<8x1xf32>
    %97 = vector.broadcast %96 : vector<8x1xf32> to vector<8x8xf32>
    %98 = arith.subf %94, %97 : vector<8x8xf32>
    %99 = math.exp %98 : vector<8x8xf32>
    %cst_46 = arith.constant dense<0.000000e+00> : vector<8xf32>
    %100 = vector.multi_reduction <add>, %99, %cst_46 [1] : vector<8x8xf32> to vector<8xf32>
    %101 = vector.shape_cast %100 : vector<8xf32> to vector<8x1xf32>
    %102 = vector.broadcast %101 : vector<8x1xf32> to vector<8x8xf32>
    %103 = arith.divf %99, %102 : vector<8x8xf32>
    %cst_47 = arith.constant dense<0.000000e+00> : vector<8x8xf32>
    %104 = tpu.matmul %103, %91, %cst_47 {dimension_numbers = #tpu.dot_dimension_numbers<[1], [0], [0], [1], [0, 0, 1, 1], [], []>} : vector<8x8xf32>, vector<8x8xf32>, vector<8x8xf32> -> vector<8x8xf32>
    %105 = vector.extract_strided_slice %47 {offsets = [8, 8], sizes = [8, 8], strides = [1, 1]} : vector<16x32xf32> to vector<8x8xf32>
    %106 = vector.extract_strided_slice %48 {offsets = [8, 8], sizes = [8, 8], strides = [1, 1]} : vector<16x32xf32> to vector<8x8xf32>
    %107 = vector.extract_strided_slice %49 {offsets = [8, 8], sizes = [8, 8], strides = [1, 1]} : vector<16x32xf32> to vector<8x8xf32>
    "tpu.trace_start"() <{level = 10 : i32, message = "qd,kd->qk"}> : () -> ()
    %cst_48 = arith.constant dense<0.000000e+00> : vector<8x8xf32>
    %108 = tpu.matmul %105, %106, %cst_48 {dimension_numbers = #tpu.dot_dimension_numbers<[1], [1], [0], [0], [0, 0, 1, 0], [], []>} : vector<8x8xf32>, vector<8x8xf32>, vector<8x8xf32> -> vector<8x8xf32>
    "tpu.trace_stop"() : () -> ()
    %cst_49 = arith.constant 0.353553385 : f32
    %109 = vector.broadcast %cst_49 : f32 to vector<8x8xf32>
    %110 = arith.mulf %108, %109 : vector<8x8xf32>
    %cst_50 = arith.constant dense<0xFF800000> : vector<8xf32>
    %111 = vector.multi_reduction <maximumf>, %110, %cst_50 [1] : vector<8x8xf32> to vector<8xf32>
    %112 = vector.shape_cast %111 : vector<8xf32> to vector<8x1xf32>
    %113 = vector.broadcast %112 : vector<8x1xf32> to vector<8x8xf32>
    %114 = arith.subf %110, %113 : vector<8x8xf32>
    %115 = math.exp %114 : vector<8x8xf32>
    %cst_51 = arith.constant dense<0.000000e+00> : vector<8xf32>
    %116 = vector.multi_reduction <add>, %115, %cst_51 [1] : vector<8x8xf32> to vector<8xf32>
    %117 = vector.shape_cast %116 : vector<8xf32> to vector<8x1xf32>
    %118 = vector.broadcast %117 : vector<8x1xf32> to vector<8x8xf32>
    %119 = arith.divf %115, %118 : vector<8x8xf32>
    %cst_52 = arith.constant dense<0.000000e+00> : vector<8x8xf32>
    %120 = tpu.matmul %119, %107, %cst_52 {dimension_numbers = #tpu.dot_dimension_numbers<[1], [0], [0], [1], [0, 0, 1, 1], [], []>} : vector<8x8xf32>, vector<8x8xf32>, vector<8x8xf32> -> vector<8x8xf32>
    %121 = tpu.concatenate %104, %120 in 0 : vector<8x8xf32>, vector<8x8xf32> -> vector<16x8xf32>
    %122 = vector.extract_strided_slice %51 {offsets = [8, 0], sizes = [8, 32], strides = [1, 1]} : vector<32x32xf32> to vector<8x32xf32>
    %cst_53 = arith.constant dense<0.000000e+00> : vector<16x32xf32>
    %123 = tpu.matmul %121, %122, %cst_53 {dimension_numbers = #tpu.dot_dimension_numbers<[1], [0], [0], [1], [0, 0, 1, 1], [], []>} : vector<16x8xf32>, vector<8x32xf32>, vector<16x32xf32> -> vector<16x32xf32>
    %124 = arith.addf %88, %123 : vector<16x32xf32>
    %125 = vector.extract_strided_slice %47 {offsets = [0, 16], sizes = [8, 8], strides = [1, 1]} : vector<16x32xf32> to vector<8x8xf32>
    %126 = vector.extract_strided_slice %48 {offsets = [0, 16], sizes = [8, 8], strides = [1, 1]} : vector<16x32xf32> to vector<8x8xf32>
    %127 = vector.extract_strided_slice %49 {offsets = [0, 16], sizes = [8, 8], strides = [1, 1]} : vector<16x32xf32> to vector<8x8xf32>
    "tpu.trace_start"() <{level = 10 : i32, message = "qd,kd->qk"}> : () -> ()
    %cst_54 = arith.constant dense<0.000000e+00> : vector<8x8xf32>
    %128 = tpu.matmul %125, %126, %cst_54 {dimension_numbers = #tpu.dot_dimension_numbers<[1], [1], [0], [0], [0, 0, 1, 0], [], []>} : vector<8x8xf32>, vector<8x8xf32>, vector<8x8xf32> -> vector<8x8xf32>
    "tpu.trace_stop"() : () -> ()
    %cst_55 = arith.constant 0.353553385 : f32
    %129 = vector.broadcast %cst_55 : f32 to vector<8x8xf32>
    %130 = arith.mulf %128, %129 : vector<8x8xf32>
    %cst_56 = arith.constant dense<0xFF800000> : vector<8xf32>
    %131 = vector.multi_reduction <maximumf>, %130, %cst_56 [1] : vector<8x8xf32> to vector<8xf32>
    %132 = vector.shape_cast %131 : vector<8xf32> to vector<8x1xf32>
    %133 = vector.broadcast %132 : vector<8x1xf32> to vector<8x8xf32>
    %134 = arith.subf %130, %133 : vector<8x8xf32>
    %135 = math.exp %134 : vector<8x8xf32>
    %cst_57 = arith.constant dense<0.000000e+00> : vector<8xf32>
    %136 = vector.multi_reduction <add>, %135, %cst_57 [1] : vector<8x8xf32> to vector<8xf32>
    %137 = vector.shape_cast %136 : vector<8xf32> to vector<8x1xf32>
    %138 = vector.broadcast %137 : vector<8x1xf32> to vector<8x8xf32>
    %139 = arith.divf %135, %138 : vector<8x8xf32>
    %cst_58 = arith.constant dense<0.000000e+00> : vector<8x8xf32>
    %140 = tpu.matmul %139, %127, %cst_58 {dimension_numbers = #tpu.dot_dimension_numbers<[1], [0], [0], [1], [0, 0, 1, 1], [], []>} : vector<8x8xf32>, vector<8x8xf32>, vector<8x8xf32> -> vector<8x8xf32>
    %141 = vector.extract_strided_slice %47 {offsets = [8, 16], sizes = [8, 8], strides = [1, 1]} : vector<16x32xf32> to vector<8x8xf32>
    %142 = vector.extract_strided_slice %48 {offsets = [8, 16], sizes = [8, 8], strides = [1, 1]} : vector<16x32xf32> to vector<8x8xf32>
    %143 = vector.extract_strided_slice %49 {offsets = [8, 16], sizes = [8, 8], strides = [1, 1]} : vector<16x32xf32> to vector<8x8xf32>
    "tpu.trace_start"() <{level = 10 : i32, message = "qd,kd->qk"}> : () -> ()
    %cst_59 = arith.constant dense<0.000000e+00> : vector<8x8xf32>
    %144 = tpu.matmul %141, %142, %cst_59 {dimension_numbers = #tpu.dot_dimension_numbers<[1], [1], [0], [0], [0, 0, 1, 0], [], []>} : vector<8x8xf32>, vector<8x8xf32>, vector<8x8xf32> -> vector<8x8xf32>
    "tpu.trace_stop"() : () -> ()
    %cst_60 = arith.constant 0.353553385 : f32
    %145 = vector.broadcast %cst_60 : f32 to vector<8x8xf32>
    %146 = arith.mulf %144, %145 : vector<8x8xf32>
    %cst_61 = arith.constant dense<0xFF800000> : vector<8xf32>
    %147 = vector.multi_reduction <maximumf>, %146, %cst_61 [1] : vector<8x8xf32> to vector<8xf32>
    %148 = vector.shape_cast %147 : vector<8xf32> to vector<8x1xf32>
    %149 = vector.broadcast %148 : vector<8x1xf32> to vector<8x8xf32>
    %150 = arith.subf %146, %149 : vector<8x8xf32>
    %151 = math.exp %150 : vector<8x8xf32>
    %cst_62 = arith.constant dense<0.000000e+00> : vector<8xf32>
    %152 = vector.multi_reduction <add>, %151, %cst_62 [1] : vector<8x8xf32> to vector<8xf32>
    %153 = vector.shape_cast %152 : vector<8xf32> to vector<8x1xf32>
    %154 = vector.broadcast %153 : vector<8x1xf32> to vector<8x8xf32>
    %155 = arith.divf %151, %154 : vector<8x8xf32>
    %cst_63 = arith.constant dense<0.000000e+00> : vector<8x8xf32>
    %156 = tpu.matmul %155, %143, %cst_63 {dimension_numbers = #tpu.dot_dimension_numbers<[1], [0], [0], [1], [0, 0, 1, 1], [], []>} : vector<8x8xf32>, vector<8x8xf32>, vector<8x8xf32> -> vector<8x8xf32>
    %157 = tpu.concatenate %140, %156 in 0 : vector<8x8xf32>, vector<8x8xf32> -> vector<16x8xf32>
    %158 = vector.extract_strided_slice %51 {offsets = [16, 0], sizes = [8, 32], strides = [1, 1]} : vector<32x32xf32> to vector<8x32xf32>
    %cst_64 = arith.constant dense<0.000000e+00> : vector<16x32xf32>
    %159 = tpu.matmul %157, %158, %cst_64 {dimension_numbers = #tpu.dot_dimension_numbers<[1], [0], [0], [1], [0, 0, 1, 1], [], []>} : vector<16x8xf32>, vector<8x32xf32>, vector<16x32xf32> -> vector<16x32xf32>
    %160 = arith.addf %124, %159 : vector<16x32xf32>
    %161 = vector.extract_strided_slice %47 {offsets = [0, 24], sizes = [8, 8], strides = [1, 1]} : vector<16x32xf32> to vector<8x8xf32>
    %162 = vector.extract_strided_slice %48 {offsets = [0, 24], sizes = [8, 8], strides = [1, 1]} : vector<16x32xf32> to vector<8x8xf32>
    %163 = vector.extract_strided_slice %49 {offsets = [0, 24], sizes = [8, 8], strides = [1, 1]} : vector<16x32xf32> to vector<8x8xf32>
    "tpu.trace_start"() <{level = 10 : i32, message = "qd,kd->qk"}> : () -> ()
    %cst_65 = arith.constant dense<0.000000e+00> : vector<8x8xf32>
    %164 = tpu.matmul %161, %162, %cst_65 {dimension_numbers = #tpu.dot_dimension_numbers<[1], [1], [0], [0], [0, 0, 1, 0], [], []>} : vector<8x8xf32>, vector<8x8xf32>, vector<8x8xf32> -> vector<8x8xf32>
    "tpu.trace_stop"() : () -> ()
    %cst_66 = arith.constant 0.353553385 : f32
    %165 = vector.broadcast %cst_66 : f32 to vector<8x8xf32>
    %166 = arith.mulf %164, %165 : vector<8x8xf32>
    %cst_67 = arith.constant dense<0xFF800000> : vector<8xf32>
    %167 = vector.multi_reduction <maximumf>, %166, %cst_67 [1] : vector<8x8xf32> to vector<8xf32>
    %168 = vector.shape_cast %167 : vector<8xf32> to vector<8x1xf32>
    %169 = vector.broadcast %168 : vector<8x1xf32> to vector<8x8xf32>
    %170 = arith.subf %166, %169 : vector<8x8xf32>
    %171 = math.exp %170 : vector<8x8xf32>
    %cst_68 = arith.constant dense<0.000000e+00> : vector<8xf32>
    %172 = vector.multi_reduction <add>, %171, %cst_68 [1] : vector<8x8xf32> to vector<8xf32>
    %173 = vector.shape_cast %172 : vector<8xf32> to vector<8x1xf32>
    %174 = vector.broadcast %173 : vector<8x1xf32> to vector<8x8xf32>
    %175 = arith.divf %171, %174 : vector<8x8xf32>
    %cst_69 = arith.constant dense<0.000000e+00> : vector<8x8xf32>
    %176 = tpu.matmul %175, %163, %cst_69 {dimension_numbers = #tpu.dot_dimension_numbers<[1], [0], [0], [1], [0, 0, 1, 1], [], []>} : vector<8x8xf32>, vector<8x8xf32>, vector<8x8xf32> -> vector<8x8xf32>
    %177 = vector.extract_strided_slice %47 {offsets = [8, 24], sizes = [8, 8], strides = [1, 1]} : vector<16x32xf32> to vector<8x8xf32>
    %178 = vector.extract_strided_slice %48 {offsets = [8, 24], sizes = [8, 8], strides = [1, 1]} : vector<16x32xf32> to vector<8x8xf32>
    %179 = vector.extract_strided_slice %49 {offsets = [8, 24], sizes = [8, 8], strides = [1, 1]} : vector<16x32xf32> to vector<8x8xf32>
    "tpu.trace_start"() <{level = 10 : i32, message = "qd,kd->qk"}> : () -> ()
    %cst_70 = arith.constant dense<0.000000e+00> : vector<8x8xf32>
    %180 = tpu.matmul %177, %178, %cst_70 {dimension_numbers = #tpu.dot_dimension_numbers<[1], [1], [0], [0], [0, 0, 1, 0], [], []>} : vector<8x8xf32>, vector<8x8xf32>, vector<8x8xf32> -> vector<8x8xf32>
    "tpu.trace_stop"() : () -> ()
    %cst_71 = arith.constant 0.353553385 : f32
    %181 = vector.broadcast %cst_71 : f32 to vector<8x8xf32>
    %182 = arith.mulf %180, %181 : vector<8x8xf32>
    %cst_72 = arith.constant dense<0xFF800000> : vector<8xf32>
    %183 = vector.multi_reduction <maximumf>, %182, %cst_72 [1] : vector<8x8xf32> to vector<8xf32>
    %184 = vector.shape_cast %183 : vector<8xf32> to vector<8x1xf32>
    %185 = vector.broadcast %184 : vector<8x1xf32> to vector<8x8xf32>
    %186 = arith.subf %182, %185 : vector<8x8xf32>
    %187 = math.exp %186 : vector<8x8xf32>
    %cst_73 = arith.constant dense<0.000000e+00> : vector<8xf32>
    %188 = vector.multi_reduction <add>, %187, %cst_73 [1] : vector<8x8xf32> to vector<8xf32>
    %189 = vector.shape_cast %188 : vector<8xf32> to vector<8x1xf32>
    %190 = vector.broadcast %189 : vector<8x1xf32> to vector<8x8xf32>
    %191 = arith.divf %187, %190 : vector<8x8xf32>
    %cst_74 = arith.constant dense<0.000000e+00> : vector<8x8xf32>
    %192 = tpu.matmul %191, %179, %cst_74 {dimension_numbers = #tpu.dot_dimension_numbers<[1], [0], [0], [1], [0, 0, 1, 1], [], []>} : vector<8x8xf32>, vector<8x8xf32>, vector<8x8xf32> -> vector<8x8xf32>
    %193 = tpu.concatenate %176, %192 in 0 : vector<8x8xf32>, vector<8x8xf32> -> vector<16x8xf32>
    %194 = vector.extract_strided_slice %51 {offsets = [24, 0], sizes = [8, 32], strides = [1, 1]} : vector<32x32xf32> to vector<8x32xf32>
    %cst_75 = arith.constant dense<0.000000e+00> : vector<16x32xf32>
    %195 = tpu.matmul %193, %194, %cst_75 {dimension_numbers = #tpu.dot_dimension_numbers<[1], [0], [0], [1], [0, 0, 1, 1], [], []>} : vector<16x8xf32>, vector<8x32xf32>, vector<16x32xf32> -> vector<16x32xf32>
    %196 = arith.addf %160, %195 : vector<16x32xf32>
    %197 = arith.addf %40, %196 : vector<16x32xf32>
    %c0_76 = arith.constant 0 : index
    %c0_77 = arith.constant 0 : index
    %198 = vector.load %arg8[%c0_76, %c0_77] : memref<2x32xf32, #tpu.memory_space<vmem>>, vector<1x32xf32>
    %199 = vector.broadcast %198 : vector<1x32xf32> to vector<16x32xf32>
    %200 = arith.addf %197, %199 : vector<16x32xf32>
    %cst_78 = arith.constant dense<0.000000e+00> : vector<16xf32>
    %201 = vector.multi_reduction <add>, %200, %cst_78 [1] : vector<16x32xf32> to vector<16xf32>
    %202 = vector.shape_cast %201 : vector<16xf32> to vector<16x1xf32>
    %cst_79 = arith.constant 3.200000e+01 : f32
    %203 = vector.broadcast %cst_79 : f32 to vector<16x1xf32>
    %204 = arith.divf %202, %203 : vector<16x1xf32>
    %205 = vector.broadcast %204 : vector<16x1xf32> to vector<16x32xf32>
    %206 = arith.subf %200, %205 : vector<16x32xf32>
    %207 = arith.mulf %206, %206 : vector<16x32xf32>
    %cst_80 = arith.constant dense<0.000000e+00> : vector<16xf32>
    %208 = vector.multi_reduction <add>, %207, %cst_80 [1] : vector<16x32xf32> to vector<16xf32>
    %209 = vector.shape_cast %208 : vector<16xf32> to vector<16x1xf32>
    %cst_81 = arith.constant 3.200000e+01 : f32
    %210 = vector.broadcast %cst_81 : f32 to vector<16x1xf32>
    %211 = arith.divf %209, %210 : vector<16x1xf32>
    %212 = vector.broadcast %204 : vector<16x1xf32> to vector<16x32xf32>
    %213 = arith.subf %200, %212 : vector<16x32xf32>
    %cst_82 = arith.constant 9.99999974E-6 : f32
    %214 = vector.broadcast %cst_82 : f32 to vector<16x1xf32>
    %215 = arith.addf %211, %214 : vector<16x1xf32>
    %216 = math.rsqrt %215 : vector<16x1xf32>
    %217 = vector.broadcast %216 : vector<16x1xf32> to vector<16x32xf32>
    %218 = arith.mulf %213, %217 : vector<16x32xf32>
    %c0_83 = arith.constant 0 : index
    %c0_84 = arith.constant 0 : index
    %219 = vector.load %arg9[%c0_83, %c0_84] : memref<2x32xf32, #tpu.memory_space<vmem>>, vector<1x32xf32>
    %220 = vector.broadcast %219 : vector<1x32xf32> to vector<16x32xf32>
    %221 = arith.mulf %218, %220 : vector<16x32xf32>
    %c0_85 = arith.constant 0 : index
    %c0_86 = arith.constant 0 : index
    %222 = vector.load %arg10[%c0_85, %c0_86] : memref<2x32xf32, #tpu.memory_space<vmem>>, vector<1x32xf32>
    %223 = vector.broadcast %222 : vector<1x32xf32> to vector<16x32xf32>
    %224 = arith.addf %221, %223 : vector<16x32xf32>
    %c1_87 = arith.constant 1 : index
    %c0_88 = arith.constant 0 : index
    %c0_89 = arith.constant 0 : index
    %225 = vector.load %arg5[%c1_87, %c0_88, %c0_89] : memref<2x32x96xf32, #tpu.memory_space<vmem>>, vector<1x32x96xf32>
    %226 = vector.shape_cast %225 : vector<1x32x96xf32> to vector<32x96xf32>
    %cst_90 = arith.constant dense<0.000000e+00> : vector<16x96xf32>
    %227 = tpu.matmul %224, %226, %cst_90 {dimension_numbers = #tpu.dot_dimension_numbers<[1], [0], [0], [1], [0, 0, 1, 1], [], []>} : vector<16x32xf32>, vector<32x96xf32>, vector<16x96xf32> -> vector<16x96xf32>
    %c1_91 = arith.constant 1 : index
    %c0_92 = arith.constant 0 : index
    %228 = vector.load %arg6[%c1_91, %c0_92] : memref<2x96xf32, #tpu.memory_space<vmem>>, vector<1x96xf32>
    %229 = vector.broadcast %228 : vector<1x96xf32> to vector<16x96xf32>
    %230 = arith.addf %227, %229 : vector<16x96xf32>
    %231 = vector.extract_strided_slice %230 {offsets = [0, 0], sizes = [16, 32], strides = [1, 1]} : vector<16x96xf32> to vector<16x32xf32>
    %232 = vector.extract_strided_slice %230 {offsets = [0, 32], sizes = [16, 32], strides = [1, 1]} : vector<16x96xf32> to vector<16x32xf32>
    %233 = vector.extract_strided_slice %230 {offsets = [0, 64], sizes = [16, 32], strides = [1, 1]} : vector<16x96xf32> to vector<16x32xf32>
    %c1_93 = arith.constant 1 : index
    %c0_94 = arith.constant 0 : index
    %c0_95 = arith.constant 0 : index
    %234 = vector.load %arg7[%c1_93, %c0_94, %c0_95] : memref<2x32x32xf32, #tpu.memory_space<vmem>>, vector<1x32x32xf32>
    %235 = vector.shape_cast %234 : vector<1x32x32xf32> to vector<32x32xf32>
    %cst_96 = arith.constant 0.000000e+00 : f32
    %236 = vector.broadcast %cst_96 : f32 to vector<16x32xf32>
    %237 = vector.extract_strided_slice %231 {offsets = [0, 0], sizes = [8, 8], strides = [1, 1]} : vector<16x32xf32> to vector<8x8xf32>
    %238 = vector.extract_strided_slice %232 {offsets = [0, 0], sizes = [8, 8], strides = [1, 1]} : vector<16x32xf32> to vector<8x8xf32>
    %239 = vector.extract_strided_slice %233 {offsets = [0, 0], sizes = [8, 8], strides = [1, 1]} : vector<16x32xf32> to vector<8x8xf32>
    "tpu.trace_start"() <{level = 10 : i32, message = "qd,kd->qk"}> : () -> ()
    %cst_97 = arith.constant dense<0.000000e+00> : vector<8x8xf32>
    %240 = tpu.matmul %237, %238, %cst_97 {dimension_numbers = #tpu.dot_dimension_numbers<[1], [1], [0], [0], [0, 0, 1, 0], [], []>} : vector<8x8xf32>, vector<8x8xf32>, vector<8x8xf32> -> vector<8x8xf32>
    "tpu.trace_stop"() : () -> ()
    %cst_98 = arith.constant 0.353553385 : f32
    %241 = vector.broadcast %cst_98 : f32 to vector<8x8xf32>
    %242 = arith.mulf %240, %241 : vector<8x8xf32>
    %cst_99 = arith.constant dense<0xFF800000> : vector<8xf32>
    %243 = vector.multi_reduction <maximumf>, %242, %cst_99 [1] : vector<8x8xf32> to vector<8xf32>
    %244 = vector.shape_cast %243 : vector<8xf32> to vector<8x1xf32>
    %245 = vector.broadcast %244 : vector<8x1xf32> to vector<8x8xf32>
    %246 = arith.subf %242, %245 : vector<8x8xf32>
    %247 = math.exp %246 : vector<8x8xf32>
    %cst_100 = arith.constant dense<0.000000e+00> : vector<8xf32>
    %248 = vector.multi_reduction <add>, %247, %cst_100 [1] : vector<8x8xf32> to vector<8xf32>
    %249 = vector.shape_cast %248 : vector<8xf32> to vector<8x1xf32>
    %250 = vector.broadcast %249 : vector<8x1xf32> to vector<8x8xf32>
    %251 = arith.divf %247, %250 : vector<8x8xf32>
    %cst_101 = arith.constant dense<0.000000e+00> : vector<8x8xf32>
    %252 = tpu.matmul %251, %239, %cst_101 {dimension_numbers = #tpu.dot_dimension_numbers<[1], [0], [0], [1], [0, 0, 1, 1], [], []>} : vector<8x8xf32>, vector<8x8xf32>, vector<8x8xf32> -> vector<8x8xf32>
    %253 = vector.extract_strided_slice %231 {offsets = [8, 0], sizes = [8, 8], strides = [1, 1]} : vector<16x32xf32> to vector<8x8xf32>
    %254 = vector.extract_strided_slice %232 {offsets = [8, 0], sizes = [8, 8], strides = [1, 1]} : vector<16x32xf32> to vector<8x8xf32>
    %255 = vector.extract_strided_slice %233 {offsets = [8, 0], sizes = [8, 8], strides = [1, 1]} : vector<16x32xf32> to vector<8x8xf32>
    "tpu.trace_start"() <{level = 10 : i32, message = "qd,kd->qk"}> : () -> ()
    %cst_102 = arith.constant dense<0.000000e+00> : vector<8x8xf32>
    %256 = tpu.matmul %253, %254, %cst_102 {dimension_numbers = #tpu.dot_dimension_numbers<[1], [1], [0], [0], [0, 0, 1, 0], [], []>} : vector<8x8xf32>, vector<8x8xf32>, vector<8x8xf32> -> vector<8x8xf32>
    "tpu.trace_stop"() : () -> ()
    %cst_103 = arith.constant 0.353553385 : f32
    %257 = vector.broadcast %cst_103 : f32 to vector<8x8xf32>
    %258 = arith.mulf %256, %257 : vector<8x8xf32>
    %cst_104 = arith.constant dense<0xFF800000> : vector<8xf32>
    %259 = vector.multi_reduction <maximumf>, %258, %cst_104 [1] : vector<8x8xf32> to vector<8xf32>
    %260 = vector.shape_cast %259 : vector<8xf32> to vector<8x1xf32>
    %261 = vector.broadcast %260 : vector<8x1xf32> to vector<8x8xf32>
    %262 = arith.subf %258, %261 : vector<8x8xf32>
    %263 = math.exp %262 : vector<8x8xf32>
    %cst_105 = arith.constant dense<0.000000e+00> : vector<8xf32>
    %264 = vector.multi_reduction <add>, %263, %cst_105 [1] : vector<8x8xf32> to vector<8xf32>
    %265 = vector.shape_cast %264 : vector<8xf32> to vector<8x1xf32>
    %266 = vector.broadcast %265 : vector<8x1xf32> to vector<8x8xf32>
    %267 = arith.divf %263, %266 : vector<8x8xf32>
    %cst_106 = arith.constant dense<0.000000e+00> : vector<8x8xf32>
    %268 = tpu.matmul %267, %255, %cst_106 {dimension_numbers = #tpu.dot_dimension_numbers<[1], [0], [0], [1], [0, 0, 1, 1], [], []>} : vector<8x8xf32>, vector<8x8xf32>, vector<8x8xf32> -> vector<8x8xf32>
    %269 = tpu.concatenate %252, %268 in 0 : vector<8x8xf32>, vector<8x8xf32> -> vector<16x8xf32>
    %270 = vector.extract_strided_slice %235 {offsets = [0, 0], sizes = [8, 32], strides = [1, 1]} : vector<32x32xf32> to vector<8x32xf32>
    %cst_107 = arith.constant dense<0.000000e+00> : vector<16x32xf32>
    %271 = tpu.matmul %269, %270, %cst_107 {dimension_numbers = #tpu.dot_dimension_numbers<[1], [0], [0], [1], [0, 0, 1, 1], [], []>} : vector<16x8xf32>, vector<8x32xf32>, vector<16x32xf32> -> vector<16x32xf32>
    %272 = arith.addf %236, %271 : vector<16x32xf32>
    %273 = vector.extract_strided_slice %231 {offsets = [0, 8], sizes = [8, 8], strides = [1, 1]} : vector<16x32xf32> to vector<8x8xf32>
    %274 = vector.extract_strided_slice %232 {offsets = [0, 8], sizes = [8, 8], strides = [1, 1]} : vector<16x32xf32> to vector<8x8xf32>
    %275 = vector.extract_strided_slice %233 {offsets = [0, 8], sizes = [8, 8], strides = [1, 1]} : vector<16x32xf32> to vector<8x8xf32>
    "tpu.trace_start"() <{level = 10 : i32, message = "qd,kd->qk"}> : () -> ()
    %cst_108 = arith.constant dense<0.000000e+00> : vector<8x8xf32>
    %276 = tpu.matmul %273, %274, %cst_108 {dimension_numbers = #tpu.dot_dimension_numbers<[1], [1], [0], [0], [0, 0, 1, 0], [], []>} : vector<8x8xf32>, vector<8x8xf32>, vector<8x8xf32> -> vector<8x8xf32>
    "tpu.trace_stop"() : () -> ()
    %cst_109 = arith.constant 0.353553385 : f32
    %277 = vector.broadcast %cst_109 : f32 to vector<8x8xf32>
    %278 = arith.mulf %276, %277 : vector<8x8xf32>
    %cst_110 = arith.constant dense<0xFF800000> : vector<8xf32>
    %279 = vector.multi_reduction <maximumf>, %278, %cst_110 [1] : vector<8x8xf32> to vector<8xf32>
    %280 = vector.shape_cast %279 : vector<8xf32> to vector<8x1xf32>
    %281 = vector.broadcast %280 : vector<8x1xf32> to vector<8x8xf32>
    %282 = arith.subf %278, %281 : vector<8x8xf32>
    %283 = math.exp %282 : vector<8x8xf32>
    %cst_111 = arith.constant dense<0.000000e+00> : vector<8xf32>
    %284 = vector.multi_reduction <add>, %283, %cst_111 [1] : vector<8x8xf32> to vector<8xf32>
    %285 = vector.shape_cast %284 : vector<8xf32> to vector<8x1xf32>
    %286 = vector.broadcast %285 : vector<8x1xf32> to vector<8x8xf32>
    %287 = arith.divf %283, %286 : vector<8x8xf32>
    %cst_112 = arith.constant dense<0.000000e+00> : vector<8x8xf32>
    %288 = tpu.matmul %287, %275, %cst_112 {dimension_numbers = #tpu.dot_dimension_numbers<[1], [0], [0], [1], [0, 0, 1, 1], [], []>} : vector<8x8xf32>, vector<8x8xf32>, vector<8x8xf32> -> vector<8x8xf32>
    %289 = vector.extract_strided_slice %231 {offsets = [8, 8], sizes = [8, 8], strides = [1, 1]} : vector<16x32xf32> to vector<8x8xf32>
    %290 = vector.extract_strided_slice %232 {offsets = [8, 8], sizes = [8, 8], strides = [1, 1]} : vector<16x32xf32> to vector<8x8xf32>
    %291 = vector.extract_strided_slice %233 {offsets = [8, 8], sizes = [8, 8], strides = [1, 1]} : vector<16x32xf32> to vector<8x8xf32>
    "tpu.trace_start"() <{level = 10 : i32, message = "qd,kd->qk"}> : () -> ()
    %cst_113 = arith.constant dense<0.000000e+00> : vector<8x8xf32>
    %292 = tpu.matmul %289, %290, %cst_113 {dimension_numbers = #tpu.dot_dimension_numbers<[1], [1], [0], [0], [0, 0, 1, 0], [], []>} : vector<8x8xf32>, vector<8x8xf32>, vector<8x8xf32> -> vector<8x8xf32>
    "tpu.trace_stop"() : () -> ()
    %cst_114 = arith.constant 0.353553385 : f32
    %293 = vector.broadcast %cst_114 : f32 to vector<8x8xf32>
    %294 = arith.mulf %292, %293 : vector<8x8xf32>
    %cst_115 = arith.constant dense<0xFF800000> : vector<8xf32>
    %295 = vector.multi_reduction <maximumf>, %294, %cst_115 [1] : vector<8x8xf32> to vector<8xf32>
    %296 = vector.shape_cast %295 : vector<8xf32> to vector<8x1xf32>
    %297 = vector.broadcast %296 : vector<8x1xf32> to vector<8x8xf32>
    %298 = arith.subf %294, %297 : vector<8x8xf32>
    %299 = math.exp %298 : vector<8x8xf32>
    %cst_116 = arith.constant dense<0.000000e+00> : vector<8xf32>
    %300 = vector.multi_reduction <add>, %299, %cst_116 [1] : vector<8x8xf32> to vector<8xf32>
    %301 = vector.shape_cast %300 : vector<8xf32> to vector<8x1xf32>
    %302 = vector.broadcast %301 : vector<8x1xf32> to vector<8x8xf32>
    %303 = arith.divf %299, %302 : vector<8x8xf32>
    %cst_117 = arith.constant dense<0.000000e+00> : vector<8x8xf32>
    %304 = tpu.matmul %303, %291, %cst_117 {dimension_numbers = #tpu.dot_dimension_numbers<[1], [0], [0], [1], [0, 0, 1, 1], [], []>} : vector<8x8xf32>, vector<8x8xf32>, vector<8x8xf32> -> vector<8x8xf32>
    %305 = tpu.concatenate %288, %304 in 0 : vector<8x8xf32>, vector<8x8xf32> -> vector<16x8xf32>
    %306 = vector.extract_strided_slice %235 {offsets = [8, 0], sizes = [8, 32], strides = [1, 1]} : vector<32x32xf32> to vector<8x32xf32>
    %cst_118 = arith.constant dense<0.000000e+00> : vector<16x32xf32>
    %307 = tpu.matmul %305, %306, %cst_118 {dimension_numbers = #tpu.dot_dimension_numbers<[1], [0], [0], [1], [0, 0, 1, 1], [], []>} : vector<16x8xf32>, vector<8x32xf32>, vector<16x32xf32> -> vector<16x32xf32>
    %308 = arith.addf %272, %307 : vector<16x32xf32>
    %309 = vector.extract_strided_slice %231 {offsets = [0, 16], sizes = [8, 8], strides = [1, 1]} : vector<16x32xf32> to vector<8x8xf32>
    %310 = vector.extract_strided_slice %232 {offsets = [0, 16], sizes = [8, 8], strides = [1, 1]} : vector<16x32xf32> to vector<8x8xf32>
    %311 = vector.extract_strided_slice %233 {offsets = [0, 16], sizes = [8, 8], strides = [1, 1]} : vector<16x32xf32> to vector<8x8xf32>
    "tpu.trace_start"() <{level = 10 : i32, message = "qd,kd->qk"}> : () -> ()
    %cst_119 = arith.constant dense<0.000000e+00> : vector<8x8xf32>
    %312 = tpu.matmul %309, %310, %cst_119 {dimension_numbers = #tpu.dot_dimension_numbers<[1], [1], [0], [0], [0, 0, 1, 0], [], []>} : vector<8x8xf32>, vector<8x8xf32>, vector<8x8xf32> -> vector<8x8xf32>
    "tpu.trace_stop"() : () -> ()
    %cst_120 = arith.constant 0.353553385 : f32
    %313 = vector.broadcast %cst_120 : f32 to vector<8x8xf32>
    %314 = arith.mulf %312, %313 : vector<8x8xf32>
    %cst_121 = arith.constant dense<0xFF800000> : vector<8xf32>
    %315 = vector.multi_reduction <maximumf>, %314, %cst_121 [1] : vector<8x8xf32> to vector<8xf32>
    %316 = vector.shape_cast %315 : vector<8xf32> to vector<8x1xf32>
    %317 = vector.broadcast %316 : vector<8x1xf32> to vector<8x8xf32>
    %318 = arith.subf %314, %317 : vector<8x8xf32>
    %319 = math.exp %318 : vector<8x8xf32>
    %cst_122 = arith.constant dense<0.000000e+00> : vector<8xf32>
    %320 = vector.multi_reduction <add>, %319, %cst_122 [1] : vector<8x8xf32> to vector<8xf32>
    %321 = vector.shape_cast %320 : vector<8xf32> to vector<8x1xf32>
    %322 = vector.broadcast %321 : vector<8x1xf32> to vector<8x8xf32>
    %323 = arith.divf %319, %322 : vector<8x8xf32>
    %cst_123 = arith.constant dense<0.000000e+00> : vector<8x8xf32>
    %324 = tpu.matmul %323, %311, %cst_123 {dimension_numbers = #tpu.dot_dimension_numbers<[1], [0], [0], [1], [0, 0, 1, 1], [], []>} : vector<8x8xf32>, vector<8x8xf32>, vector<8x8xf32> -> vector<8x8xf32>
    %325 = vector.extract_strided_slice %231 {offsets = [8, 16], sizes = [8, 8], strides = [1, 1]} : vector<16x32xf32> to vector<8x8xf32>
    %326 = vector.extract_strided_slice %232 {offsets = [8, 16], sizes = [8, 8], strides = [1, 1]} : vector<16x32xf32> to vector<8x8xf32>
    %327 = vector.extract_strided_slice %233 {offsets = [8, 16], sizes = [8, 8], strides = [1, 1]} : vector<16x32xf32> to vector<8x8xf32>
    "tpu.trace_start"() <{level = 10 : i32, message = "qd,kd->qk"}> : () -> ()
    %cst_124 = arith.constant dense<0.000000e+00> : vector<8x8xf32>
    %328 = tpu.matmul %325, %326, %cst_124 {dimension_numbers = #tpu.dot_dimension_numbers<[1], [1], [0], [0], [0, 0, 1, 0], [], []>} : vector<8x8xf32>, vector<8x8xf32>, vector<8x8xf32> -> vector<8x8xf32>
    "tpu.trace_stop"() : () -> ()
    %cst_125 = arith.constant 0.353553385 : f32
    %329 = vector.broadcast %cst_125 : f32 to vector<8x8xf32>
    %330 = arith.mulf %328, %329 : vector<8x8xf32>
    %cst_126 = arith.constant dense<0xFF800000> : vector<8xf32>
    %331 = vector.multi_reduction <maximumf>, %330, %cst_126 [1] : vector<8x8xf32> to vector<8xf32>
    %332 = vector.shape_cast %331 : vector<8xf32> to vector<8x1xf32>
    %333 = vector.broadcast %332 : vector<8x1xf32> to vector<8x8xf32>
    %334 = arith.subf %330, %333 : vector<8x8xf32>
    %335 = math.exp %334 : vector<8x8xf32>
    %cst_127 = arith.constant dense<0.000000e+00> : vector<8xf32>
    %336 = vector.multi_reduction <add>, %335, %cst_127 [1] : vector<8x8xf32> to vector<8xf32>
    %337 = vector.shape_cast %336 : vector<8xf32> to vector<8x1xf32>
    %338 = vector.broadcast %337 : vector<8x1xf32> to vector<8x8xf32>
    %339 = arith.divf %335, %338 : vector<8x8xf32>
    %cst_128 = arith.constant dense<0.000000e+00> : vector<8x8xf32>
    %340 = tpu.matmul %339, %327, %cst_128 {dimension_numbers = #tpu.dot_dimension_numbers<[1], [0], [0], [1], [0, 0, 1, 1], [], []>} : vector<8x8xf32>, vector<8x8xf32>, vector<8x8xf32> -> vector<8x8xf32>
    %341 = tpu.concatenate %324, %340 in 0 : vector<8x8xf32>, vector<8x8xf32> -> vector<16x8xf32>
    %342 = vector.extract_strided_slice %235 {offsets = [16, 0], sizes = [8, 32], strides = [1, 1]} : vector<32x32xf32> to vector<8x32xf32>
    %cst_129 = arith.constant dense<0.000000e+00> : vector<16x32xf32>
    %343 = tpu.matmul %341, %342, %cst_129 {dimension_numbers = #tpu.dot_dimension_numbers<[1], [0], [0], [1], [0, 0, 1, 1], [], []>} : vector<16x8xf32>, vector<8x32xf32>, vector<16x32xf32> -> vector<16x32xf32>
    %344 = arith.addf %308, %343 : vector<16x32xf32>
    %345 = vector.extract_strided_slice %231 {offsets = [0, 24], sizes = [8, 8], strides = [1, 1]} : vector<16x32xf32> to vector<8x8xf32>
    %346 = vector.extract_strided_slice %232 {offsets = [0, 24], sizes = [8, 8], strides = [1, 1]} : vector<16x32xf32> to vector<8x8xf32>
    %347 = vector.extract_strided_slice %233 {offsets = [0, 24], sizes = [8, 8], strides = [1, 1]} : vector<16x32xf32> to vector<8x8xf32>
    "tpu.trace_start"() <{level = 10 : i32, message = "qd,kd->qk"}> : () -> ()
    %cst_130 = arith.constant dense<0.000000e+00> : vector<8x8xf32>
    %348 = tpu.matmul %345, %346, %cst_130 {dimension_numbers = #tpu.dot_dimension_numbers<[1], [1], [0], [0], [0, 0, 1, 0], [], []>} : vector<8x8xf32>, vector<8x8xf32>, vector<8x8xf32> -> vector<8x8xf32>
    "tpu.trace_stop"() : () -> ()
    %cst_131 = arith.constant 0.353553385 : f32
    %349 = vector.broadcast %cst_131 : f32 to vector<8x8xf32>
    %350 = arith.mulf %348, %349 : vector<8x8xf32>
    %cst_132 = arith.constant dense<0xFF800000> : vector<8xf32>
    %351 = vector.multi_reduction <maximumf>, %350, %cst_132 [1] : vector<8x8xf32> to vector<8xf32>
    %352 = vector.shape_cast %351 : vector<8xf32> to vector<8x1xf32>
    %353 = vector.broadcast %352 : vector<8x1xf32> to vector<8x8xf32>
    %354 = arith.subf %350, %353 : vector<8x8xf32>
    %355 = math.exp %354 : vector<8x8xf32>
    %cst_133 = arith.constant dense<0.000000e+00> : vector<8xf32>
    %356 = vector.multi_reduction <add>, %355, %cst_133 [1] : vector<8x8xf32> to vector<8xf32>
    %357 = vector.shape_cast %356 : vector<8xf32> to vector<8x1xf32>
    %358 = vector.broadcast %357 : vector<8x1xf32> to vector<8x8xf32>
    %359 = arith.divf %355, %358 : vector<8x8xf32>
    %cst_134 = arith.constant dense<0.000000e+00> : vector<8x8xf32>
    %360 = tpu.matmul %359, %347, %cst_134 {dimension_numbers = #tpu.dot_dimension_numbers<[1], [0], [0], [1], [0, 0, 1, 1], [], []>} : vector<8x8xf32>, vector<8x8xf32>, vector<8x8xf32> -> vector<8x8xf32>
    %361 = vector.extract_strided_slice %231 {offsets = [8, 24], sizes = [8, 8], strides = [1, 1]} : vector<16x32xf32> to vector<8x8xf32>
    %362 = vector.extract_strided_slice %232 {offsets = [8, 24], sizes = [8, 8], strides = [1, 1]} : vector<16x32xf32> to vector<8x8xf32>
    %363 = vector.extract_strided_slice %233 {offsets = [8, 24], sizes = [8, 8], strides = [1, 1]} : vector<16x32xf32> to vector<8x8xf32>
    "tpu.trace_start"() <{level = 10 : i32, message = "qd,kd->qk"}> : () -> ()
    %cst_135 = arith.constant dense<0.000000e+00> : vector<8x8xf32>
    %364 = tpu.matmul %361, %362, %cst_135 {dimension_numbers = #tpu.dot_dimension_numbers<[1], [1], [0], [0], [0, 0, 1, 0], [], []>} : vector<8x8xf32>, vector<8x8xf32>, vector<8x8xf32> -> vector<8x8xf32>
    "tpu.trace_stop"() : () -> ()
    %cst_136 = arith.constant 0.353553385 : f32
    %365 = vector.broadcast %cst_136 : f32 to vector<8x8xf32>
    %366 = arith.mulf %364, %365 : vector<8x8xf32>
    %cst_137 = arith.constant dense<0xFF800000> : vector<8xf32>
    %367 = vector.multi_reduction <maximumf>, %366, %cst_137 [1] : vector<8x8xf32> to vector<8xf32>
    %368 = vector.shape_cast %367 : vector<8xf32> to vector<8x1xf32>
    %369 = vector.broadcast %368 : vector<8x1xf32> to vector<8x8xf32>
    %370 = arith.subf %366, %369 : vector<8x8xf32>
    %371 = math.exp %370 : vector<8x8xf32>
    %cst_138 = arith.constant dense<0.000000e+00> : vector<8xf32>
    %372 = vector.multi_reduction <add>, %371, %cst_138 [1] : vector<8x8xf32> to vector<8xf32>
    %373 = vector.shape_cast %372 : vector<8xf32> to vector<8x1xf32>
    %374 = vector.broadcast %373 : vector<8x1xf32> to vector<8x8xf32>
    %375 = arith.divf %371, %374 : vector<8x8xf32>
    %cst_139 = arith.constant dense<0.000000e+00> : vector<8x8xf32>
    %376 = tpu.matmul %375, %363, %cst_139 {dimension_numbers = #tpu.dot_dimension_numbers<[1], [0], [0], [1], [0, 0, 1, 1], [], []>} : vector<8x8xf32>, vector<8x8xf32>, vector<8x8xf32> -> vector<8x8xf32>
    %377 = tpu.concatenate %360, %376 in 0 : vector<8x8xf32>, vector<8x8xf32> -> vector<16x8xf32>
    %378 = vector.extract_strided_slice %235 {offsets = [24, 0], sizes = [8, 32], strides = [1, 1]} : vector<32x32xf32> to vector<8x32xf32>
    %cst_140 = arith.constant dense<0.000000e+00> : vector<16x32xf32>
    %379 = tpu.matmul %377, %378, %cst_140 {dimension_numbers = #tpu.dot_dimension_numbers<[1], [0], [0], [1], [0, 0, 1, 1], [], []>} : vector<16x8xf32>, vector<8x32xf32>, vector<16x32xf32> -> vector<16x32xf32>
    %380 = arith.addf %344, %379 : vector<16x32xf32>
    %381 = arith.addf %224, %380 : vector<16x32xf32>
    %c1_141 = arith.constant 1 : index
    %c0_142 = arith.constant 0 : index
    %382 = vector.load %arg8[%c1_141, %c0_142] : memref<2x32xf32, #tpu.memory_space<vmem>>, vector<1x32xf32>
    %383 = vector.broadcast %382 : vector<1x32xf32> to vector<16x32xf32>
    %384 = arith.addf %381, %383 : vector<16x32xf32>
    %cst_143 = arith.constant dense<0.000000e+00> : vector<16xf32>
    %385 = vector.multi_reduction <add>, %384, %cst_143 [1] : vector<16x32xf32> to vector<16xf32>
    %386 = vector.shape_cast %385 : vector<16xf32> to vector<16x1xf32>
    %cst_144 = arith.constant 3.200000e+01 : f32
    %387 = vector.broadcast %cst_144 : f32 to vector<16x1xf32>
    %388 = arith.divf %386, %387 : vector<16x1xf32>
    %389 = vector.broadcast %388 : vector<16x1xf32> to vector<16x32xf32>
    %390 = arith.subf %384, %389 : vector<16x32xf32>
    %391 = arith.mulf %390, %390 : vector<16x32xf32>
    %cst_145 = arith.constant dense<0.000000e+00> : vector<16xf32>
    %392 = vector.multi_reduction <add>, %391, %cst_145 [1] : vector<16x32xf32> to vector<16xf32>
    %393 = vector.shape_cast %392 : vector<16xf32> to vector<16x1xf32>
    %cst_146 = arith.constant 3.200000e+01 : f32
    %394 = vector.broadcast %cst_146 : f32 to vector<16x1xf32>
    %395 = arith.divf %393, %394 : vector<16x1xf32>
    %396 = vector.broadcast %388 : vector<16x1xf32> to vector<16x32xf32>
    %397 = arith.subf %384, %396 : vector<16x32xf32>
    %cst_147 = arith.constant 9.99999974E-6 : f32
    %398 = vector.broadcast %cst_147 : f32 to vector<16x1xf32>
    %399 = arith.addf %395, %398 : vector<16x1xf32>
    %400 = math.rsqrt %399 : vector<16x1xf32>
    %401 = vector.broadcast %400 : vector<16x1xf32> to vector<16x32xf32>
    %402 = arith.mulf %397, %401 : vector<16x32xf32>
    %c1_148 = arith.constant 1 : index
    %c0_149 = arith.constant 0 : index
    %403 = vector.load %arg9[%c1_148, %c0_149] : memref<2x32xf32, #tpu.memory_space<vmem>>, vector<1x32xf32>
    %404 = vector.broadcast %403 : vector<1x32xf32> to vector<16x32xf32>
    %405 = arith.mulf %402, %404 : vector<16x32xf32>
    %c1_150 = arith.constant 1 : index
    %c0_151 = arith.constant 0 : index
    %406 = vector.load %arg10[%c1_150, %c0_151] : memref<2x32xf32, #tpu.memory_space<vmem>>, vector<1x32xf32>
    %407 = vector.broadcast %406 : vector<1x32xf32> to vector<16x32xf32>
    %408 = arith.addf %405, %407 : vector<16x32xf32>
    %c0_152 = arith.constant 0 : index
    %c0_153 = arith.constant 0 : index
    %409 = vector.load %arg11[%c0_152, %c0_153] : memref<32x128xf32, #tpu.memory_space<vmem>>, vector<32x128xf32>
    %cst_154 = arith.constant dense<0.000000e+00> : vector<16x128xf32>
    %410 = tpu.matmul %408, %409, %cst_154 {dimension_numbers = #tpu.dot_dimension_numbers<[1], [0], [0], [1], [0, 0, 1, 1], [], []>} : vector<16x32xf32>, vector<32x128xf32>, vector<16x128xf32> -> vector<16x128xf32>
    %c0_155 = arith.constant 0 : index
    %c0_156 = arith.constant 0 : index
    %411 = vector.load %arg12[%c0_155, %c0_156] : memref<32x128xf32, #tpu.memory_space<vmem>>, vector<32x128xf32>
    %cst_157 = arith.constant dense<0.000000e+00> : vector<16x128xf32>
    %412 = tpu.matmul %408, %411, %cst_157 {dimension_numbers = #tpu.dot_dimension_numbers<[1], [0], [0], [1], [0, 0, 1, 1], [], []>} : vector<16x32xf32>, vector<32x128xf32>, vector<16x128xf32> -> vector<16x128xf32>
    %413 = vector.extract_strided_slice %410 {offsets = [1, 0], sizes = [15, 128], strides = [1, 1]} : vector<16x128xf32> to vector<15x128xf32>
    %414 = vector.extract_strided_slice %412 {offsets = [0, 0], sizes = [15, 128], strides = [1, 1]} : vector<16x128xf32> to vector<15x128xf32>
    %415 = arith.addf %413, %414 : vector<15x128xf32>
    %c0_158 = arith.constant 0 : index
    %c0_159 = arith.constant 0 : index
    %416 = vector.load %arg13[%c0_158, %c0_159] : memref<1x128xf32, #tpu.memory_space<vmem>>, vector<1x128xf32>
    %417 = vector.broadcast %416 : vector<1x128xf32> to vector<15x128xf32>
    %418 = arith.addf %415, %417 : vector<15x128xf32>
    %cst_160 = arith.constant 0.000000e+00 : f32
    %419 = vector.broadcast %cst_160 : f32 to vector<15x128xf32>
    %420 = arith.maximumf %418, %419 : vector<15x128xf32>
    %c0_161 = arith.constant 0 : index
    %c0_162 = arith.constant 0 : index
    %421 = vector.load %arg14[%c0_161, %c0_162] : memref<128x8xf32, #tpu.memory_space<vmem>>, vector<128x8xf32>
    %cst_163 = arith.constant dense<0.000000e+00> : vector<15x8xf32>
    %422 = tpu.matmul %420, %421, %cst_163 {dimension_numbers = #tpu.dot_dimension_numbers<[1], [0], [0], [1], [0, 0, 1, 1], [], []>} : vector<15x128xf32>, vector<128x8xf32>, vector<15x8xf32> -> vector<15x8xf32>
    %c0_164 = arith.constant 0 : index
    %c0_165 = arith.constant 0 : index
    %423 = vector.load %arg15[%c0_164, %c0_165] : memref<1x8xf32, #tpu.memory_space<vmem>>, vector<1x8xf32>
    %424 = vector.broadcast %423 : vector<1x8xf32> to vector<15x8xf32>
    %425 = arith.addf %422, %424 : vector<15x8xf32>
    %426 = vector.extract_strided_slice %425 {offsets = [0, 0], sizes = [7, 8], strides = [1, 1]} : vector<15x8xf32> to vector<7x8xf32>
    %c0_166 = arith.constant 0 : index
    %c0_167 = arith.constant 0 : index
    %427 = vector.load %arg16[%c0_166, %c0_167] : memref<7x16xf32, #tpu.memory_space<vmem>>, vector<7x8xf32>
    tpu.vector_store %arg16[%c0_166, %c0_167], %426 {strides = array<i32>} : memref<7x16xf32, #tpu.memory_space<vmem>>, vector<7x8xf32>,
    %428 = vector.extract_strided_slice %425 {offsets = [8, 0], sizes = [7, 8], strides = [1, 1]} : vector<15x8xf32> to vector<7x8xf32>
    %c0_168 = arith.constant 0 : index
    %c8 = arith.constant 8 : index
    %429 = vector.load %arg16[%c0_168, %c8] : memref<7x16xf32, #tpu.memory_space<vmem>>, vector<7x8xf32>
    tpu.vector_store %arg16[%c0_168, %c8], %428 {strides = array<i32>} : memref<7x16xf32, #tpu.memory_space<vmem>>, vector<7x8xf32>,
    return
  }
  func.func @transform_0(%arg0: i32) -> (i32, i32, i32) {
    %c0_i32 = arith.constant 0 : i32
    %c0_i32_0 = arith.constant 0 : i32
    %c0_i32_1 = arith.constant 0 : i32
    %c0_i32_2 = arith.constant 0 : i32
    return %c0_i32, %c0_i32_0, %c0_i32_1 : i32, i32, i32
  }
  func.func @transform_1(%arg0: i32) -> (i32, i32) {
    %c0_i32 = arith.constant 0 : i32
    %c0_i32_0 = arith.constant 0 : i32
    %c0_i32_1 = arith.constant 0 : i32
    return %c0_i32, %c0_i32_0 : i32, i32
  }
  func.func @transform_2(%arg0: i32) -> (i32, i32) {
    %c0_i32 = arith.constant 0 : i32
    %c0_i32_0 = arith.constant 0 : i32
    %c0_i32_1 = arith.constant 0 : i32
    return %c0_i32, %c0_i32_0 : i32, i32
  }
  func.func @transform_3(%arg0: i32) -> (i32, i32) {
    %c0_i32 = arith.constant 0 : i32
    %c0_i32_0 = arith.constant 0 : i32
    %c0_i32_1 = arith.constant 0 : i32
    return %c0_i32, %c0_i32_0 : i32, i32
  }
  func.func @transform_4(%arg0: i32) -> (i32, i32, i32) {
    %c0_i32 = arith.constant 0 : i32
    %c0_i32_0 = arith.constant 0 : i32
    %c0_i32_1 = arith.constant 0 : i32
    %c0_i32_2 = arith.constant 0 : i32
    return %c0_i32, %c0_i32_0, %c0_i32_1 : i32, i32, i32
  }
  func.func @transform_5(%arg0: i32) -> (i32, i32) {
    %c0_i32 = arith.constant 0 : i32
    %c0_i32_0 = arith.constant 0 : i32
    %c0_i32_1 = arith.constant 0 : i32
    return %c0_i32, %c0_i32_0 : i32, i32
  }
  func.func @transform_6(%arg0: i32) -> (i32, i32, i32) {
    %c0_i32 = arith.constant 0 : i32
    %c0_i32_0 = arith.constant 0 : i32
    %c0_i32_1 = arith.constant 0 : i32
    %c0_i32_2 = arith.constant 0 : i32
    return %c0_i32, %c0_i32_0, %c0_i32_1 : i32, i32, i32
  }
  func.func @transform_7(%arg0: i32) -> (i32, i32) {
    %c0_i32 = arith.constant 0 : i32
    %c0_i32_0 = arith.constant 0 : i32
    %c0_i32_1 = arith.constant 0 : i32
    return %c0_i32, %c0_i32_0 : i32, i32
  }
  func.func @transform_8(%arg0: i32) -> (i32, i32) {
    %c0_i32 = arith.constant 0 : i32
    %c0_i32_0 = arith.constant 0 : i32
    %c0_i32_1 = arith.constant 0 : i32
    return %c0_i32, %c0_i32_0 : i32, i32
  }
  func.func @transform_9(%arg0: i32) -> (i32, i32) {
    %c0_i32 = arith.constant 0 : i32
    %c0_i32_0 = arith.constant 0 : i32
    %c0_i32_1 = arith.constant 0 : i32
    return %c0_i32, %c0_i32_0 : i32, i32
  }
  func.func @transform_10(%arg0: i32) -> (i32, i32) {
    %c0_i32 = arith.constant 0 : i32
    %c0_i32_0 = arith.constant 0 : i32
    %c0_i32_1 = arith.constant 0 : i32
    return %c0_i32, %c0_i32_0 : i32, i32
  }
  func.func @transform_11(%arg0: i32) -> (i32, i32) {
    %c0_i32 = arith.constant 0 : i32
    %c0_i32_0 = arith.constant 0 : i32
    %c0_i32_1 = arith.constant 0 : i32
    return %c0_i32, %c0_i32_0 : i32, i32
  }
  func.func @transform_12(%arg0: i32) -> (i32, i32) {
    %c0_i32 = arith.constant 0 : i32
    %c0_i32_0 = arith.constant 0 : i32
    %c0_i32_1 = arith.constant 0 : i32
    return %c0_i32, %c0_i32_0 : i32, i32
  }
  func.func @transform_13(%arg0: i32) -> (i32, i32) {
    %c0_i32 = arith.constant 0 : i32
    %c0_i32_0 = arith.constant 0 : i32
    %c0_i32_1 = arith.constant 0 : i32
    return %c0_i32, %c0_i32_0 : i32, i32
  }
  func.func @transform_14(%arg0: i32) -> (i32, i32) {
    %c0_i32 = arith.constant 0 : i32
    %c0_i32_0 = arith.constant 0 : i32
    %c0_i32_1 = arith.constant 0 : i32
    return %c0_i32, %c0_i32_0 : i32, i32
  }
  func.func @transform_15(%arg0: i32) -> (i32, i32) {
    %c0_i32 = arith.constant 0 : i32
    %c0_i32_0 = arith.constant 0 : i32
    %c0_i32_1 = arith.constant 0 : i32
    return %c0_i32, %c0_i32_0 : i32, i32
  }
}

</mosaic_0001>

<llo_original>
// kernel: tpu_custom_call.1
$region0: #{tpu_custom_call.1}
  #allocation0 [shape = 'u32[]', space=smem, size = 0x4, offset = 0x4, fixed_abs, tag = 'smem constant byte address 0x4 - core index']
  #allocation1 [shape = 'u32[144,128]{1,0:T(1,128)}', space=vmem, size = 0x12000, scoped, tag = 'internal scratch']
  %s0 = inlined_call_operand.hbm [shape: f32[8,2,12], index: 0, kind: input, shape index: {}]
  %s1 = inlined_call_operand.vmem [shape: f32[2,2], index: 1, kind: input, shape index: {}]
  %s2 = inlined_call_operand.hbm [shape: f32[12,32], index: 2, kind: input, shape index: {}]
  %s3 = inlined_call_operand.hbm [shape: f32[8,32], index: 3, kind: input, shape index: {}]
  %s4 = inlined_call_operand.vmem [shape: f32[2,32,96], index: 4, kind: input, shape index: {}]
  %s5 = inlined_call_operand.hbm [shape: f32[2,96], index: 5, kind: input, shape index: {}]
  %s6 = inlined_call_operand.vmem [shape: f32[2,32,32], index: 6, kind: input, shape index: {}]
  %s7 = inlined_call_operand.hbm [shape: f32[2,32], index: 7, kind: input, shape index: {}]
  %s8 = inlined_call_operand.hbm [shape: f32[2,32], index: 8, kind: input, shape index: {}]
  %s9 = inlined_call_operand.hbm [shape: f32[2,32], index: 9, kind: input, shape index: {}]
  %s10 = inlined_call_operand.vmem [shape: f32[32,128], index: 10, kind: input, shape index: {}]
  %s11 = inlined_call_operand.hbm [shape: f32[32,128], index: 11, kind: input, shape index: {}]
  %s12 = inlined_call_operand.vmem [shape: f32[1,128], index: 12, kind: input, shape index: {}]
  %s13 = inlined_call_operand.vmem [shape: f32[128,8], index: 13, kind: input, shape index: {}]
  %s14 = inlined_call_operand.vmem [shape: f32[1,8], index: 14, kind: input, shape index: {}]
  %s15 = inlined_call_operand.hbm [shape: f32[7,16], index: 15, kind: output, shape index: {}]
  %s16 = sld [smem:[#allocation0]]
  $region106: #{tpu_custom_call.1} parent=0
    _
  %s18 = ssub.s32 1, %s16
  %s19 = scalar_select 0, %s18, %s16
  $region1: #{tpu_custom_call.1} parent=0
    #allocation2 [shape = 'u8[8192]{0}', space=vmem, size = 0x2000, scoped, tag = 'input window, operand 0, single buffered']
    #allocation3 [shape = 's32[1]{0}', space=sflag, size = 0x4, scoped, tag = 'scoped memory for tpu_custom_call.1']
    #allocation4 [shape = 's32[1]{0}', space=sflag, size = 0x4, scoped, tag = 'scoped memory for tpu_custom_call.1']
    #allocation5 [shape = 's32[1]{0}', space=sflag, size = 0x4, scoped, tag = 'scoped memory for tpu_custom_call.1']
    #allocation6 [shape = 'u8[1024]{0}', space=smem, size = 0x400, scoped, tag = 'input window, operand 1, single buffered']
    #allocation7 [shape = 'u8[8192]{0}', space=vmem, size = 0x2000, scoped, tag = 'input window, operand 2, single buffered']
    #allocation8 [shape = 's32[1]{0}', space=sflag, size = 0x4, scoped, tag = 'scoped memory for tpu_custom_call.1']
    #allocation9 [shape = 'u8[4096]{0}', space=vmem, size = 0x1000, scoped, tag = 'input window, operand 3, single buffered']
    #allocation10 [shape = 'u8[1024]{0}', space=vmem, size = 0x400, scoped, tag = 'input window, operand 5, single buffered']
    #allocation11 [shape = 's32[1]{0}', space=sflag, size = 0x4, scoped, tag = 'scoped memory for tpu_custom_call.1']
    #allocation12 [shape = 'u8[1024]{0}', space=vmem, size = 0x400, scoped, tag = 'input window, operand 7, single buffered']
    #allocation13 [shape = 'u8[1024]{0}', space=vmem, size = 0x400, scoped, tag = 'input window, operand 8, single buffered']
    #allocation14 [shape = 's32[1]{0}', space=sflag, size = 0x4, scoped, tag = 'scoped memory for tpu_custom_call.1']
    #allocation15 [shape = 'u8[1024]{0}', space=vmem, size = 0x400, scoped, tag = 'input window, operand 9, single buffered']
    #allocation16 [shape = 'u8[16384]{0}', space=vmem, size = 0x4000, scoped, tag = 'input window, operand 11, single buffered']
    #allocation17 [shape = 's32[1]{0}', space=sflag, size = 0x4, scoped, tag = 'scoped memory for tpu_custom_call.1']
    #allocation18 [shape = 'u8[4096]{0}', space=vmem, size = 0x1000, scoped, tag = 'output window, operand 0, single buffered']
    %20 = vsyncpa [#allocation3], 0
    %21 = vsyncpa [#allocation5], 0
    %22 = vsyncpa [#allocation8], 0
    %23 = vsyncpa [#allocation11], 0
    %24 = vsyncpa [#allocation14], 0
    %25 = vsyncpa [#allocation17], 0
    %26 = vsyncpa [#allocation4], 0
    // Predicated region
    $region2: #{tpu_custom_call.1} parent=1 // pred_check
      _
    $region3: #{tpu_custom_call.1} parent=1 // pred_check_branch
      %28 = sbr.rel (0) target = $region5
    $region4: #{tpu_custom_call.1} parent=1 // pred_region
      %s30 = ssub.s32 256, 256
      %31 = vsyncadd [#allocation3], %s30
      %s32 = sshll.u32 [#allocation2], 4
      %s33 = int_to_ptr.vmem [resolvable:$true] %s32
      %38 = dma.hbm_to_vmem [thread:$0]  %s0, 256, %s33, [#allocation3], 32, 32, 2
    $region5: #{tpu_custom_call.1} parent=1 // pred_fallthru
      _
    // Predicated region
    $region6: #{tpu_custom_call.1} parent=1 // pred_check
      _
    $region7: #{tpu_custom_call.1} parent=1 // pred_check_branch
      %40 = sbr.rel (0) target = $region9
    $region8: #{tpu_custom_call.1} parent=1 // pred_region
      %s42 = ssub.s32 32, 32
      %43 = vsyncadd [#allocation5], %s42
      %s45 = sshll.u32 %s1, 4
      %s46 = int_to_ptr.vmem [resolvable:$true] %s45
      %48 = dma.vmem_to_smem %s46, 32, [#allocation6], [#allocation5]
    $region9: #{tpu_custom_call.1} parent=1 // pred_fallthru
      _
    // Predicated region
    $region10: #{tpu_custom_call.1} parent=1 // pred_check
      _
    $region11: #{tpu_custom_call.1} parent=1 // pred_check_branch
      %50 = sbr.rel (0) target = $region13
    $region12: #{tpu_custom_call.1} parent=1 // pred_region
      %s52 = ssub.s32 256, 256
      %53 = vsyncadd [#allocation8], %s52
      %s54 = sshll.u32 [#allocation7], 4
      %s55 = int_to_ptr.vmem [resolvable:$true] %s54
      %60 = dma.hbm_to_vmem [thread:$0]  %s2, 256, %s55, [#allocation8], 128, 128, 8
    $region13: #{tpu_custom_call.1} parent=1 // pred_fallthru
      _
    // Predicated region
    $region14: #{tpu_custom_call.1} parent=1 // pred_check
      _
    $region15: #{tpu_custom_call.1} parent=1 // pred_check_branch
      %62 = sbr.rel (0) target = $region17
    $region16: #{tpu_custom_call.1} parent=1 // pred_region
      %s64 = ssub.s32 128, 128
      %65 = vsyncadd [#allocation8], %s64
      %s67 = sshll.u32 [#allocation9], 4
      %s68 = int_to_ptr.vmem [resolvable:$true] %s67
      %70 = dma.hbm_to_vmem [thread:$0]  %s3, 128, %s68, [#allocation8]
    $region17: #{tpu_custom_call.1} parent=1 // pred_fallthru
      _
    // Predicated region
    $region18: #{tpu_custom_call.1} parent=1 // pred_check
      _
    $region19: #{tpu_custom_call.1} parent=1 // pred_check_branch
      %72 = sbr.rel (0) target = $region21
    $region20: #{tpu_custom_call.1} parent=1 // pred_region
      _
    $region21: #{tpu_custom_call.1} parent=1 // pred_fallthru
      _
    // Predicated region
    $region22: #{tpu_custom_call.1} parent=1 // pred_check
      _
    $region23: #{tpu_custom_call.1} parent=1 // pred_check_branch
      %74 = sbr.rel (0) target = $region25
    $region24: #{tpu_custom_call.1} parent=1 // pred_region
      %s76 = ssub.s32 32, 32
      %77 = vsyncadd [#allocation11], %s76
      %s79 = sshll.u32 [#allocation10], 4
      %s80 = int_to_ptr.vmem [resolvable:$true] %s79
      %82 = dma.hbm_to_vmem [thread:$0]  %s5, 32, %s80, [#allocation11]
    $region25: #{tpu_custom_call.1} parent=1 // pred_fallthru
      _
    // Predicated region
    $region26: #{tpu_custom_call.1} parent=1 // pred_check
      _
    $region27: #{tpu_custom_call.1} parent=1 // pred_check_branch
      %84 = sbr.rel (0) target = $region29
    $region28: #{tpu_custom_call.1} parent=1 // pred_region
      _
    $region29: #{tpu_custom_call.1} parent=1 // pred_fallthru
      _
    // Predicated region
    $region30: #{tpu_custom_call.1} parent=1 // pred_check
      _
    $region31: #{tpu_custom_call.1} parent=1 // pred_check_branch
      %86 = sbr.rel (0) target = $region33
    $region32: #{tpu_custom_call.1} parent=1 // pred_region
      %s88 = ssub.s32 32, 32
      %89 = vsyncadd [#allocation11], %s88
      %s91 = sshll.u32 [#allocation12], 4
      %s92 = int_to_ptr.vmem [resolvable:$true] %s91
      %94 = dma.hbm_to_vmem [thread:$0]  %s7, 32, %s92, [#allocation11]
    $region33: #{tpu_custom_call.1} parent=1 // pred_fallthru
      _
    // Predicated region
    $region34: #{tpu_custom_call.1} parent=1 // pred_check
      _
    $region35: #{tpu_custom_call.1} parent=1 // pred_check_branch
      %96 = sbr.rel (0) target = $region37
    $region36: #{tpu_custom_call.1} parent=1 // pred_region
      %s98 = ssub.s32 32, 32
      %99 = vsyncadd [#allocation14], %s98
      %s101 = sshll.u32 [#allocation13], 4
      %s102 = int_to_ptr.vmem [resolvable:$true] %s101
      %104 = dma.hbm_to_vmem [thread:$0]  %s8, 32, %s102, [#allocation14]
    $region37: #{tpu_custom_call.1} parent=1 // pred_fallthru
      _
    // Predicated region
    $region38: #{tpu_custom_call.1} parent=1 // pred_check
      _
    $region39: #{tpu_custom_call.1} parent=1 // pred_check_branch
      %106 = sbr.rel (0) target = $region41
    $region40: #{tpu_custom_call.1} parent=1 // pred_region
      %s108 = ssub.s32 32, 32
      %109 = vsyncadd [#allocation14], %s108
      %s111 = sshll.u32 [#allocation15], 4
      %s112 = int_to_ptr.vmem [resolvable:$true] %s111
      %114 = dma.hbm_to_vmem [thread:$0]  %s9, 32, %s112, [#allocation14]
    $region41: #{tpu_custom_call.1} parent=1 // pred_fallthru
      _
    // Predicated region
    $region42: #{tpu_custom_call.1} parent=1 // pred_check
      _
    $region43: #{tpu_custom_call.1} parent=1 // pred_check_branch
      %116 = sbr.rel (0) target = $region45
    $region44: #{tpu_custom_call.1} parent=1 // pred_region
      _
    $region45: #{tpu_custom_call.1} parent=1 // pred_fallthru
      _
    // Predicated region
    $region46: #{tpu_custom_call.1} parent=1 // pred_check
      _
    $region47: #{tpu_custom_call.1} parent=1 // pred_check_branch
      %118 = sbr.rel (0) target = $region49
    $region48: #{tpu_custom_call.1} parent=1 // pred_region
      %s120 = ssub.s32 512, 512
      %121 = vsyncadd [#allocation17], %s120
      %s122 = sshll.u32 [#allocation16], 4
      %s123 = int_to_ptr.vmem [resolvable:$true] %s122
      %128 = dma.hbm_to_vmem [thread:$0]  %s11, 512, %s123, [#allocation17], 128, 128, 8
    $region49: #{tpu_custom_call.1} parent=1 // pred_fallthru
      _
    // Predicated region
    $region50: #{tpu_custom_call.1} parent=1 // pred_check
      _
    $region51: #{tpu_custom_call.1} parent=1 // pred_check_branch
      %130 = sbr.rel (0) target = $region53
    $region52: #{tpu_custom_call.1} parent=1 // pred_region
      _
    $region53: #{tpu_custom_call.1} parent=1 // pred_fallthru
      _
    // Predicated region
    $region54: #{tpu_custom_call.1} parent=1 // pred_check
      _
    $region55: #{tpu_custom_call.1} parent=1 // pred_check_branch
      %132 = sbr.rel (0) target = $region57
    $region56: #{tpu_custom_call.1} parent=1 // pred_region
      _
    $region57: #{tpu_custom_call.1} parent=1 // pred_fallthru
      _
    // Predicated region
    $region58: #{tpu_custom_call.1} parent=1 // pred_check
      _
    $region59: #{tpu_custom_call.1} parent=1 // pred_check_branch
      %134 = sbr.rel (0) target = $region61
    $region60: #{tpu_custom_call.1} parent=1 // pred_region
      _
    $region61: #{tpu_custom_call.1} parent=1 // pred_fallthru
      _
    // Predicated region
    $region62: #{tpu_custom_call.1} parent=1 // pred_check
      _
    $region63: #{tpu_custom_call.1} parent=1 // pred_check_branch
      %136 = sbr.rel (0) target = $region65
    $region64: #{tpu_custom_call.1} parent=1 // pred_region
      %137 = dma.done [#allocation3], 256
    $region65: #{tpu_custom_call.1} parent=1 // pred_fallthru
      _
    // Predicated region
    $region66: #{tpu_custom_call.1} parent=1 // pred_check
      _
    $region67: #{tpu_custom_call.1} parent=1 // pred_check_branch
      %139 = sbr.rel (0) target = $region69
    $region68: #{tpu_custom_call.1} parent=1 // pred_region
      %140 = dma.done [#allocation5], 32
    $region69: #{tpu_custom_call.1} parent=1 // pred_fallthru
      _
    // Predicated region
    $region70: #{tpu_custom_call.1} parent=1 // pred_check
      _
    $region71: #{tpu_custom_call.1} parent=1 // pred_check_branch
      %142 = sbr.rel (0) target = $region73
    $region72: #{tpu_custom_call.1} parent=1 // pred_region
      %143 = dma.done [#allocation8], 256
    $region73: #{tpu_custom_call.1} parent=1 // pred_fallthru
      _
    // Predicated region
    $region74: #{tpu_custom_call.1} parent=1 // pred_check
      _
    $region75: #{tpu_custom_call.1} parent=1 // pred_check_branch
      %145 = sbr.rel (0) target = $region77
    $region76: #{tpu_custom_call.1} parent=1 // pred_region
      %146 = dma.done [#allocation8], 128
    $region77: #{tpu_custom_call.1} parent=1 // pred_fallthru
      _
    // Predicated region
    $region78: #{tpu_custom_call.1} parent=1 // pred_check
      _
    $region79: #{tpu_custom_call.1} parent=1 // pred_check_branch
      %148 = sbr.rel (0) target = $region81
    $region80: #{tpu_custom_call.1} parent=1 // pred_region
      %149 = dma.done [#allocation11], 32
    $region81: #{tpu_custom_call.1} parent=1 // pred_fallthru
      _
    // Predicated region
    $region82: #{tpu_custom_call.1} parent=1 // pred_check
      _
    $region83: #{tpu_custom_call.1} parent=1 // pred_check_branch
      %151 = sbr.rel (0) target = $region85
    $region84: #{tpu_custom_call.1} parent=1 // pred_region
      %152 = dma.done [#allocation11], 32
    $region85: #{tpu_custom_call.1} parent=1 // pred_fallthru
      _
    // Predicated region
    $region86: #{tpu_custom_call.1} parent=1 // pred_check
      _
    $region87: #{tpu_custom_call.1} parent=1 // pred_check_branch
      %154 = sbr.rel (0) target = $region89
    $region88: #{tpu_custom_call.1} parent=1 // pred_region
      %155 = dma.done [#allocation14], 32
    $region89: #{tpu_custom_call.1} parent=1 // pred_fallthru
      _
    // Predicated region
    $region90: #{tpu_custom_call.1} parent=1 // pred_check
      _
    $region91: #{tpu_custom_call.1} parent=1 // pred_check_branch
      %157 = sbr.rel (0) target = $region93
    $region92: #{tpu_custom_call.1} parent=1 // pred_region
      %158 = dma.done [#allocation14], 32
    $region93: #{tpu_custom_call.1} parent=1 // pred_fallthru
      _
    // Predicated region
    $region94: #{tpu_custom_call.1} parent=1 // pred_check
      _
    $region95: #{tpu_custom_call.1} parent=1 // pred_check_branch
      %160 = sbr.rel (0) target = $region97
    $region96: #{tpu_custom_call.1} parent=1 // pred_region
      %161 = dma.done [#allocation17], 512
    $region97: #{tpu_custom_call.1} parent=1 // pred_fallthru
      _
    %162 = sfence
    %v163 = vld [vmem:[#allocation7] sm:$0xff]
    %v164 = vld [vmem:[#allocation7 + $0x8] sm:$0xf]
    %v165 = vld [vmem:[#allocation9] sm:$0xff]
    %v166 = vlaneseq
    %v167 = vand.u32 %v166, 127
    %v168 = vld [vmem:[#allocation2] sm:$0x1]
    %v169 = vld [vmem:[#allocation2 + $0x2] sm:$0x1]
    %v170 = vld [vmem:[#allocation2 + $0x4] sm:$0x1]
    %v171 = vld [vmem:[#allocation2 + $0x6] sm:$0x1]
    %v172 = vld [vmem:[#allocation2 + $0x8] sm:$0x1]
    %v173 = vld [vmem:[#allocation2 + $0xa] sm:$0x1]
    %v174 = vld [vmem:[#allocation2 + $0xc] sm:$0x1]
    %v175 = vld [vmem:[#allocation2 + $0xe] sm:$0x1]
    %v176 = vld [vmem:[#allocation2 + $0x1] sm:$0x1]
    %v177 = vld [vmem:[#allocation2 + $0x3] sm:$0x1]
    %v178 = vld [vmem:[#allocation2 + $0x5] sm:$0x1]
    %v179 = vld [vmem:[#allocation2 + $0x7] sm:$0x1]
    %v180 = vld [vmem:[#allocation2 + $0x9] sm:$0x1]
    %v181 = vld [vmem:[#allocation2 + $0xb] sm:$0x1]
    %v182 = vld [vmem:[#allocation2 + $0xd] sm:$0x1]
    %v183 = vld [vmem:[#allocation2 + $0xf] sm:$0x1]
    %v192 = vrot.slane %v169, 7
    %vm193 = vcmask 1041409
    %v194 = vsel %vm193, %v192, %v168
    %v195 = vrot.slane %v170, 6
    %vm196 = vcmask 1042434
    %v197 = vsel %vm196, %v195, %v194
    %v198 = vrot.slane %v171, 5
    %vm199 = vcmask 1043459
    %v200 = vsel %vm199, %v198, %v197
    %v201 = vrot.slane %v172, 4
    %vm202 = vcmask 1044484
    %v203 = vsel %vm202, %v201, %v200
    %v204 = vrot.slane %v173, 3
    %vm205 = vcmask 1045509
    %v206 = vsel %vm205, %v204, %v203
    %v207 = vrot.slane %v174, 2
    %vm208 = vcmask 1046534
    %v209 = vsel %vm208, %v207, %v206
    %v210 = vrot.slane %v175, 1
    %vm211 = vcmask 1047559
    %v212 = vsel %vm211, %v210, %v209
    %v221 = vrot.slane %v177, 7
    %v222 = vsel %vm193, %v221, %v176
    %v223 = vrot.slane %v178, 6
    %v224 = vsel %vm196, %v223, %v222
    %v225 = vrot.slane %v179, 5
    %v226 = vsel %vm199, %v225, %v224
    %v227 = vrot.slane %v180, 4
    %v228 = vsel %vm202, %v227, %v226
    %v229 = vrot.slane %v181, 3
    %v230 = vsel %vm205, %v229, %v228
    %v231 = vrot.slane %v182, 2
    %v232 = vsel %vm208, %v231, %v230
    %v233 = vrot.slane %v183, 1
    %v234 = vsel %vm211, %v233, %v232
    %s235 = sld [smem:[#allocation6]]
    %s236 = sld [smem:[#allocation6 + $0x1]]
    %vm237 = vcmp.eq.s32.totalorder %v167, 30
    %v238 = vstv %s235
    %v239 = vsel %vm237, %v238, 0.0
    %vm240 = vcmp.eq.s32.totalorder %v167, 31
    %v241 = vstv %s236
    %v242 = vsel %vm240, %v241, 0.0
    %v243 = vadd.f32 %v239, %v242
    %v244 = vadd.f32 %v165, %v243
    %s245 = sld [smem:[#allocation6 + $0x80]]
    %s246 = sld [smem:[#allocation6 + $0x81]]
    %v247 = vstv %s245
    %v248 = vsel %vm237, %v247, 0.0
    %v249 = vstv %s246
    %v250 = vsel %vm240, %v249, 0.0
    %v251 = vadd.f32 %v248, %v250
    %v252 = vadd.f32 %v165, %v251
    %vm253 = vcmask 97280
    %v254 = vsel %vm253, %v212, 0
    %v256 = vsel %vm253, %v234, 0
    %vm258 = vcmask 1043456
    %v260 = vsel %vm258, %v164, 0
    %262 = vmatprep.subr.mxu0 0.0
    %263 = vmatpush1.msra.mxu0 %v163
    %264 = vmatprep.subr.mxu0 0.0
    %265 = vmatpush1.msra.mxu0 %v260
    %266 = vmatprep.subr.mxu0 0.0
    %267 = vmatpush1.msra.mxu0 0.0
    %268 = vmatprep.subr.mxu0 0.0
    %269 = vmatpush1.msra.mxu0 0.0
    %270 = vmatprep.subr.mxu0 0.0
    %271 = vmatpush1.msra.mxu0 0.0
    %272 = vmatprep.subr.mxu0 0.0
    %273 = vmatpush1.msra.mxu0 0.0
    %274 = vmatprep.subr.mxu0 0.0
    %275 = vmatpush1.msra.mxu0 0.0
    %276 = vmatprep.subr.mxu0 0.0
    %277 = vmatpush1.msra.mxu0 0.0
    %278 = vmatprep.subr.mxu0 0.0
    %279 = vmatpush1.msra.mxu0 0.0
    %280 = vmatprep.subr.mxu0 0.0
    %281 = vmatpush1.msra.mxu0 0.0
    %282 = vmatprep.subr.mxu0 0.0
    %283 = vmatpush1.msra.mxu0 0.0
    %284 = vmatprep.subr.mxu0 0.0
    %285 = vmatpush1.msra.mxu0 0.0
    %286 = vmatprep.subr.mxu0 0.0
    %287 = vmatpush1.msra.mxu0 0.0
    %288 = vmatprep.subr.mxu0 0.0
    %289 = vmatpush1.msra.mxu0 0.0
    %290 = vmatprep.subr.mxu0 0.0
    %291 = vmatpush1.msra.mxu0 0.0
    %292 = vmatprep.subr.mxu0 0.0
    %293 = vmatpush1.msra.mxu0 0.0
    %294 = vmatprep.subr.mxu0 0.0
    %295 = vmatpush1.msra.mxu0 0.0
    %296 = vmatprep.subr.mxu0 0.0
    %297 = vmatpush1.msra.mxu0 0.0
    %298 = vmatprep.subr.mxu0 0.0
    %299 = vmatpush1.msra.mxu0 0.0
    %300 = vmatprep.subr.mxu0 0.0
    %301 = vmatpush1.msra.mxu0 0.0
    %302 = vmatprep.subr.mxu0 0.0
    %303 = vmatpush1.msra.mxu0 0.0
    %304 = vmatprep.subr.mxu0 0.0
    %305 = vmatpush1.msra.mxu0 0.0
    %306 = vmatprep.subr.mxu0 0.0
    %307 = vmatpush1.msra.mxu0 0.0
    %308 = vmatprep.subr.mxu0 0.0
    %309 = vmatpush1.msra.mxu0 0.0
    %310 = vmatprep.subr.mxu0 0.0
    %311 = vmatpush1.msra.mxu0 0.0
    %312 = vmatprep.subr.mxu0 0.0
    %313 = vmatpush1.msra.mxu0 0.0
    %314 = vmatprep.subr.mxu0 0.0
    %315 = vmatpush1.msra.mxu0 0.0
    %316 = vmatprep.subr.mxu0 0.0
    %317 = vmatpush1.msra.mxu0 0.0
    %318 = vmatprep.subr.mxu0 0.0
    %319 = vmatpush1.msra.mxu0 0.0
    %320 = vmatprep.subr.mxu0 0.0
    %321 = vmatpush1.msra.mxu0 0.0
    %322 = vmatprep.subr.mxu0 0.0
    %323 = vmatpush1.msra.mxu0 0.0
    %324 = vmatprep.subr.mxu0 0.0
    %325 = vmatpush1.msra.mxu0 0.0
    %326 = vmatprep.mubr.f32.mxu0 0.0
    %327 = vmatmul.mubr.f32.gmra.mrb[0].mxu0 %v254
    %v328 = vpop.f32.mrb[0].mxu0
    %v329 = vadd.f32 %v244, %v328
    %v330 = vpop.f32.mrb[0].mxu0
    %331 = vmatprep.mubr.f32.mxu0 0.0
    %332 = vmatmul.mubr.f32.gmra.mrb[0].mxu0 %v256
    %v333 = vpop.f32.mrb[0].mxu0
    %v334 = vadd.f32 %v252, %v333
    %v335 = vpop.f32.mrb[0].mxu0
    %336 = vdwg.mxu0
    %v337 = vld [vmem:[%s4] sm:$0xff]
    %v338 = vld [vmem:[%s4 + $0x8] sm:$0xff]
    %v339 = vld [vmem:[%s4 + $0x10] sm:$0xff]
    %v340 = vld [vmem:[%s4 + $0x18] sm:$0xff]
    %v341 = vld [vmem:[#allocation10] sm:$0x1]
    %v342 = vlaneseq
    %v343 = vshrl.u32 %v342, 7
    %v344 = vsub.s32 0, %v343
    %v345 = vrot.slane %v341, %v344
    %vm346 = vcmask 261120
    %v348 = vsel %vm346, %v329, 0
    %v351 = vsel %vm346, %v334, 0
    %353 = vmatprep.subr.mxu0 0.0
    %354 = vmatpush1.msra.mxu0 %v337
    %355 = vmatprep.subr.mxu0 0.0
    %356 = vmatpush1.msra.mxu0 %v338
    %357 = vmatprep.subr.mxu0 0.0
    %358 = vmatpush1.msra.mxu0 %v339
    %359 = vmatprep.subr.mxu0 0.0
    %360 = vmatpush1.msra.mxu0 %v340
    %361 = vmatprep.subr.mxu0 0.0
    %362 = vmatpush1.msra.mxu0 0.0
    %363 = vmatprep.subr.mxu0 0.0
    %364 = vmatpush1.msra.mxu0 0.0
    %365 = vmatprep.subr.mxu0 0.0
    %366 = vmatpush1.msra.mxu0 0.0
    %367 = vmatprep.subr.mxu0 0.0
    %368 = vmatpush1.msra.mxu0 0.0
    %369 = vmatprep.subr.mxu0 0.0
    %370 = vmatpush1.msra.mxu0 0.0
    %371 = vmatprep.subr.mxu0 0.0
    %372 = vmatpush1.msra.mxu0 0.0
    %373 = vmatprep.subr.mxu0 0.0
    %374 = vmatpush1.msra.mxu0 0.0
    %375 = vmatprep.subr.mxu0 0.0
    %376 = vmatpush1.msra.mxu0 0.0
    %377 = vmatprep.subr.mxu0 0.0
    %378 = vmatpush1.msra.mxu0 0.0
    %379 = vmatprep.subr.mxu0 0.0
    %380 = vmatpush1.msra.mxu0 0.0
    %381 = vmatprep.subr.mxu0 0.0
    %382 = vmatpush1.msra.mxu0 0.0
    %383 = vmatprep.subr.mxu0 0.0
    %384 = vmatpush1.msra.mxu0 0.0
    %385 = vmatprep.subr.mxu0 0.0
    %386 = vmatpush1.msra.mxu0 0.0
    %387 = vmatprep.subr.mxu0 0.0
    %388 = vmatpush1.msra.mxu0 0.0
    %389 = vmatprep.subr.mxu0 0.0
    %390 = vmatpush1.msra.mxu0 0.0
    %391 = vmatprep.subr.mxu0 0.0
    %392 = vmatpush1.msra.mxu0 0.0
    %393 = vmatprep.subr.mxu0 0.0
    %394 = vmatpush1.msra.mxu0 0.0
    %395 = vmatprep.subr.mxu0 0.0
    %396 = vmatpush1.msra.mxu0 0.0
    %397 = vmatprep.subr.mxu0 0.0
    %398 = vmatpush1.msra.mxu0 0.0
    %399 = vmatprep.subr.mxu0 0.0
    %400 = vmatpush1.msra.mxu0 0.0
    %401 = vmatprep.subr.mxu0 0.0
    %402 = vmatpush1.msra.mxu0 0.0
    %403 = vmatprep.subr.mxu0 0.0
    %404 = vmatpush1.msra.mxu0 0.0
    %405 = vmatprep.subr.mxu0 0.0
    %406 = vmatpush1.msra.mxu0 0.0
    %407 = vmatprep.subr.mxu0 0.0
    %408 = vmatpush1.msra.mxu0 0.0
    %409 = vmatprep.subr.mxu0 0.0
    %410 = vmatpush1.msra.mxu0 0.0
    %411 = vmatprep.subr.mxu0 0.0
    %412 = vmatpush1.msra.mxu0 0.0
    %413 = vmatprep.subr.mxu0 0.0
    %414 = vmatpush1.msra.mxu0 0.0
    %415 = vmatprep.subr.mxu0 0.0
    %416 = vmatpush1.msra.mxu0 0.0
    %417 = vmatprep.mubr.f32.mxu0 0.0
    %418 = vmatmul.mubr.f32.gmra.mrb[0].mxu0 %v348
    %v419 = vpop.f32.mrb[0].mxu0
    %v420 = vadd.f32 %v345, %v419
    %v421 = vpop.f32.mrb[0].mxu0
    %422 = vmatprep.mubr.f32.mxu0 0.0
    %423 = vmatmul.mubr.f32.gmra.mrb[0].mxu0 %v351
    %v424 = vpop.f32.mrb[0].mxu0
    %v425 = vadd.f32 %v345, %v424
    %v426 = vpop.f32.mrb[0].mxu0
    %427 = vdwg.mxu0
    %v428 = vld [vmem:[%s6] sm:$0xff]
    %v429 = vld [vmem:[%s6 + $0x8] sm:$0xff]
    %v430 = vld [vmem:[%s6 + $0x10] sm:$0xff]
    %v431 = vld [vmem:[%s6 + $0x18] sm:$0xff]
    %433 = vrot.lane.b32.xlu0 %v420, 96
    %v434 = vpop.permute.xlu0 %433
    %vm435 = vcmask 64512
    %v436 = vsel %vm435, %v420, 0
    %v438 = vsel %vm435, %v434, 0
    %440 = vmatprep.subr.mxu0 0.0
    %441 = vmatpush1.xpose.msra.mxu0 %v438
    %442 = vmatprep.subr.mxu0 0.0
    %443 = vmatpush1.xpose.msra.mxu0 0.0
    %444 = vmatprep.subr.mxu0 0.0
    %445 = vmatpush1.xpose.msra.mxu0 0.0
    %446 = vmatprep.subr.mxu0 0.0
    %447 = vmatpush1.xpose.msra.mxu0 0.0
    %448 = vmatprep.subr.mxu0 0.0
    %449 = vmatpush1.xpose.msra.mxu0 0.0
    %450 = vmatprep.subr.mxu0 0.0
    %451 = vmatpush1.xpose.msra.mxu0 0.0
    %452 = vmatprep.subr.mxu0 0.0
    %453 = vmatpush1.xpose.msra.mxu0 0.0
    %454 = vmatprep.subr.mxu0 0.0
    %455 = vmatpush1.xpose.msra.mxu0 0.0
    %456 = vmatprep.subr.mxu0 0.0
    %457 = vmatpush1.xpose.msra.mxu0 0.0
    %458 = vmatprep.subr.mxu0 0.0
    %459 = vmatpush1.xpose.msra.mxu0 0.0
    %460 = vmatprep.subr.mxu0 0.0
    %461 = vmatpush1.xpose.msra.mxu0 0.0
    %462 = vmatprep.subr.mxu0 0.0
    %463 = vmatpush1.xpose.msra.mxu0 0.0
    %464 = vmatprep.subr.mxu0 0.0
    %465 = vmatpush1.xpose.msra.mxu0 0.0
    %466 = vmatprep.subr.mxu0 0.0
    %467 = vmatpush1.xpose.msra.mxu0 0.0
    %468 = vmatprep.subr.mxu0 0.0
    %469 = vmatpush1.xpose.msra.mxu0 0.0
    %470 = vmatprep.subr.mxu0 0.0
    %471 = vmatpush1.xpose.msra.mxu0 0.0
    %472 = vmatprep.subr.mxu0 0.0
    %473 = vmatpush1.xpose.msra.mxu0 0.0
    %474 = vmatprep.subr.mxu0 0.0
    %475 = vmatpush1.xpose.msra.mxu0 0.0
    %476 = vmatprep.subr.mxu0 0.0
    %477 = vmatpush1.xpose.msra.mxu0 0.0
    %478 = vmatprep.subr.mxu0 0.0
    %479 = vmatpush1.xpose.msra.mxu0 0.0
    %480 = vmatprep.subr.mxu0 0.0
    %481 = vmatpush1.xpose.msra.mxu0 0.0
    %482 = vmatprep.subr.mxu0 0.0
    %483 = vmatpush1.xpose.msra.mxu0 0.0
    %484 = vmatprep.subr.mxu0 0.0
    %485 = vmatpush1.xpose.msra.mxu0 0.0
    %486 = vmatprep.subr.mxu0 0.0
    %487 = vmatpush1.xpose.msra.mxu0 0.0
    %488 = vmatprep.subr.mxu0 0.0
    %489 = vmatpush1.xpose.msra.mxu0 0.0
    %490 = vmatprep.subr.mxu0 0.0
    %491 = vmatpush1.xpose.msra.mxu0 0.0
    %492 = vmatprep.subr.mxu0 0.0
    %493 = vmatpush1.xpose.msra.mxu0 0.0
    %494 = vmatprep.subr.mxu0 0.0
    %495 = vmatpush1.xpose.msra.mxu0 0.0
    %496 = vmatprep.subr.mxu0 0.0
    %497 = vmatpush1.xpose.msra.mxu0 0.0
    %498 = vmatprep.subr.mxu0 0.0
    %499 = vmatpush1.xpose.msra.mxu0 0.0
    %500 = vmatprep.subr.mxu0 0.0
    %501 = vmatpush1.xpose.msra.mxu0 0.0
    %502 = vmatprep.subr.mxu0 0.0
    %503 = vmatpush1.xpose.msra.mxu0 0.0
    %504 = vmatprep.mubr.f32.mxu0 0.0
    %505 = vmatmul.mubr.f32.gmra.mrb[0].mxu0 %v436
    %v506 = vpop.f32.mrb[0].mxu0
    %v507 = vadd.f32 0.0, %v506
    %v508 = vpop.f32.mrb[0].mxu0
    %509 = vdwg.mxu0
    %v510 = vmul.f32 %v507, 0.35355338
    %v511 = vsel %vm435, %v510, -inf
    %512 = vmax.xlane.f32.xlu0 %v511
    %v513 = vpop.xlane.xlu0 %512
    %v514 = vsub.f32 %v510, %v513
    %v515 = vmul.f32 %v514, 1.442695
    %v516 = vpow.pop %v515
    %v517 = vsel %vm435, %v516, 0.0
    %518 = vadd.xlane.f32.xlu0 %v517
    %v519 = vpop.xlane.xlu0 %518
    %v520 = vrcp.pop %v519
    %v521 = vmul.f32 %v516, %v520
    %522 = vrot.lane.b32.xlu0 %v420, 64
    %v523 = vpop.permute.xlu0 %522
    %v526 = vsel %vm435, %v521, 0
    %528 = vmatprep.subr.mxu0 0.0
    %529 = vmatpush1.msra.mxu0 %v523
    %530 = vmatprep.subr.mxu0 0.0
    %531 = vmatpush1.msra.mxu0 0.0
    %532 = vmatprep.subr.mxu0 0.0
    %533 = vmatpush1.msra.mxu0 0.0
    %534 = vmatprep.subr.mxu0 0.0
    %535 = vmatpush1.msra.mxu0 0.0
    %536 = vmatprep.subr.mxu0 0.0
    %537 = vmatpush1.msra.mxu0 0.0
    %538 = vmatprep.subr.mxu0 0.0
    %539 = vmatpush1.msra.mxu0 0.0
    %540 = vmatprep.subr.mxu0 0.0
    %541 = vmatpush1.msra.mxu0 0.0
    %542 = vmatprep.subr.mxu0 0.0
    %543 = vmatpush1.msra.mxu0 0.0
    %544 = vmatprep.subr.mxu0 0.0
    %545 = vmatpush1.msra.mxu0 0.0
    %546 = vmatprep.subr.mxu0 0.0
    %547 = vmatpush1.msra.mxu0 0.0
    %548 = vmatprep.subr.mxu0 0.0
    %549 = vmatpush1.msra.mxu0 0.0
    %550 = vmatprep.subr.mxu0 0.0
    %551 = vmatpush1.msra.mxu0 0.0
    %552 = vmatprep.subr.mxu0 0.0
    %553 = vmatpush1.msra.mxu0 0.0
    %554 = vmatprep.subr.mxu0 0.0
    %555 = vmatpush1.msra.mxu0 0.0
    %556 = vmatprep.subr.mxu0 0.0
    %557 = vmatpush1.msra.mxu0 0.0
    %558 = vmatprep.subr.mxu0 0.0
    %559 = vmatpush1.msra.mxu0 0.0
    %560 = vmatprep.subr.mxu0 0.0
    %561 = vmatpush1.msra.mxu0 0.0
    %562 = vmatprep.subr.mxu0 0.0
    %563 = vmatpush1.msra.mxu0 0.0
    %564 = vmatprep.subr.mxu0 0.0
    %565 = vmatpush1.msra.mxu0 0.0
    %566 = vmatprep.subr.mxu0 0.0
    %567 = vmatpush1.msra.mxu0 0.0
    %568 = vmatprep.subr.mxu0 0.0
    %569 = vmatpush1.msra.mxu0 0.0
    %570 = vmatprep.subr.mxu0 0.0
    %571 = vmatpush1.msra.mxu0 0.0
    %572 = vmatprep.subr.mxu0 0.0
    %573 = vmatpush1.msra.mxu0 0.0
    %574 = vmatprep.subr.mxu0 0.0
    %575 = vmatpush1.msra.mxu0 0.0
    %576 = vmatprep.subr.mxu0 0.0
    %577 = vmatpush1.msra.mxu0 0.0
    %578 = vmatprep.subr.mxu0 0.0
    %579 = vmatpush1.msra.mxu0 0.0
    %580 = vmatprep.subr.mxu0 0.0
    %581 = vmatpush1.msra.mxu0 0.0
    %582 = vmatprep.subr.mxu0 0.0
    %583 = vmatpush1.msra.mxu0 0.0
    %584 = vmatprep.subr.mxu0 0.0
    %585 = vmatpush1.msra.mxu0 0.0
    %586 = vmatprep.subr.mxu0 0.0
    %587 = vmatpush1.msra.mxu0 0.0
    %588 = vmatprep.subr.mxu0 0.0
    %589 = vmatpush1.msra.mxu0 0.0
    %590 = vmatprep.subr.mxu0 0.0
    %591 = vmatpush1.msra.mxu0 0.0
    %592 = vmatprep.mubr.f32.mxu0 0.0
    %593 = vmatmul.mubr.f32.gmra.mrb[0].mxu0 %v526
    %v594 = vpop.f32.mrb[0].mxu0
    %v595 = vadd.f32 0.0, %v594
    %v596 = vpop.f32.mrb[0].mxu0
    %597 = vdwg.mxu0
    %599 = vrot.lane.b32.xlu0 %v425, 96
    %v600 = vpop.permute.xlu0 %599
    %v601 = vsel %vm435, %v425, 0
    %v603 = vsel %vm435, %v600, 0
    %605 = vmatprep.subr.mxu0 0.0
    %606 = vmatpush1.xpose.msra.mxu0 %v603
    %607 = vmatprep.subr.mxu0 0.0
    %608 = vmatpush1.xpose.msra.mxu0 0.0
    %609 = vmatprep.subr.mxu0 0.0
    %610 = vmatpush1.xpose.msra.mxu0 0.0
    %611 = vmatprep.subr.mxu0 0.0
    %612 = vmatpush1.xpose.msra.mxu0 0.0
    %613 = vmatprep.subr.mxu0 0.0
    %614 = vmatpush1.xpose.msra.mxu0 0.0
    %615 = vmatprep.subr.mxu0 0.0
    %616 = vmatpush1.xpose.msra.mxu0 0.0
    %617 = vmatprep.subr.mxu0 0.0
    %618 = vmatpush1.xpose.msra.mxu0 0.0
    %619 = vmatprep.subr.mxu0 0.0
    %620 = vmatpush1.xpose.msra.mxu0 0.0
    %621 = vmatprep.subr.mxu0 0.0
    %622 = vmatpush1.xpose.msra.mxu0 0.0
    %623 = vmatprep.subr.mxu0 0.0
    %624 = vmatpush1.xpose.msra.mxu0 0.0
    %625 = vmatprep.subr.mxu0 0.0
    %626 = vmatpush1.xpose.msra.mxu0 0.0
    %627 = vmatprep.subr.mxu0 0.0
    %628 = vmatpush1.xpose.msra.mxu0 0.0
    %629 = vmatprep.subr.mxu0 0.0
    %630 = vmatpush1.xpose.msra.mxu0 0.0
    %631 = vmatprep.subr.mxu0 0.0
    %632 = vmatpush1.xpose.msra.mxu0 0.0
    %633 = vmatprep.subr.mxu0 0.0
    %634 = vmatpush1.xpose.msra.mxu0 0.0
    %635 = vmatprep.subr.mxu0 0.0
    %636 = vmatpush1.xpose.msra.mxu0 0.0
    %637 = vmatprep.subr.mxu0 0.0
    %638 = vmatpush1.xpose.msra.mxu0 0.0
    %639 = vmatprep.subr.mxu0 0.0
    %640 = vmatpush1.xpose.msra.mxu0 0.0
    %641 = vmatprep.subr.mxu0 0.0
    %642 = vmatpush1.xpose.msra.mxu0 0.0
    %643 = vmatprep.subr.mxu0 0.0
    %644 = vmatpush1.xpose.msra.mxu0 0.0
    %645 = vmatprep.subr.mxu0 0.0
    %646 = vmatpush1.xpose.msra.mxu0 0.0
    %647 = vmatprep.subr.mxu0 0.0
    %648 = vmatpush1.xpose.msra.mxu0 0.0
    %649 = vmatprep.subr.mxu0 0.0
    %650 = vmatpush1.xpose.msra.mxu0 0.0
    %651 = vmatprep.subr.mxu0 0.0
    %652 = vmatpush1.xpose.msra.mxu0 0.0
    %653 = vmatprep.subr.mxu0 0.0
    %654 = vmatpush1.xpose.msra.mxu0 0.0
    %655 = vmatprep.subr.mxu0 0.0
    %656 = vmatpush1.xpose.msra.mxu0 0.0
    %657 = vmatprep.subr.mxu0 0.0
    %658 = vmatpush1.xpose.msra.mxu0 0.0
    %659 = vmatprep.subr.mxu0 0.0
    %660 = vmatpush1.xpose.msra.mxu0 0.0
    %661 = vmatprep.subr.mxu0 0.0
    %662 = vmatpush1.xpose.msra.mxu0 0.0
    %663 = vmatprep.subr.mxu0 0.0
    %664 = vmatpush1.xpose.msra.mxu0 0.0
    %665 = vmatprep.subr.mxu0 0.0
    %666 = vmatpush1.xpose.msra.mxu0 0.0
    %667 = vmatprep.subr.mxu0 0.0
    %668 = vmatpush1.xpose.msra.mxu0 0.0
    %669 = vmatprep.mubr.f32.mxu0 0.0
    %670 = vmatmul.mubr.f32.gmra.mrb[0].mxu0 %v601
    %v671 = vpop.f32.mrb[0].mxu0
    %v672 = vadd.f32 0.0, %v671
    %v673 = vpop.f32.mrb[0].mxu0
    %674 = vdwg.mxu0
    %v675 = vmul.f32 %v672, 0.35355338
    %v676 = vsel %vm435, %v675, -inf
    %677 = vmax.xlane.f32.xlu0 %v676
    %v678 = vpop.xlane.xlu0 %677
    %v679 = vsub.f32 %v675, %v678
    %v680 = vmul.f32 %v679, 1.442695
    %v681 = vpow.pop %v680
    %v682 = vsel %vm435, %v681, 0.0
    %683 = vadd.xlane.f32.xlu0 %v682
    %v684 = vpop.xlane.xlu0 %683
    %v685 = vrcp.pop %v684
    %v686 = vmul.f32 %v681, %v685
    %687 = vrot.lane.b32.xlu0 %v425, 64
    %v688 = vpop.permute.xlu0 %687
    %v691 = vsel %vm435, %v686, 0
    %693 = vmatprep.subr.mxu0 0.0
    %694 = vmatpush1.msra.mxu0 %v688
    %695 = vmatprep.subr.mxu0 0.0
    %696 = vmatpush1.msra.mxu0 0.0
    %697 = vmatprep.subr.mxu0 0.0
    %698 = vmatpush1.msra.mxu0 0.0
    %699 = vmatprep.subr.mxu0 0.0
    %700 = vmatpush1.msra.mxu0 0.0
    %701 = vmatprep.subr.mxu0 0.0
    %702 = vmatpush1.msra.mxu0 0.0
    %703 = vmatprep.subr.mxu0 0.0
    %704 = vmatpush1.msra.mxu0 0.0
    %705 = vmatprep.subr.mxu0 0.0
    %706 = vmatpush1.msra.mxu0 0.0
    %707 = vmatprep.subr.mxu0 0.0
    %708 = vmatpush1.msra.mxu0 0.0
    %709 = vmatprep.subr.mxu0 0.0
    %710 = vmatpush1.msra.mxu0 0.0
    %711 = vmatprep.subr.mxu0 0.0
    %712 = vmatpush1.msra.mxu0 0.0
    %713 = vmatprep.subr.mxu0 0.0
    %714 = vmatpush1.msra.mxu0 0.0
    %715 = vmatprep.subr.mxu0 0.0
    %716 = vmatpush1.msra.mxu0 0.0
    %717 = vmatprep.subr.mxu0 0.0
    %718 = vmatpush1.msra.mxu0 0.0
    %719 = vmatprep.subr.mxu0 0.0
    %720 = vmatpush1.msra.mxu0 0.0
    %721 = vmatprep.subr.mxu0 0.0
    %722 = vmatpush1.msra.mxu0 0.0
    %723 = vmatprep.subr.mxu0 0.0
    %724 = vmatpush1.msra.mxu0 0.0
    %725 = vmatprep.subr.mxu0 0.0
    %726 = vmatpush1.msra.mxu0 0.0
    %727 = vmatprep.subr.mxu0 0.0
    %728 = vmatpush1.msra.mxu0 0.0
    %729 = vmatprep.subr.mxu0 0.0
    %730 = vmatpush1.msra.mxu0 0.0
    %731 = vmatprep.subr.mxu0 0.0
    %732 = vmatpush1.msra.mxu0 0.0
    %733 = vmatprep.subr.mxu0 0.0
    %734 = vmatpush1.msra.mxu0 0.0
    %735 = vmatprep.subr.mxu0 0.0
    %736 = vmatpush1.msra.mxu0 0.0
    %737 = vmatprep.subr.mxu0 0.0
    %738 = vmatpush1.msra.mxu0 0.0
    %739 = vmatprep.subr.mxu0 0.0
    %740 = vmatpush1.msra.mxu0 0.0
    %741 = vmatprep.subr.mxu0 0.0
    %742 = vmatpush1.msra.mxu0 0.0
    %743 = vmatprep.subr.mxu0 0.0
    %744 = vmatpush1.msra.mxu0 0.0
    %745 = vmatprep.subr.mxu0 0.0
    %746 = vmatpush1.msra.mxu0 0.0
    %747 = vmatprep.subr.mxu0 0.0
    %748 = vmatpush1.msra.mxu0 0.0
    %749 = vmatprep.subr.mxu0 0.0
    %750 = vmatpush1.msra.mxu0 0.0
    %751 = vmatprep.subr.mxu0 0.0
    %752 = vmatpush1.msra.mxu0 0.0
    %753 = vmatprep.subr.mxu0 0.0
    %754 = vmatpush1.msra.mxu0 0.0
    %755 = vmatprep.subr.mxu0 0.0
    %756 = vmatpush1.msra.mxu0 0.0
    %757 = vmatprep.mubr.f32.mxu0 0.0
    %758 = vmatmul.mubr.f32.gmra.mrb[0].mxu0 %v691
    %v759 = vpop.f32.mrb[0].mxu0
    %v760 = vadd.f32 0.0, %v759
    %v761 = vpop.f32.mrb[0].mxu0
    %762 = vdwg.mxu0
    %763 = vrot.lane.b32.xlu0 %v420, 120
    %v764 = vpop.permute.xlu0 %763
    %765 = vrot.lane.b32.xlu0 %v420, 88
    %v766 = vpop.permute.xlu0 %765
    %v767 = vsel %vm435, %v764, 0
    %v769 = vsel %vm435, %v766, 0
    %771 = vmatprep.subr.mxu0 0.0
    %772 = vmatpush1.xpose.msra.mxu0 %v769
    %773 = vmatprep.subr.mxu0 0.0
    %774 = vmatpush1.xpose.msra.mxu0 0.0
    %775 = vmatprep.subr.mxu0 0.0
    %776 = vmatpush1.xpose.msra.mxu0 0.0
    %777 = vmatprep.subr.mxu0 0.0
    %778 = vmatpush1.xpose.msra.mxu0 0.0
    %779 = vmatprep.subr.mxu0 0.0
    %780 = vmatpush1.xpose.msra.mxu0 0.0
    %781 = vmatprep.subr.mxu0 0.0
    %782 = vmatpush1.xpose.msra.mxu0 0.0
    %783 = vmatprep.subr.mxu0 0.0
    %784 = vmatpush1.xpose.msra.mxu0 0.0
    %785 = vmatprep.subr.mxu0 0.0
    %786 = vmatpush1.xpose.msra.mxu0 0.0
    %787 = vmatprep.subr.mxu0 0.0
    %788 = vmatpush1.xpose.msra.mxu0 0.0
    %789 = vmatprep.subr.mxu0 0.0
    %790 = vmatpush1.xpose.msra.mxu0 0.0
    %791 = vmatprep.subr.mxu0 0.0
    %792 = vmatpush1.xpose.msra.mxu0 0.0
    %793 = vmatprep.subr.mxu0 0.0
    %794 = vmatpush1.xpose.msra.mxu0 0.0
    %795 = vmatprep.subr.mxu0 0.0
    %796 = vmatpush1.xpose.msra.mxu0 0.0
    %797 = vmatprep.subr.mxu0 0.0
    %798 = vmatpush1.xpose.msra.mxu0 0.0
    %799 = vmatprep.subr.mxu0 0.0
    %800 = vmatpush1.xpose.msra.mxu0 0.0
    %801 = vmatprep.subr.mxu0 0.0
    %802 = vmatpush1.xpose.msra.mxu0 0.0
    %803 = vmatprep.subr.mxu0 0.0
    %804 = vmatpush1.xpose.msra.mxu0 0.0
    %805 = vmatprep.subr.mxu0 0.0
    %806 = vmatpush1.xpose.msra.mxu0 0.0
    %807 = vmatprep.subr.mxu0 0.0
    %808 = vmatpush1.xpose.msra.mxu0 0.0
    %809 = vmatprep.subr.mxu0 0.0
    %810 = vmatpush1.xpose.msra.mxu0 0.0
    %811 = vmatprep.subr.mxu0 0.0
    %812 = vmatpush1.xpose.msra.mxu0 0.0
    %813 = vmatprep.subr.mxu0 0.0
    %814 = vmatpush1.xpose.msra.mxu0 0.0
    %815 = vmatprep.subr.mxu0 0.0
    %816 = vmatpush1.xpose.msra.mxu0 0.0
    %817 = vmatprep.subr.mxu0 0.0
    %818 = vmatpush1.xpose.msra.mxu0 0.0
    %819 = vmatprep.subr.mxu0 0.0
    %820 = vmatpush1.xpose.msra.mxu0 0.0
    %821 = vmatprep.subr.mxu0 0.0
    %822 = vmatpush1.xpose.msra.mxu0 0.0
    %823 = vmatprep.subr.mxu0 0.0
    %824 = vmatpush1.xpose.msra.mxu0 0.0
    %825 = vmatprep.subr.mxu0 0.0
    %826 = vmatpush1.xpose.msra.mxu0 0.0
    %827 = vmatprep.subr.mxu0 0.0
    %828 = vmatpush1.xpose.msra.mxu0 0.0
    %829 = vmatprep.subr.mxu0 0.0
    %830 = vmatpush1.xpose.msra.mxu0 0.0
    %831 = vmatprep.subr.mxu0 0.0
    %832 = vmatpush1.xpose.msra.mxu0 0.0
    %833 = vmatprep.subr.mxu0 0.0
    %834 = vmatpush1.xpose.msra.mxu0 0.0
    %835 = vmatprep.mubr.f32.mxu0 0.0
    %836 = vmatmul.mubr.f32.gmra.mrb[0].mxu0 %v767
    %v837 = vpop.f32.mrb[0].mxu0
    %v838 = vadd.f32 0.0, %v837
    %v839 = vpop.f32.mrb[0].mxu0
    %840 = vdwg.mxu0
    %v841 = vmul.f32 %v838, 0.35355338
    %v842 = vsel %vm435, %v841, -inf
    %843 = vmax.xlane.f32.xlu0 %v842
    %v844 = vpop.xlane.xlu0 %843
    %v845 = vsub.f32 %v841, %v844
    %v846 = vmul.f32 %v845, 1.442695
    %v847 = vpow.pop %v846
    %v848 = vsel %vm435, %v847, 0.0
    %849 = vadd.xlane.f32.xlu0 %v848
    %v850 = vpop.xlane.xlu0 %849
    %v851 = vrcp.pop %v850
    %v852 = vmul.f32 %v847, %v851
    %853 = vrot.lane.b32.xlu0 %v420, 56
    %v854 = vpop.permute.xlu0 %853
    %v857 = vsel %vm435, %v852, 0
    %859 = vmatprep.subr.mxu0 0.0
    %860 = vmatpush1.msra.mxu0 %v854
    %861 = vmatprep.subr.mxu0 0.0
    %862 = vmatpush1.msra.mxu0 0.0
    %863 = vmatprep.subr.mxu0 0.0
    %864 = vmatpush1.msra.mxu0 0.0
    %865 = vmatprep.subr.mxu0 0.0
    %866 = vmatpush1.msra.mxu0 0.0
    %867 = vmatprep.subr.mxu0 0.0
    %868 = vmatpush1.msra.mxu0 0.0
    %869 = vmatprep.subr.mxu0 0.0
    %870 = vmatpush1.msra.mxu0 0.0
    %871 = vmatprep.subr.mxu0 0.0
    %872 = vmatpush1.msra.mxu0 0.0
    %873 = vmatprep.subr.mxu0 0.0
    %874 = vmatpush1.msra.mxu0 0.0
    %875 = vmatprep.subr.mxu0 0.0
    %876 = vmatpush1.msra.mxu0 0.0
    %877 = vmatprep.subr.mxu0 0.0
    %878 = vmatpush1.msra.mxu0 0.0
    %879 = vmatprep.subr.mxu0 0.0
    %880 = vmatpush1.msra.mxu0 0.0
    %881 = vmatprep.subr.mxu0 0.0
    %882 = vmatpush1.msra.mxu0 0.0
    %883 = vmatprep.subr.mxu0 0.0
    %884 = vmatpush1.msra.mxu0 0.0
    %885 = vmatprep.subr.mxu0 0.0
    %886 = vmatpush1.msra.mxu0 0.0
    %887 = vmatprep.subr.mxu0 0.0
    %888 = vmatpush1.msra.mxu0 0.0
    %889 = vmatprep.subr.mxu0 0.0
    %890 = vmatpush1.msra.mxu0 0.0
    %891 = vmatprep.subr.mxu0 0.0
    %892 = vmatpush1.msra.mxu0 0.0
    %893 = vmatprep.subr.mxu0 0.0
    %894 = vmatpush1.msra.mxu0 0.0
    %895 = vmatprep.subr.mxu0 0.0
    %896 = vmatpush1.msra.mxu0 0.0
    %897 = vmatprep.subr.mxu0 0.0
    %898 = vmatpush1.msra.mxu0 0.0
    %899 = vmatprep.subr.mxu0 0.0
    %900 = vmatpush1.msra.mxu0 0.0
    %901 = vmatprep.subr.mxu0 0.0
    %902 = vmatpush1.msra.mxu0 0.0
    %903 = vmatprep.subr.mxu0 0.0
    %904 = vmatpush1.msra.mxu0 0.0
    %905 = vmatprep.subr.mxu0 0.0
    %906 = vmatpush1.msra.mxu0 0.0
    %907 = vmatprep.subr.mxu0 0.0
    %908 = vmatpush1.msra.mxu0 0.0
    %909 = vmatprep.subr.mxu0 0.0
    %910 = vmatpush1.msra.mxu0 0.0
    %911 = vmatprep.subr.mxu0 0.0
    %912 = vmatpush1.msra.mxu0 0.0
    %913 = vmatprep.subr.mxu0 0.0
    %914 = vmatpush1.msra.mxu0 0.0
    %915 = vmatprep.subr.mxu0 0.0
    %916 = vmatpush1.msra.mxu0 0.0
    %917 = vmatprep.subr.mxu0 0.0
    %918 = vmatpush1.msra.mxu0 0.0
    %919 = vmatprep.subr.mxu0 0.0
    %920 = vmatpush1.msra.mxu0 0.0
    %921 = vmatprep.subr.mxu0 0.0
    %922 = vmatpush1.msra.mxu0 0.0
    %923 = vmatprep.mubr.f32.mxu0 0.0
    %924 = vmatmul.mubr.f32.gmra.mrb[0].mxu0 %v857
    %v925 = vpop.f32.mrb[0].mxu0
    %v926 = vadd.f32 0.0, %v925
    %v927 = vpop.f32.mrb[0].mxu0
    %928 = vdwg.mxu0
    %929 = vrot.lane.b32.xlu0 %v425, 120
    %v930 = vpop.permute.xlu0 %929
    %931 = vrot.lane.b32.xlu0 %v425, 88
    %v932 = vpop.permute.xlu0 %931
    %v933 = vsel %vm435, %v930, 0
    %v935 = vsel %vm435, %v932, 0
    %937 = vmatprep.subr.mxu0 0.0
    %938 = vmatpush1.xpose.msra.mxu0 %v935
    %939 = vmatprep.subr.mxu0 0.0
    %940 = vmatpush1.xpose.msra.mxu0 0.0
    %941 = vmatprep.subr.mxu0 0.0
    %942 = vmatpush1.xpose.msra.mxu0 0.0
    %943 = vmatprep.subr.mxu0 0.0
    %944 = vmatpush1.xpose.msra.mxu0 0.0
    %945 = vmatprep.subr.mxu0 0.0
    %946 = vmatpush1.xpose.msra.mxu0 0.0
    %947 = vmatprep.subr.mxu0 0.0
    %948 = vmatpush1.xpose.msra.mxu0 0.0
    %949 = vmatprep.subr.mxu0 0.0
    %950 = vmatpush1.xpose.msra.mxu0 0.0
    %951 = vmatprep.subr.mxu0 0.0
    %952 = vmatpush1.xpose.msra.mxu0 0.0
    %953 = vmatprep.subr.mxu0 0.0
    %954 = vmatpush1.xpose.msra.mxu0 0.0
    %955 = vmatprep.subr.mxu0 0.0
    %956 = vmatpush1.xpose.msra.mxu0 0.0
    %957 = vmatprep.subr.mxu0 0.0
    %958 = vmatpush1.xpose.msra.mxu0 0.0
    %959 = vmatprep.subr.mxu0 0.0
    %960 = vmatpush1.xpose.msra.mxu0 0.0
    %961 = vmatprep.subr.mxu0 0.0
    %962 = vmatpush1.xpose.msra.mxu0 0.0
    %963 = vmatprep.subr.mxu0 0.0
    %964 = vmatpush1.xpose.msra.mxu0 0.0
    %965 = vmatprep.subr.mxu0 0.0
    %966 = vmatpush1.xpose.msra.mxu0 0.0
    %967 = vmatprep.subr.mxu0 0.0
    %968 = vmatpush1.xpose.msra.mxu0 0.0
    %969 = vmatprep.subr.mxu0 0.0
    %970 = vmatpush1.xpose.msra.mxu0 0.0
    %971 = vmatprep.subr.mxu0 0.0
    %972 = vmatpush1.xpose.msra.mxu0 0.0
    %973 = vmatprep.subr.mxu0 0.0
    %974 = vmatpush1.xpose.msra.mxu0 0.0
    %975 = vmatprep.subr.mxu0 0.0
    %976 = vmatpush1.xpose.msra.mxu0 0.0
    %977 = vmatprep.subr.mxu0 0.0
    %978 = vmatpush1.xpose.msra.mxu0 0.0
    %979 = vmatprep.subr.mxu0 0.0
    %980 = vmatpush1.xpose.msra.mxu0 0.0
    %981 = vmatprep.subr.mxu0 0.0
    %982 = vmatpush1.xpose.msra.mxu0 0.0
    %983 = vmatprep.subr.mxu0 0.0
    %984 = vmatpush1.xpose.msra.mxu0 0.0
    %985 = vmatprep.subr.mxu0 0.0
    %986 = vmatpush1.xpose.msra.mxu0 0.0
    %987 = vmatprep.subr.mxu0 0.0
    %988 = vmatpush1.xpose.msra.mxu0 0.0
    %989 = vmatprep.subr.mxu0 0.0
    %990 = vmatpush1.xpose.msra.mxu0 0.0
    %991 = vmatprep.subr.mxu0 0.0
    %992 = vmatpush1.xpose.msra.mxu0 0.0
    %993 = vmatprep.subr.mxu0 0.0
    %994 = vmatpush1.xpose.msra.mxu0 0.0
    %995 = vmatprep.subr.mxu0 0.0
    %996 = vmatpush1.xpose.msra.mxu0 0.0
    %997 = vmatprep.subr.mxu0 0.0
    %998 = vmatpush1.xpose.msra.mxu0 0.0
    %999 = vmatprep.subr.mxu0 0.0
    %1000 = vmatpush1.xpose.msra.mxu0 0.0
    %1001 = vmatprep.mubr.f32.mxu0 0.0
    %1002 = vmatmul.mubr.f32.gmra.mrb[0].mxu0 %v933
    %v1003 = vpop.f32.mrb[0].mxu0
    %v1004 = vadd.f32 0.0, %v1003
    %v1005 = vpop.f32.mrb[0].mxu0
    %1006 = vdwg.mxu0
    %v1007 = vmul.f32 %v1004, 0.35355338
    %v1008 = vsel %vm435, %v1007, -inf
    %1009 = vmax.xlane.f32.xlu0 %v1008
    %v1010 = vpop.xlane.xlu0 %1009
    %v1011 = vsub.f32 %v1007, %v1010
    %v1012 = vmul.f32 %v1011, 1.442695
    %v1013 = vpow.pop %v1012
    %v1014 = vsel %vm435, %v1013, 0.0
    %1015 = vadd.xlane.f32.xlu0 %v1014
    %v1016 = vpop.xlane.xlu0 %1015
    %v1017 = vrcp.pop %v1016
    %v1018 = vmul.f32 %v1013, %v1017
    %1019 = vrot.lane.b32.xlu0 %v425, 56
    %v1020 = vpop.permute.xlu0 %1019
    %v1023 = vsel %vm435, %v1018, 0
    %1025 = vmatprep.subr.mxu0 0.0
    %1026 = vmatpush1.msra.mxu0 %v1020
    %1027 = vmatprep.subr.mxu0 0.0
    %1028 = vmatpush1.msra.mxu0 0.0
    %1029 = vmatprep.subr.mxu0 0.0
    %1030 = vmatpush1.msra.mxu0 0.0
    %1031 = vmatprep.subr.mxu0 0.0
    %1032 = vmatpush1.msra.mxu0 0.0
    %1033 = vmatprep.subr.mxu0 0.0
    %1034 = vmatpush1.msra.mxu0 0.0
    %1035 = vmatprep.subr.mxu0 0.0
    %1036 = vmatpush1.msra.mxu0 0.0
    %1037 = vmatprep.subr.mxu0 0.0
    %1038 = vmatpush1.msra.mxu0 0.0
    %1039 = vmatprep.subr.mxu0 0.0
    %1040 = vmatpush1.msra.mxu0 0.0
    %1041 = vmatprep.subr.mxu0 0.0
    %1042 = vmatpush1.msra.mxu0 0.0
    %1043 = vmatprep.subr.mxu0 0.0
    %1044 = vmatpush1.msra.mxu0 0.0
    %1045 = vmatprep.subr.mxu0 0.0
    %1046 = vmatpush1.msra.mxu0 0.0
    %1047 = vmatprep.subr.mxu0 0.0
    %1048 = vmatpush1.msra.mxu0 0.0
    %1049 = vmatprep.subr.mxu0 0.0
    %1050 = vmatpush1.msra.mxu0 0.0
    %1051 = vmatprep.subr.mxu0 0.0
    %1052 = vmatpush1.msra.mxu0 0.0
    %1053 = vmatprep.subr.mxu0 0.0
    %1054 = vmatpush1.msra.mxu0 0.0
    %1055 = vmatprep.subr.mxu0 0.0
    %1056 = vmatpush1.msra.mxu0 0.0
    %1057 = vmatprep.subr.mxu0 0.0
    %1058 = vmatpush1.msra.mxu0 0.0
    %1059 = vmatprep.subr.mxu0 0.0
    %1060 = vmatpush1.msra.mxu0 0.0
    %1061 = vmatprep.subr.mxu0 0.0
    %1062 = vmatpush1.msra.mxu0 0.0
    %1063 = vmatprep.subr.mxu0 0.0
    %1064 = vmatpush1.msra.mxu0 0.0
    %1065 = vmatprep.subr.mxu0 0.0
    %1066 = vmatpush1.msra.mxu0 0.0
    %1067 = vmatprep.subr.mxu0 0.0
    %1068 = vmatpush1.msra.mxu0 0.0
    %1069 = vmatprep.subr.mxu0 0.0
    %1070 = vmatpush1.msra.mxu0 0.0
    %1071 = vmatprep.subr.mxu0 0.0
    %1072 = vmatpush1.msra.mxu0 0.0
    %1073 = vmatprep.subr.mxu0 0.0
    %1074 = vmatpush1.msra.mxu0 0.0
    %1075 = vmatprep.subr.mxu0 0.0
    %1076 = vmatpush1.msra.mxu0 0.0
    %1077 = vmatprep.subr.mxu0 0.0
    %1078 = vmatpush1.msra.mxu0 0.0
    %1079 = vmatprep.subr.mxu0 0.0
    %1080 = vmatpush1.msra.mxu0 0.0
    %1081 = vmatprep.subr.mxu0 0.0
    %1082 = vmatpush1.msra.mxu0 0.0
    %1083 = vmatprep.subr.mxu0 0.0
    %1084 = vmatpush1.msra.mxu0 0.0
    %1085 = vmatprep.subr.mxu0 0.0
    %1086 = vmatpush1.msra.mxu0 0.0
    %1087 = vmatprep.subr.mxu0 0.0
    %1088 = vmatpush1.msra.mxu0 0.0
    %1089 = vmatprep.mubr.f32.mxu0 0.0
    %1090 = vmatmul.mubr.f32.gmra.mrb[0].mxu0 %v1023
    %v1091 = vpop.f32.mrb[0].mxu0
    %v1092 = vadd.f32 0.0, %v1091
    %v1093 = vpop.f32.mrb[0].mxu0
    %1094 = vdwg.mxu0
    %v1096 = vsel %vm435, %v926, 0
    %v1099 = vsel %vm435, %v1092, 0
    %1101 = vmatprep.subr.mxu0 0.0
    %1102 = vmatpush1.msra.mxu0 %v429
    %1103 = vmatprep.subr.mxu0 0.0
    %1104 = vmatpush1.msra.mxu0 0.0
    %1105 = vmatprep.subr.mxu0 0.0
    %1106 = vmatpush1.msra.mxu0 0.0
    %1107 = vmatprep.subr.mxu0 0.0
    %1108 = vmatpush1.msra.mxu0 0.0
    %1109 = vmatprep.subr.mxu0 0.0
    %1110 = vmatpush1.msra.mxu0 0.0
    %1111 = vmatprep.subr.mxu0 0.0
    %1112 = vmatpush1.msra.mxu0 0.0
    %1113 = vmatprep.subr.mxu0 0.0
    %1114 = vmatpush1.msra.mxu0 0.0
    %1115 = vmatprep.subr.mxu0 0.0
    %1116 = vmatpush1.msra.mxu0 0.0
    %1117 = vmatprep.subr.mxu0 0.0
    %1118 = vmatpush1.msra.mxu0 0.0
    %1119 = vmatprep.subr.mxu0 0.0
    %1120 = vmatpush1.msra.mxu0 0.0
    %1121 = vmatprep.subr.mxu0 0.0
    %1122 = vmatpush1.msra.mxu0 0.0
    %1123 = vmatprep.subr.mxu0 0.0
    %1124 = vmatpush1.msra.mxu0 0.0
    %1125 = vmatprep.subr.mxu0 0.0
    %1126 = vmatpush1.msra.mxu0 0.0
    %1127 = vmatprep.subr.mxu0 0.0
    %1128 = vmatpush1.msra.mxu0 0.0
    %1129 = vmatprep.subr.mxu0 0.0
    %1130 = vmatpush1.msra.mxu0 0.0
    %1131 = vmatprep.subr.mxu0 0.0
    %1132 = vmatpush1.msra.mxu0 0.0
    %1133 = vmatprep.subr.mxu0 0.0
    %1134 = vmatpush1.msra.mxu0 0.0
    %1135 = vmatprep.subr.mxu0 0.0
    %1136 = vmatpush1.msra.mxu0 0.0
    %1137 = vmatprep.subr.mxu0 0.0
    %1138 = vmatpush1.msra.mxu0 0.0
    %1139 = vmatprep.subr.mxu0 0.0
    %1140 = vmatpush1.msra.mxu0 0.0
    %1141 = vmatprep.subr.mxu0 0.0
    %1142 = vmatpush1.msra.mxu0 0.0
    %1143 = vmatprep.subr.mxu0 0.0
    %1144 = vmatpush1.msra.mxu0 0.0
    %1145 = vmatprep.subr.mxu0 0.0
    %1146 = vmatpush1.msra.mxu0 0.0
    %1147 = vmatprep.subr.mxu0 0.0
    %1148 = vmatpush1.msra.mxu0 0.0
    %1149 = vmatprep.subr.mxu0 0.0
    %1150 = vmatpush1.msra.mxu0 0.0
    %1151 = vmatprep.subr.mxu0 0.0
    %1152 = vmatpush1.msra.mxu0 0.0
    %1153 = vmatprep.subr.mxu0 0.0
    %1154 = vmatpush1.msra.mxu0 0.0
    %1155 = vmatprep.subr.mxu0 0.0
    %1156 = vmatpush1.msra.mxu0 0.0
    %1157 = vmatprep.subr.mxu0 0.0
    %1158 = vmatpush1.msra.mxu0 0.0
    %1159 = vmatprep.subr.mxu0 0.0
    %1160 = vmatpush1.msra.mxu0 0.0
    %1161 = vmatprep.subr.mxu0 0.0
    %1162 = vmatpush1.msra.mxu0 0.0
    %1163 = vmatprep.subr.mxu0 0.0
    %1164 = vmatpush1.msra.mxu0 0.0
    %1165 = vmatprep.mubr.f32.mxu0 0.0
    %1166 = vmatmul.mubr.f32.gmra.mrb[0].mxu0 %v1096
    %v1167 = vpop.f32.mrb[0].mxu0
    %v1168 = vadd.f32 0.0, %v1167
    %v1169 = vpop.f32.mrb[0].mxu0
    %1170 = vmatprep.mubr.f32.mxu0 0.0
    %1171 = vmatmul.mubr.f32.gmra.mrb[0].mxu0 %v1099
    %v1172 = vpop.f32.mrb[0].mxu0
    %v1173 = vadd.f32 0.0, %v1172
    %v1174 = vpop.f32.mrb[0].mxu0
    %1175 = vdwg.mxu0
    %v1177 = vsel %vm435, %v595, 0
    %v1180 = vsel %vm435, %v760, 0
    %1182 = vmatprep.subr.mxu0 0.0
    %1183 = vmatpush1.msra.mxu0 %v428
    %1184 = vmatprep.subr.mxu0 0.0
    %1185 = vmatpush1.msra.mxu0 0.0
    %1186 = vmatprep.subr.mxu0 0.0
    %1187 = vmatpush1.msra.mxu0 0.0
    %1188 = vmatprep.subr.mxu0 0.0
    %1189 = vmatpush1.msra.mxu0 0.0
    %1190 = vmatprep.subr.mxu0 0.0
    %1191 = vmatpush1.msra.mxu0 0.0
    %1192 = vmatprep.subr.mxu0 0.0
    %1193 = vmatpush1.msra.mxu0 0.0
    %1194 = vmatprep.subr.mxu0 0.0
    %1195 = vmatpush1.msra.mxu0 0.0
    %1196 = vmatprep.subr.mxu0 0.0
    %1197 = vmatpush1.msra.mxu0 0.0
    %1198 = vmatprep.subr.mxu0 0.0
    %1199 = vmatpush1.msra.mxu0 0.0
    %1200 = vmatprep.subr.mxu0 0.0
    %1201 = vmatpush1.msra.mxu0 0.0
    %1202 = vmatprep.subr.mxu0 0.0
    %1203 = vmatpush1.msra.mxu0 0.0
    %1204 = vmatprep.subr.mxu0 0.0
    %1205 = vmatpush1.msra.mxu0 0.0
    %1206 = vmatprep.subr.mxu0 0.0
    %1207 = vmatpush1.msra.mxu0 0.0
    %1208 = vmatprep.subr.mxu0 0.0
    %1209 = vmatpush1.msra.mxu0 0.0
    %1210 = vmatprep.subr.mxu0 0.0
    %1211 = vmatpush1.msra.mxu0 0.0
    %1212 = vmatprep.subr.mxu0 0.0
    %1213 = vmatpush1.msra.mxu0 0.0
    %1214 = vmatprep.subr.mxu0 0.0
    %1215 = vmatpush1.msra.mxu0 0.0
    %1216 = vmatprep.subr.mxu0 0.0
    %1217 = vmatpush1.msra.mxu0 0.0
    %1218 = vmatprep.subr.mxu0 0.0
    %1219 = vmatpush1.msra.mxu0 0.0
    %1220 = vmatprep.subr.mxu0 0.0
    %1221 = vmatpush1.msra.mxu0 0.0
    %1222 = vmatprep.subr.mxu0 0.0
    %1223 = vmatpush1.msra.mxu0 0.0
    %1224 = vmatprep.subr.mxu0 0.0
    %1225 = vmatpush1.msra.mxu0 0.0
    %1226 = vmatprep.subr.mxu0 0.0
    %1227 = vmatpush1.msra.mxu0 0.0
    %1228 = vmatprep.subr.mxu0 0.0
    %1229 = vmatpush1.msra.mxu0 0.0
    %1230 = vmatprep.subr.mxu0 0.0
    %1231 = vmatpush1.msra.mxu0 0.0
    %1232 = vmatprep.subr.mxu0 0.0
    %1233 = vmatpush1.msra.mxu0 0.0
    %1234 = vmatprep.subr.mxu0 0.0
    %1235 = vmatpush1.msra.mxu0 0.0
    %1236 = vmatprep.subr.mxu0 0.0
    %1237 = vmatpush1.msra.mxu0 0.0
    %1238 = vmatprep.subr.mxu0 0.0
    %1239 = vmatpush1.msra.mxu0 0.0
    %1240 = vmatprep.subr.mxu0 0.0
    %1241 = vmatpush1.msra.mxu0 0.0
    %1242 = vmatprep.subr.mxu0 0.0
    %1243 = vmatpush1.msra.mxu0 0.0
    %1244 = vmatprep.subr.mxu0 0.0
    %1245 = vmatpush1.msra.mxu0 0.0
    %1246 = vmatprep.mubr.f32.mxu0 0.0
    %1247 = vmatmul.mubr.f32.gmra.mrb[0].mxu0 %v1177
    %v1248 = vpop.f32.mrb[0].mxu0
    %v1249 = vadd.f32 %v1168, %v1248
    %v1250 = vpop.f32.mrb[0].mxu0
    %1251 = vmatprep.mubr.f32.mxu0 0.0
    %1252 = vmatmul.mubr.f32.gmra.mrb[0].mxu0 %v1180
    %v1253 = vpop.f32.mrb[0].mxu0
    %v1254 = vadd.f32 %v1173, %v1253
    %v1255 = vpop.f32.mrb[0].mxu0
    %1256 = vdwg.mxu0
    %1257 = vrot.lane.b32.xlu0 %v420, 112
    %v1258 = vpop.permute.xlu0 %1257
    %1259 = vrot.lane.b32.xlu0 %v420, 80
    %v1260 = vpop.permute.xlu0 %1259
    %v1261 = vsel %vm435, %v1258, 0
    %v1263 = vsel %vm435, %v1260, 0
    %1265 = vmatprep.subr.mxu0 0.0
    %1266 = vmatpush1.xpose.msra.mxu0 %v1263
    %1267 = vmatprep.subr.mxu0 0.0
    %1268 = vmatpush1.xpose.msra.mxu0 0.0
    %1269 = vmatprep.subr.mxu0 0.0
    %1270 = vmatpush1.xpose.msra.mxu0 0.0
    %1271 = vmatprep.subr.mxu0 0.0
    %1272 = vmatpush1.xpose.msra.mxu0 0.0
    %1273 = vmatprep.subr.mxu0 0.0
    %1274 = vmatpush1.xpose.msra.mxu0 0.0
    %1275 = vmatprep.subr.mxu0 0.0
    %1276 = vmatpush1.xpose.msra.mxu0 0.0
    %1277 = vmatprep.subr.mxu0 0.0
    %1278 = vmatpush1.xpose.msra.mxu0 0.0
    %1279 = vmatprep.subr.mxu0 0.0
    %1280 = vmatpush1.xpose.msra.mxu0 0.0
    %1281 = vmatprep.subr.mxu0 0.0
    %1282 = vmatpush1.xpose.msra.mxu0 0.0
    %1283 = vmatprep.subr.mxu0 0.0
    %1284 = vmatpush1.xpose.msra.mxu0 0.0
    %1285 = vmatprep.subr.mxu0 0.0
    %1286 = vmatpush1.xpose.msra.mxu0 0.0
    %1287 = vmatprep.subr.mxu0 0.0
    %1288 = vmatpush1.xpose.msra.mxu0 0.0
    %1289 = vmatprep.subr.mxu0 0.0
    %1290 = vmatpush1.xpose.msra.mxu0 0.0
    %1291 = vmatprep.subr.mxu0 0.0
    %1292 = vmatpush1.xpose.msra.mxu0 0.0
    %1293 = vmatprep.subr.mxu0 0.0
    %1294 = vmatpush1.xpose.msra.mxu0 0.0
    %1295 = vmatprep.subr.mxu0 0.0
    %1296 = vmatpush1.xpose.msra.mxu0 0.0
    %1297 = vmatprep.subr.mxu0 0.0
    %1298 = vmatpush1.xpose.msra.mxu0 0.0
    %1299 = vmatprep.subr.mxu0 0.0
    %1300 = vmatpush1.xpose.msra.mxu0 0.0
    %1301 = vmatprep.subr.mxu0 0.0
    %1302 = vmatpush1.xpose.msra.mxu0 0.0
    %1303 = vmatprep.subr.mxu0 0.0
    %1304 = vmatpush1.xpose.msra.mxu0 0.0
    %1305 = vmatprep.subr.mxu0 0.0
    %1306 = vmatpush1.xpose.msra.mxu0 0.0
    %1307 = vmatprep.subr.mxu0 0.0
    %1308 = vmatpush1.xpose.msra.mxu0 0.0
    %1309 = vmatprep.subr.mxu0 0.0
    %1310 = vmatpush1.xpose.msra.mxu0 0.0
    %1311 = vmatprep.subr.mxu0 0.0
    %1312 = vmatpush1.xpose.msra.mxu0 0.0
    %1313 = vmatprep.subr.mxu0 0.0
    %1314 = vmatpush1.xpose.msra.mxu0 0.0
    %1315 = vmatprep.subr.mxu0 0.0
    %1316 = vmatpush1.xpose.msra.mxu0 0.0
    %1317 = vmatprep.subr.mxu0 0.0
    %1318 = vmatpush1.xpose.msra.mxu0 0.0
    %1319 = vmatprep.subr.mxu0 0.0
    %1320 = vmatpush1.xpose.msra.mxu0 0.0
    %1321 = vmatprep.subr.mxu0 0.0
    %1322 = vmatpush1.xpose.msra.mxu0 0.0
    %1323 = vmatprep.subr.mxu0 0.0
    %1324 = vmatpush1.xpose.msra.mxu0 0.0
    %1325 = vmatprep.subr.mxu0 0.0
    %1326 = vmatpush1.xpose.msra.mxu0 0.0
    %1327 = vmatprep.subr.mxu0 0.0
    %1328 = vmatpush1.xpose.msra.mxu0 0.0
    %1329 = vmatprep.mubr.f32.mxu0 0.0
    %1330 = vmatmul.mubr.f32.gmra.mrb[0].mxu0 %v1261
    %v1331 = vpop.f32.mrb[0].mxu0
    %v1332 = vadd.f32 0.0, %v1331
    %v1333 = vpop.f32.mrb[0].mxu0
    %1334 = vdwg.mxu0
    %v1335 = vmul.f32 %v1332, 0.35355338
    %v1336 = vsel %vm435, %v1335, -inf
    %1337 = vmax.xlane.f32.xlu0 %v1336
    %v1338 = vpop.xlane.xlu0 %1337
    %v1339 = vsub.f32 %v1335, %v1338
    %v1340 = vmul.f32 %v1339, 1.442695
    %v1341 = vpow.pop %v1340
    %v1342 = vsel %vm435, %v1341, 0.0
    %1343 = vadd.xlane.f32.xlu0 %v1342
    %v1344 = vpop.xlane.xlu0 %1343
    %v1345 = vrcp.pop %v1344
    %v1346 = vmul.f32 %v1341, %v1345
    %1347 = vrot.lane.b32.xlu0 %v420, 48
    %v1348 = vpop.permute.xlu0 %1347
    %v1351 = vsel %vm435, %v1346, 0
    %1353 = vmatprep.subr.mxu0 0.0
    %1354 = vmatpush1.msra.mxu0 %v1348
    %1355 = vmatprep.subr.mxu0 0.0
    %1356 = vmatpush1.msra.mxu0 0.0
    %1357 = vmatprep.subr.mxu0 0.0
    %1358 = vmatpush1.msra.mxu0 0.0
    %1359 = vmatprep.subr.mxu0 0.0
    %1360 = vmatpush1.msra.mxu0 0.0
    %1361 = vmatprep.subr.mxu0 0.0
    %1362 = vmatpush1.msra.mxu0 0.0
    %1363 = vmatprep.subr.mxu0 0.0
    %1364 = vmatpush1.msra.mxu0 0.0
    %1365 = vmatprep.subr.mxu0 0.0
    %1366 = vmatpush1.msra.mxu0 0.0
    %1367 = vmatprep.subr.mxu0 0.0
    %1368 = vmatpush1.msra.mxu0 0.0
    %1369 = vmatprep.subr.mxu0 0.0
    %1370 = vmatpush1.msra.mxu0 0.0
    %1371 = vmatprep.subr.mxu0 0.0
    %1372 = vmatpush1.msra.mxu0 0.0
    %1373 = vmatprep.subr.mxu0 0.0
    %1374 = vmatpush1.msra.mxu0 0.0
    %1375 = vmatprep.subr.mxu0 0.0
    %1376 = vmatpush1.msra.mxu0 0.0
    %1377 = vmatprep.subr.mxu0 0.0
    %1378 = vmatpush1.msra.mxu0 0.0
    %1379 = vmatprep.subr.mxu0 0.0
    %1380 = vmatpush1.msra.mxu0 0.0
    %1381 = vmatprep.subr.mxu0 0.0
    %1382 = vmatpush1.msra.mxu0 0.0
    %1383 = vmatprep.subr.mxu0 0.0
    %1384 = vmatpush1.msra.mxu0 0.0
    %1385 = vmatprep.subr.mxu0 0.0
    %1386 = vmatpush1.msra.mxu0 0.0
    %1387 = vmatprep.subr.mxu0 0.0
    %1388 = vmatpush1.msra.mxu0 0.0
    %1389 = vmatprep.subr.mxu0 0.0
    %1390 = vmatpush1.msra.mxu0 0.0
    %1391 = vmatprep.subr.mxu0 0.0
    %1392 = vmatpush1.msra.mxu0 0.0
    %1393 = vmatprep.subr.mxu0 0.0
    %1394 = vmatpush1.msra.mxu0 0.0
    %1395 = vmatprep.subr.mxu0 0.0
    %1396 = vmatpush1.msra.mxu0 0.0
    %1397 = vmatprep.subr.mxu0 0.0
    %1398 = vmatpush1.msra.mxu0 0.0
    %1399 = vmatprep.subr.mxu0 0.0
    %1400 = vmatpush1.msra.mxu0 0.0
    %1401 = vmatprep.subr.mxu0 0.0
    %1402 = vmatpush1.msra.mxu0 0.0
    %1403 = vmatprep.subr.mxu0 0.0
    %1404 = vmatpush1.msra.mxu0 0.0
    %1405 = vmatprep.subr.mxu0 0.0
    %1406 = vmatpush1.msra.mxu0 0.0
    %1407 = vmatprep.subr.mxu0 0.0
    %1408 = vmatpush1.msra.mxu0 0.0
    %1409 = vmatprep.subr.mxu0 0.0
    %1410 = vmatpush1.msra.mxu0 0.0
    %1411 = vmatprep.subr.mxu0 0.0
    %1412 = vmatpush1.msra.mxu0 0.0
    %1413 = vmatprep.subr.mxu0 0.0
    %1414 = vmatpush1.msra.mxu0 0.0
    %1415 = vmatprep.subr.mxu0 0.0
    %1416 = vmatpush1.msra.mxu0 0.0
    %1417 = vmatprep.mubr.f32.mxu0 0.0
    %1418 = vmatmul.mubr.f32.gmra.mrb[0].mxu0 %v1351
    %v1419 = vpop.f32.mrb[0].mxu0
    %v1420 = vadd.f32 0.0, %v1419
    %v1421 = vpop.f32.mrb[0].mxu0
    %1422 = vdwg.mxu0
    %1423 = vrot.lane.b32.xlu0 %v425, 112
    %v1424 = vpop.permute.xlu0 %1423
    %1425 = vrot.lane.b32.xlu0 %v425, 80
    %v1426 = vpop.permute.xlu0 %1425
    %v1427 = vsel %vm435, %v1424, 0
    %v1429 = vsel %vm435, %v1426, 0
    %1431 = vmatprep.subr.mxu0 0.0
    %1432 = vmatpush1.xpose.msra.mxu0 %v1429
    %1433 = vmatprep.subr.mxu0 0.0
    %1434 = vmatpush1.xpose.msra.mxu0 0.0
    %1435 = vmatprep.subr.mxu0 0.0
    %1436 = vmatpush1.xpose.msra.mxu0 0.0
    %1437 = vmatprep.subr.mxu0 0.0
    %1438 = vmatpush1.xpose.msra.mxu0 0.0
    %1439 = vmatprep.subr.mxu0 0.0
    %1440 = vmatpush1.xpose.msra.mxu0 0.0
    %1441 = vmatprep.subr.mxu0 0.0
    %1442 = vmatpush1.xpose.msra.mxu0 0.0
    %1443 = vmatprep.subr.mxu0 0.0
    %1444 = vmatpush1.xpose.msra.mxu0 0.0
    %1445 = vmatprep.subr.mxu0 0.0
    %1446 = vmatpush1.xpose.msra.mxu0 0.0
    %1447 = vmatprep.subr.mxu0 0.0
    %1448 = vmatpush1.xpose.msra.mxu0 0.0
    %1449 = vmatprep.subr.mxu0 0.0
    %1450 = vmatpush1.xpose.msra.mxu0 0.0
    %1451 = vmatprep.subr.mxu0 0.0
    %1452 = vmatpush1.xpose.msra.mxu0 0.0
    %1453 = vmatprep.subr.mxu0 0.0
    %1454 = vmatpush1.xpose.msra.mxu0 0.0
    %1455 = vmatprep.subr.mxu0 0.0
    %1456 = vmatpush1.xpose.msra.mxu0 0.0
    %1457 = vmatprep.subr.mxu0 0.0
    %1458 = vmatpush1.xpose.msra.mxu0 0.0
    %1459 = vmatprep.subr.mxu0 0.0
    %1460 = vmatpush1.xpose.msra.mxu0 0.0
    %1461 = vmatprep.subr.mxu0 0.0
    %1462 = vmatpush1.xpose.msra.mxu0 0.0
    %1463 = vmatprep.subr.mxu0 0.0
    %1464 = vmatpush1.xpose.msra.mxu0 0.0
    %1465 = vmatprep.subr.mxu0 0.0
    %1466 = vmatpush1.xpose.msra.mxu0 0.0
    %1467 = vmatprep.subr.mxu0 0.0
    %1468 = vmatpush1.xpose.msra.mxu0 0.0
    %1469 = vmatprep.subr.mxu0 0.0
    %1470 = vmatpush1.xpose.msra.mxu0 0.0
    %1471 = vmatprep.subr.mxu0 0.0
    %1472 = vmatpush1.xpose.msra.mxu0 0.0
    %1473 = vmatprep.subr.mxu0 0.0
    %1474 = vmatpush1.xpose.msra.mxu0 0.0
    %1475 = vmatprep.subr.mxu0 0.0
    %1476 = vmatpush1.xpose.msra.mxu0 0.0
    %1477 = vmatprep.subr.mxu0 0.0
    %1478 = vmatpush1.xpose.msra.mxu0 0.0
    %1479 = vmatprep.subr.mxu0 0.0
    %1480 = vmatpush1.xpose.msra.mxu0 0.0
    %1481 = vmatprep.subr.mxu0 0.0
    %1482 = vmatpush1.xpose.msra.mxu0 0.0
    %1483 = vmatprep.subr.mxu0 0.0
    %1484 = vmatpush1.xpose.msra.mxu0 0.0
    %1485 = vmatprep.subr.mxu0 0.0
    %1486 = vmatpush1.xpose.msra.mxu0 0.0
    %1487 = vmatprep.subr.mxu0 0.0
    %1488 = vmatpush1.xpose.msra.mxu0 0.0
    %1489 = vmatprep.subr.mxu0 0.0
    %1490 = vmatpush1.xpose.msra.mxu0 0.0
    %1491 = vmatprep.subr.mxu0 0.0
    %1492 = vmatpush1.xpose.msra.mxu0 0.0
    %1493 = vmatprep.subr.mxu0 0.0
    %1494 = vmatpush1.xpose.msra.mxu0 0.0
    %1495 = vmatprep.mubr.f32.mxu0 0.0
    %1496 = vmatmul.mubr.f32.gmra.mrb[0].mxu0 %v1427
    %v1497 = vpop.f32.mrb[0].mxu0
    %v1498 = vadd.f32 0.0, %v1497
    %v1499 = vpop.f32.mrb[0].mxu0
    %1500 = vdwg.mxu0
    %v1501 = vmul.f32 %v1498, 0.35355338
    %v1502 = vsel %vm435, %v1501, -inf
    %1503 = vmax.xlane.f32.xlu0 %v1502
    %v1504 = vpop.xlane.xlu0 %1503
    %v1505 = vsub.f32 %v1501, %v1504
    %v1506 = vmul.f32 %v1505, 1.442695
    %v1507 = vpow.pop %v1506
    %v1508 = vsel %vm435, %v1507, 0.0
    %1509 = vadd.xlane.f32.xlu0 %v1508
    %v1510 = vpop.xlane.xlu0 %1509
    %v1511 = vrcp.pop %v1510
    %v1512 = vmul.f32 %v1507, %v1511
    %1513 = vrot.lane.b32.xlu0 %v425, 48
    %v1514 = vpop.permute.xlu0 %1513
    %v1517 = vsel %vm435, %v1512, 0
    %1519 = vmatprep.subr.mxu0 0.0
    %1520 = vmatpush1.msra.mxu0 %v1514
    %1521 = vmatprep.subr.mxu0 0.0
    %1522 = vmatpush1.msra.mxu0 0.0
    %1523 = vmatprep.subr.mxu0 0.0
    %1524 = vmatpush1.msra.mxu0 0.0
    %1525 = vmatprep.subr.mxu0 0.0
    %1526 = vmatpush1.msra.mxu0 0.0
    %1527 = vmatprep.subr.mxu0 0.0
    %1528 = vmatpush1.msra.mxu0 0.0
    %1529 = vmatprep.subr.mxu0 0.0
    %1530 = vmatpush1.msra.mxu0 0.0
    %1531 = vmatprep.subr.mxu0 0.0
    %1532 = vmatpush1.msra.mxu0 0.0
    %1533 = vmatprep.subr.mxu0 0.0
    %1534 = vmatpush1.msra.mxu0 0.0
    %1535 = vmatprep.subr.mxu0 0.0
    %1536 = vmatpush1.msra.mxu0 0.0
    %1537 = vmatprep.subr.mxu0 0.0
    %1538 = vmatpush1.msra.mxu0 0.0
    %1539 = vmatprep.subr.mxu0 0.0
    %1540 = vmatpush1.msra.mxu0 0.0
    %1541 = vmatprep.subr.mxu0 0.0
    %1542 = vmatpush1.msra.mxu0 0.0
    %1543 = vmatprep.subr.mxu0 0.0
    %1544 = vmatpush1.msra.mxu0 0.0
    %1545 = vmatprep.subr.mxu0 0.0
    %1546 = vmatpush1.msra.mxu0 0.0
    %1547 = vmatprep.subr.mxu0 0.0
    %1548 = vmatpush1.msra.mxu0 0.0
    %1549 = vmatprep.subr.mxu0 0.0
    %1550 = vmatpush1.msra.mxu0 0.0
    %1551 = vmatprep.subr.mxu0 0.0
    %1552 = vmatpush1.msra.mxu0 0.0
    %1553 = vmatprep.subr.mxu0 0.0
    %1554 = vmatpush1.msra.mxu0 0.0
    %1555 = vmatprep.subr.mxu0 0.0
    %1556 = vmatpush1.msra.mxu0 0.0
    %1557 = vmatprep.subr.mxu0 0.0
    %1558 = vmatpush1.msra.mxu0 0.0
    %1559 = vmatprep.subr.mxu0 0.0
    %1560 = vmatpush1.msra.mxu0 0.0
    %1561 = vmatprep.subr.mxu0 0.0
    %1562 = vmatpush1.msra.mxu0 0.0
    %1563 = vmatprep.subr.mxu0 0.0
    %1564 = vmatpush1.msra.mxu0 0.0
    %1565 = vmatprep.subr.mxu0 0.0
    %1566 = vmatpush1.msra.mxu0 0.0
    %1567 = vmatprep.subr.mxu0 0.0
    %1568 = vmatpush1.msra.mxu0 0.0
    %1569 = vmatprep.subr.mxu0 0.0
    %1570 = vmatpush1.msra.mxu0 0.0
    %1571 = vmatprep.subr.mxu0 0.0
    %1572 = vmatpush1.msra.mxu0 0.0
    %1573 = vmatprep.subr.mxu0 0.0
    %1574 = vmatpush1.msra.mxu0 0.0
    %1575 = vmatprep.subr.mxu0 0.0
    %1576 = vmatpush1.msra.mxu0 0.0
    %1577 = vmatprep.subr.mxu0 0.0
    %1578 = vmatpush1.msra.mxu0 0.0
    %1579 = vmatprep.subr.mxu0 0.0
    %1580 = vmatpush1.msra.mxu0 0.0
    %1581 = vmatprep.subr.mxu0 0.0
    %1582 = vmatpush1.msra.mxu0 0.0
    %1583 = vmatprep.mubr.f32.mxu0 0.0
    %1584 = vmatmul.mubr.f32.gmra.mrb[0].mxu0 %v1517
    %v1585 = vpop.f32.mrb[0].mxu0
    %v1586 = vadd.f32 0.0, %v1585
    %v1587 = vpop.f32.mrb[0].mxu0
    %1588 = vdwg.mxu0
    %v1590 = vsel %vm435, %v1420, 0
    %v1593 = vsel %vm435, %v1586, 0
    %1595 = vmatprep.subr.mxu0 0.0
    %1596 = vmatpush1.msra.mxu0 %v430
    %1597 = vmatprep.subr.mxu0 0.0
    %1598 = vmatpush1.msra.mxu0 0.0
    %1599 = vmatprep.subr.mxu0 0.0
    %1600 = vmatpush1.msra.mxu0 0.0
    %1601 = vmatprep.subr.mxu0 0.0
    %1602 = vmatpush1.msra.mxu0 0.0
    %1603 = vmatprep.subr.mxu0 0.0
    %1604 = vmatpush1.msra.mxu0 0.0
    %1605 = vmatprep.subr.mxu0 0.0
    %1606 = vmatpush1.msra.mxu0 0.0
    %1607 = vmatprep.subr.mxu0 0.0
    %1608 = vmatpush1.msra.mxu0 0.0
    %1609 = vmatprep.subr.mxu0 0.0
    %1610 = vmatpush1.msra.mxu0 0.0
    %1611 = vmatprep.subr.mxu0 0.0
    %1612 = vmatpush1.msra.mxu0 0.0
    %1613 = vmatprep.subr.mxu0 0.0
    %1614 = vmatpush1.msra.mxu0 0.0
    %1615 = vmatprep.subr.mxu0 0.0
    %1616 = vmatpush1.msra.mxu0 0.0
    %1617 = vmatprep.subr.mxu0 0.0
    %1618 = vmatpush1.msra.mxu0 0.0
    %1619 = vmatprep.subr.mxu0 0.0
    %1620 = vmatpush1.msra.mxu0 0.0
    %1621 = vmatprep.subr.mxu0 0.0
    %1622 = vmatpush1.msra.mxu0 0.0
    %1623 = vmatprep.subr.mxu0 0.0
    %1624 = vmatpush1.msra.mxu0 0.0
    %1625 = vmatprep.subr.mxu0 0.0
    %1626 = vmatpush1.msra.mxu0 0.0
    %1627 = vmatprep.subr.mxu0 0.0
    %1628 = vmatpush1.msra.mxu0 0.0
    %1629 = vmatprep.subr.mxu0 0.0
    %1630 = vmatpush1.msra.mxu0 0.0
    %1631 = vmatprep.subr.mxu0 0.0
    %1632 = vmatpush1.msra.mxu0 0.0
    %1633 = vmatprep.subr.mxu0 0.0
    %1634 = vmatpush1.msra.mxu0 0.0
    %1635 = vmatprep.subr.mxu0 0.0
    %1636 = vmatpush1.msra.mxu0 0.0
    %1637 = vmatprep.subr.mxu0 0.0
    %1638 = vmatpush1.msra.mxu0 0.0
    %1639 = vmatprep.subr.mxu0 0.0
    %1640 = vmatpush1.msra.mxu0 0.0
    %1641 = vmatprep.subr.mxu0 0.0
    %1642 = vmatpush1.msra.mxu0 0.0
    %1643 = vmatprep.subr.mxu0 0.0
    %1644 = vmatpush1.msra.mxu0 0.0
    %1645 = vmatprep.subr.mxu0 0.0
    %1646 = vmatpush1.msra.mxu0 0.0
    %1647 = vmatprep.subr.mxu0 0.0
    %1648 = vmatpush1.msra.mxu0 0.0
    %1649 = vmatprep.subr.mxu0 0.0
    %1650 = vmatpush1.msra.mxu0 0.0
    %1651 = vmatprep.subr.mxu0 0.0
    %1652 = vmatpush1.msra.mxu0 0.0
    %1653 = vmatprep.subr.mxu0 0.0
    %1654 = vmatpush1.msra.mxu0 0.0
    %1655 = vmatprep.subr.mxu0 0.0
    %1656 = vmatpush1.msra.mxu0 0.0
    %1657 = vmatprep.subr.mxu0 0.0
    %1658 = vmatpush1.msra.mxu0 0.0
    %1659 = vmatprep.mubr.f32.mxu0 0.0
    %1660 = vmatmul.mubr.f32.gmra.mrb[0].mxu0 %v1590
    %v1661 = vpop.f32.mrb[0].mxu0
    %v1662 = vadd.f32 0.0, %v1661
    %v1663 = vpop.f32.mrb[0].mxu0
    %1664 = vmatprep.mubr.f32.mxu0 0.0
    %1665 = vmatmul.mubr.f32.gmra.mrb[0].mxu0 %v1593
    %v1666 = vpop.f32.mrb[0].mxu0
    %v1667 = vadd.f32 0.0, %v1666
    %v1668 = vpop.f32.mrb[0].mxu0
    %1669 = vdwg.mxu0
    %v1670 = vadd.f32 %v1249, %v1662
    %v1671 = vadd.f32 %v1254, %v1667
    %1672 = vrot.lane.b32.xlu0 %v420, 104
    %v1673 = vpop.permute.xlu0 %1672
    %1674 = vrot.lane.b32.xlu0 %v420, 72
    %v1675 = vpop.permute.xlu0 %1674
    %v1676 = vsel %vm435, %v1673, 0
    %v1678 = vsel %vm435, %v1675, 0
    %1680 = vmatprep.subr.mxu0 0.0
    %1681 = vmatpush1.xpose.msra.mxu0 %v1678
    %1682 = vmatprep.subr.mxu0 0.0
    %1683 = vmatpush1.xpose.msra.mxu0 0.0
    %1684 = vmatprep.subr.mxu0 0.0
    %1685 = vmatpush1.xpose.msra.mxu0 0.0
    %1686 = vmatprep.subr.mxu0 0.0
    %1687 = vmatpush1.xpose.msra.mxu0 0.0
    %1688 = vmatprep.subr.mxu0 0.0
    %1689 = vmatpush1.xpose.msra.mxu0 0.0
    %1690 = vmatprep.subr.mxu0 0.0
    %1691 = vmatpush1.xpose.msra.mxu0 0.0
    %1692 = vmatprep.subr.mxu0 0.0
    %1693 = vmatpush1.xpose.msra.mxu0 0.0
    %1694 = vmatprep.subr.mxu0 0.0
    %1695 = vmatpush1.xpose.msra.mxu0 0.0
    %1696 = vmatprep.subr.mxu0 0.0
    %1697 = vmatpush1.xpose.msra.mxu0 0.0
    %1698 = vmatprep.subr.mxu0 0.0
    %1699 = vmatpush1.xpose.msra.mxu0 0.0
    %1700 = vmatprep.subr.mxu0 0.0
    %1701 = vmatpush1.xpose.msra.mxu0 0.0
    %1702 = vmatprep.subr.mxu0 0.0
    %1703 = vmatpush1.xpose.msra.mxu0 0.0
    %1704 = vmatprep.subr.mxu0 0.0
    %1705 = vmatpush1.xpose.msra.mxu0 0.0
    %1706 = vmatprep.subr.mxu0 0.0
    %1707 = vmatpush1.xpose.msra.mxu0 0.0
    %1708 = vmatprep.subr.mxu0 0.0
    %1709 = vmatpush1.xpose.msra.mxu0 0.0
    %1710 = vmatprep.subr.mxu0 0.0
    %1711 = vmatpush1.xpose.msra.mxu0 0.0
    %1712 = vmatprep.subr.mxu0 0.0
    %1713 = vmatpush1.xpose.msra.mxu0 0.0
    %1714 = vmatprep.subr.mxu0 0.0
    %1715 = vmatpush1.xpose.msra.mxu0 0.0
    %1716 = vmatprep.subr.mxu0 0.0
    %1717 = vmatpush1.xpose.msra.mxu0 0.0
    %1718 = vmatprep.subr.mxu0 0.0
    %1719 = vmatpush1.xpose.msra.mxu0 0.0
    %1720 = vmatprep.subr.mxu0 0.0
    %1721 = vmatpush1.xpose.msra.mxu0 0.0
    %1722 = vmatprep.subr.mxu0 0.0
    %1723 = vmatpush1.xpose.msra.mxu0 0.0
    %1724 = vmatprep.subr.mxu0 0.0
    %1725 = vmatpush1.xpose.msra.mxu0 0.0
    %1726 = vmatprep.subr.mxu0 0.0
    %1727 = vmatpush1.xpose.msra.mxu0 0.0
    %1728 = vmatprep.subr.mxu0 0.0
    %1729 = vmatpush1.xpose.msra.mxu0 0.0
    %1730 = vmatprep.subr.mxu0 0.0
    %1731 = vmatpush1.xpose.msra.mxu0 0.0
    %1732 = vmatprep.subr.mxu0 0.0
    %1733 = vmatpush1.xpose.msra.mxu0 0.0
    %1734 = vmatprep.subr.mxu0 0.0
    %1735 = vmatpush1.xpose.msra.mxu0 0.0
    %1736 = vmatprep.subr.mxu0 0.0
    %1737 = vmatpush1.xpose.msra.mxu0 0.0
    %1738 = vmatprep.subr.mxu0 0.0
    %1739 = vmatpush1.xpose.msra.mxu0 0.0
    %1740 = vmatprep.subr.mxu0 0.0
    %1741 = vmatpush1.xpose.msra.mxu0 0.0
    %1742 = vmatprep.subr.mxu0 0.0
    %1743 = vmatpush1.xpose.msra.mxu0 0.0
    %1744 = vmatprep.mubr.f32.mxu0 0.0
    %1745 = vmatmul.mubr.f32.gmra.mrb[0].mxu0 %v1676
    %v1746 = vpop.f32.mrb[0].mxu0
    %v1747 = vadd.f32 0.0, %v1746
    %v1748 = vpop.f32.mrb[0].mxu0
    %1749 = vdwg.mxu0
    %v1750 = vmul.f32 %v1747, 0.35355338
    %v1751 = vsel %vm435, %v1750, -inf
    %1752 = vmax.xlane.f32.xlu0 %v1751
    %v1753 = vpop.xlane.xlu0 %1752
    %v1754 = vsub.f32 %v1750, %v1753
    %v1755 = vmul.f32 %v1754, 1.442695
    %v1756 = vpow.pop %v1755
    %v1757 = vsel %vm435, %v1756, 0.0
    %1758 = vadd.xlane.f32.xlu0 %v1757
    %v1759 = vpop.xlane.xlu0 %1758
    %v1760 = vrcp.pop %v1759
    %v1761 = vmul.f32 %v1756, %v1760
    %1762 = vrot.lane.b32.xlu0 %v420, 40
    %v1763 = vpop.permute.xlu0 %1762
    %v1766 = vsel %vm435, %v1761, 0
    %1768 = vmatprep.subr.mxu0 0.0
    %1769 = vmatpush1.msra.mxu0 %v1763
    %1770 = vmatprep.subr.mxu0 0.0
    %1771 = vmatpush1.msra.mxu0 0.0
    %1772 = vmatprep.subr.mxu0 0.0
    %1773 = vmatpush1.msra.mxu0 0.0
    %1774 = vmatprep.subr.mxu0 0.0
    %1775 = vmatpush1.msra.mxu0 0.0
    %1776 = vmatprep.subr.mxu0 0.0
    %1777 = vmatpush1.msra.mxu0 0.0
    %1778 = vmatprep.subr.mxu0 0.0
    %1779 = vmatpush1.msra.mxu0 0.0
    %1780 = vmatprep.subr.mxu0 0.0
    %1781 = vmatpush1.msra.mxu0 0.0
    %1782 = vmatprep.subr.mxu0 0.0
    %1783 = vmatpush1.msra.mxu0 0.0
    %1784 = vmatprep.subr.mxu0 0.0
    %1785 = vmatpush1.msra.mxu0 0.0
    %1786 = vmatprep.subr.mxu0 0.0
    %1787 = vmatpush1.msra.mxu0 0.0
    %1788 = vmatprep.subr.mxu0 0.0
    %1789 = vmatpush1.msra.mxu0 0.0
    %1790 = vmatprep.subr.mxu0 0.0
    %1791 = vmatpush1.msra.mxu0 0.0
    %1792 = vmatprep.subr.mxu0 0.0
    %1793 = vmatpush1.msra.mxu0 0.0
    %1794 = vmatprep.subr.mxu0 0.0
    %1795 = vmatpush1.msra.mxu0 0.0
    %1796 = vmatprep.subr.mxu0 0.0
    %1797 = vmatpush1.msra.mxu0 0.0
    %1798 = vmatprep.subr.mxu0 0.0
    %1799 = vmatpush1.msra.mxu0 0.0
    %1800 = vmatprep.subr.mxu0 0.0
    %1801 = vmatpush1.msra.mxu0 0.0
    %1802 = vmatprep.subr.mxu0 0.0
    %1803 = vmatpush1.msra.mxu0 0.0
    %1804 = vmatprep.subr.mxu0 0.0
    %1805 = vmatpush1.msra.mxu0 0.0
    %1806 = vmatprep.subr.mxu0 0.0
    %1807 = vmatpush1.msra.mxu0 0.0
    %1808 = vmatprep.subr.mxu0 0.0
    %1809 = vmatpush1.msra.mxu0 0.0
    %1810 = vmatprep.subr.mxu0 0.0
    %1811 = vmatpush1.msra.mxu0 0.0
    %1812 = vmatprep.subr.mxu0 0.0
    %1813 = vmatpush1.msra.mxu0 0.0
    %1814 = vmatprep.subr.mxu0 0.0
    %1815 = vmatpush1.msra.mxu0 0.0
    %1816 = vmatprep.subr.mxu0 0.0
    %1817 = vmatpush1.msra.mxu0 0.0
    %1818 = vmatprep.subr.mxu0 0.0
    %1819 = vmatpush1.msra.mxu0 0.0
    %1820 = vmatprep.subr.mxu0 0.0
    %1821 = vmatpush1.msra.mxu0 0.0
    %1822 = vmatprep.subr.mxu0 0.0
    %1823 = vmatpush1.msra.mxu0 0.0
    %1824 = vmatprep.subr.mxu0 0.0
    %1825 = vmatpush1.msra.mxu0 0.0
    %1826 = vmatprep.subr.mxu0 0.0
    %1827 = vmatpush1.msra.mxu0 0.0
    %1828 = vmatprep.subr.mxu0 0.0
    %1829 = vmatpush1.msra.mxu0 0.0
    %1830 = vmatprep.subr.mxu0 0.0
    %1831 = vmatpush1.msra.mxu0 0.0
    %1832 = vmatprep.mubr.f32.mxu0 0.0
    %1833 = vmatmul.mubr.f32.gmra.mrb[0].mxu0 %v1766
    %v1834 = vpop.f32.mrb[0].mxu0
    %v1835 = vadd.f32 0.0, %v1834
    %v1836 = vpop.f32.mrb[0].mxu0
    %1837 = vdwg.mxu0
    %1838 = vrot.lane.b32.xlu0 %v425, 104
    %v1839 = vpop.permute.xlu0 %1838
    %1840 = vrot.lane.b32.xlu0 %v425, 72
    %v1841 = vpop.permute.xlu0 %1840
    %v1842 = vsel %vm435, %v1839, 0
    %v1844 = vsel %vm435, %v1841, 0
    %1846 = vmatprep.subr.mxu0 0.0
    %1847 = vmatpush1.xpose.msra.mxu0 %v1844
    %1848 = vmatprep.subr.mxu0 0.0
    %1849 = vmatpush1.xpose.msra.mxu0 0.0
    %1850 = vmatprep.subr.mxu0 0.0
    %1851 = vmatpush1.xpose.msra.mxu0 0.0
    %1852 = vmatprep.subr.mxu0 0.0
    %1853 = vmatpush1.xpose.msra.mxu0 0.0
    %1854 = vmatprep.subr.mxu0 0.0
    %1855 = vmatpush1.xpose.msra.mxu0 0.0
    %1856 = vmatprep.subr.mxu0 0.0
    %1857 = vmatpush1.xpose.msra.mxu0 0.0
    %1858 = vmatprep.subr.mxu0 0.0
    %1859 = vmatpush1.xpose.msra.mxu0 0.0
    %1860 = vmatprep.subr.mxu0 0.0
    %1861 = vmatpush1.xpose.msra.mxu0 0.0
    %1862 = vmatprep.subr.mxu0 0.0
    %1863 = vmatpush1.xpose.msra.mxu0 0.0
    %1864 = vmatprep.subr.mxu0 0.0
    %1865 = vmatpush1.xpose.msra.mxu0 0.0
    %1866 = vmatprep.subr.mxu0 0.0
    %1867 = vmatpush1.xpose.msra.mxu0 0.0
    %1868 = vmatprep.subr.mxu0 0.0
    %1869 = vmatpush1.xpose.msra.mxu0 0.0
    %1870 = vmatprep.subr.mxu0 0.0
    %1871 = vmatpush1.xpose.msra.mxu0 0.0
    %1872 = vmatprep.subr.mxu0 0.0
    %1873 = vmatpush1.xpose.msra.mxu0 0.0
    %1874 = vmatprep.subr.mxu0 0.0
    %1875 = vmatpush1.xpose.msra.mxu0 0.0
    %1876 = vmatprep.subr.mxu0 0.0
    %1877 = vmatpush1.xpose.msra.mxu0 0.0
    %1878 = vmatprep.subr.mxu0 0.0
    %1879 = vmatpush1.xpose.msra.mxu0 0.0
    %1880 = vmatprep.subr.mxu0 0.0
    %1881 = vmatpush1.xpose.msra.mxu0 0.0
    %1882 = vmatprep.subr.mxu0 0.0
    %1883 = vmatpush1.xpose.msra.mxu0 0.0
    %1884 = vmatprep.subr.mxu0 0.0
    %1885 = vmatpush1.xpose.msra.mxu0 0.0
    %1886 = vmatprep.subr.mxu0 0.0
    %1887 = vmatpush1.xpose.msra.mxu0 0.0
    %1888 = vmatprep.subr.mxu0 0.0
    %1889 = vmatpush1.xpose.msra.mxu0 0.0
    %1890 = vmatprep.subr.mxu0 0.0
    %1891 = vmatpush1.xpose.msra.mxu0 0.0
    %1892 = vmatprep.subr.mxu0 0.0
    %1893 = vmatpush1.xpose.msra.mxu0 0.0
    %1894 = vmatprep.subr.mxu0 0.0
    %1895 = vmatpush1.xpose.msra.mxu0 0.0
    %1896 = vmatprep.subr.mxu0 0.0
    %1897 = vmatpush1.xpose.msra.mxu0 0.0
    %1898 = vmatprep.subr.mxu0 0.0
    %1899 = vmatpush1.xpose.msra.mxu0 0.0
    %1900 = vmatprep.subr.mxu0 0.0
    %1901 = vmatpush1.xpose.msra.mxu0 0.0
    %1902 = vmatprep.subr.mxu0 0.0
    %1903 = vmatpush1.xpose.msra.mxu0 0.0
    %1904 = vmatprep.subr.mxu0 0.0
    %1905 = vmatpush1.xpose.msra.mxu0 0.0
    %1906 = vmatprep.subr.mxu0 0.0
    %1907 = vmatpush1.xpose.msra.mxu0 0.0
    %1908 = vmatprep.subr.mxu0 0.0
    %1909 = vmatpush1.xpose.msra.mxu0 0.0
    %1910 = vmatprep.mubr.f32.mxu0 0.0
    %1911 = vmatmul.mubr.f32.gmra.mrb[0].mxu0 %v1842
    %v1912 = vpop.f32.mrb[0].mxu0
    %v1913 = vadd.f32 0.0, %v1912
    %v1914 = vpop.f32.mrb[0].mxu0
    %1915 = vdwg.mxu0
    %v1916 = vmul.f32 %v1913, 0.35355338
    %v1917 = vsel %vm435, %v1916, -inf
    %1918 = vmax.xlane.f32.xlu0 %v1917
    %v1919 = vpop.xlane.xlu0 %1918
    %v1920 = vsub.f32 %v1916, %v1919
    %v1921 = vmul.f32 %v1920, 1.442695
    %v1922 = vpow.pop %v1921
    %v1923 = vsel %vm435, %v1922, 0.0
    %1924 = vadd.xlane.f32.xlu0 %v1923
    %v1925 = vpop.xlane.xlu0 %1924
    %v1926 = vrcp.pop %v1925
    %v1927 = vmul.f32 %v1922, %v1926
    %1928 = vrot.lane.b32.xlu0 %v425, 40
    %v1929 = vpop.permute.xlu0 %1928
    %v1932 = vsel %vm435, %v1927, 0
    %1934 = vmatprep.subr.mxu0 0.0
    %1935 = vmatpush1.msra.mxu0 %v1929
    %1936 = vmatprep.subr.mxu0 0.0
    %1937 = vmatpush1.msra.mxu0 0.0
    %1938 = vmatprep.subr.mxu0 0.0
    %1939 = vmatpush1.msra.mxu0 0.0
    %1940 = vmatprep.subr.mxu0 0.0
    %1941 = vmatpush1.msra.mxu0 0.0
    %1942 = vmatprep.subr.mxu0 0.0
    %1943 = vmatpush1.msra.mxu0 0.0
    %1944 = vmatprep.subr.mxu0 0.0
    %1945 = vmatpush1.msra.mxu0 0.0
    %1946 = vmatprep.subr.mxu0 0.0
    %1947 = vmatpush1.msra.mxu0 0.0
    %1948 = vmatprep.subr.mxu0 0.0
    %1949 = vmatpush1.msra.mxu0 0.0
    %1950 = vmatprep.subr.mxu0 0.0
    %1951 = vmatpush1.msra.mxu0 0.0
    %1952 = vmatprep.subr.mxu0 0.0
    %1953 = vmatpush1.msra.mxu0 0.0
    %1954 = vmatprep.subr.mxu0 0.0
    %1955 = vmatpush1.msra.mxu0 0.0
    %1956 = vmatprep.subr.mxu0 0.0
    %1957 = vmatpush1.msra.mxu0 0.0
    %1958 = vmatprep.subr.mxu0 0.0
    %1959 = vmatpush1.msra.mxu0 0.0
    %1960 = vmatprep.subr.mxu0 0.0
    %1961 = vmatpush1.msra.mxu0 0.0
    %1962 = vmatprep.subr.mxu0 0.0
    %1963 = vmatpush1.msra.mxu0 0.0
    %1964 = vmatprep.subr.mxu0 0.0
    %1965 = vmatpush1.msra.mxu0 0.0
    %1966 = vmatprep.subr.mxu0 0.0
    %1967 = vmatpush1.msra.mxu0 0.0
    %1968 = vmatprep.subr.mxu0 0.0
    %1969 = vmatpush1.msra.mxu0 0.0
    %1970 = vmatprep.subr.mxu0 0.0
    %1971 = vmatpush1.msra.mxu0 0.0
    %1972 = vmatprep.subr.mxu0 0.0
    %1973 = vmatpush1.msra.mxu0 0.0
    %1974 = vmatprep.subr.mxu0 0.0
    %1975 = vmatpush1.msra.mxu0 0.0
    %1976 = vmatprep.subr.mxu0 0.0
    %1977 = vmatpush1.msra.mxu0 0.0
    %1978 = vmatprep.subr.mxu0 0.0
    %1979 = vmatpush1.msra.mxu0 0.0
    %1980 = vmatprep.subr.mxu0 0.0
    %1981 = vmatpush1.msra.mxu0 0.0
    %1982 = vmatprep.subr.mxu0 0.0
    %1983 = vmatpush1.msra.mxu0 0.0
    %1984 = vmatprep.subr.mxu0 0.0
    %1985 = vmatpush1.msra.mxu0 0.0
    %1986 = vmatprep.subr.mxu0 0.0
    %1987 = vmatpush1.msra.mxu0 0.0
    %1988 = vmatprep.subr.mxu0 0.0
    %1989 = vmatpush1.msra.mxu0 0.0
    %1990 = vmatprep.subr.mxu0 0.0
    %1991 = vmatpush1.msra.mxu0 0.0
    %1992 = vmatprep.subr.mxu0 0.0
    %1993 = vmatpush1.msra.mxu0 0.0
    %1994 = vmatprep.subr.mxu0 0.0
    %1995 = vmatpush1.msra.mxu0 0.0
    %1996 = vmatprep.subr.mxu0 0.0
    %1997 = vmatpush1.msra.mxu0 0.0
    %1998 = vmatprep.mubr.f32.mxu0 0.0
    %1999 = vmatmul.mubr.f32.gmra.mrb[0].mxu0 %v1932
    %v2000 = vpop.f32.mrb[0].mxu0
    %v2001 = vadd.f32 0.0, %v2000
    %v2002 = vpop.f32.mrb[0].mxu0
    %2003 = vdwg.mxu0
    %v2005 = vsel %vm435, %v1835, 0
    %v2008 = vsel %vm435, %v2001, 0
    %2010 = vmatprep.subr.mxu0 0.0
    %2011 = vmatpush1.msra.mxu0 %v431
    %2012 = vmatprep.subr.mxu0 0.0
    %2013 = vmatpush1.msra.mxu0 0.0
    %2014 = vmatprep.subr.mxu0 0.0
    %2015 = vmatpush1.msra.mxu0 0.0
    %2016 = vmatprep.subr.mxu0 0.0
    %2017 = vmatpush1.msra.mxu0 0.0
    %2018 = vmatprep.subr.mxu0 0.0
    %2019 = vmatpush1.msra.mxu0 0.0
    %2020 = vmatprep.subr.mxu0 0.0
    %2021 = vmatpush1.msra.mxu0 0.0
    %2022 = vmatprep.subr.mxu0 0.0
    %2023 = vmatpush1.msra.mxu0 0.0
    %2024 = vmatprep.subr.mxu0 0.0
    %2025 = vmatpush1.msra.mxu0 0.0
    %2026 = vmatprep.subr.mxu0 0.0
    %2027 = vmatpush1.msra.mxu0 0.0
    %2028 = vmatprep.subr.mxu0 0.0
    %2029 = vmatpush1.msra.mxu0 0.0
    %2030 = vmatprep.subr.mxu0 0.0
    %2031 = vmatpush1.msra.mxu0 0.0
    %2032 = vmatprep.subr.mxu0 0.0
    %2033 = vmatpush1.msra.mxu0 0.0
    %2034 = vmatprep.subr.mxu0 0.0
    %2035 = vmatpush1.msra.mxu0 0.0
    %2036 = vmatprep.subr.mxu0 0.0
    %2037 = vmatpush1.msra.mxu0 0.0
    %2038 = vmatprep.subr.mxu0 0.0
    %2039 = vmatpush1.msra.mxu0 0.0
    %2040 = vmatprep.subr.mxu0 0.0
    %2041 = vmatpush1.msra.mxu0 0.0
    %2042 = vmatprep.subr.mxu0 0.0
    %2043 = vmatpush1.msra.mxu0 0.0
    %2044 = vmatprep.subr.mxu0 0.0
    %2045 = vmatpush1.msra.mxu0 0.0
    %2046 = vmatprep.subr.mxu0 0.0
    %2047 = vmatpush1.msra.mxu0 0.0
    %2048 = vmatprep.subr.mxu0 0.0
    %2049 = vmatpush1.msra.mxu0 0.0
    %2050 = vmatprep.subr.mxu0 0.0
    %2051 = vmatpush1.msra.mxu0 0.0
    %2052 = vmatprep.subr.mxu0 0.0
    %2053 = vmatpush1.msra.mxu0 0.0
    %2054 = vmatprep.subr.mxu0 0.0
    %2055 = vmatpush1.msra.mxu0 0.0
    %2056 = vmatprep.subr.mxu0 0.0
    %2057 = vmatpush1.msra.mxu0 0.0
    %2058 = vmatprep.subr.mxu0 0.0
    %2059 = vmatpush1.msra.mxu0 0.0
    %2060 = vmatprep.subr.mxu0 0.0
    %2061 = vmatpush1.msra.mxu0 0.0
    %2062 = vmatprep.subr.mxu0 0.0
    %2063 = vmatpush1.msra.mxu0 0.0
    %2064 = vmatprep.subr.mxu0 0.0
    %2065 = vmatpush1.msra.mxu0 0.0
    %2066 = vmatprep.subr.mxu0 0.0
    %2067 = vmatpush1.msra.mxu0 0.0
    %2068 = vmatprep.subr.mxu0 0.0
    %2069 = vmatpush1.msra.mxu0 0.0
    %2070 = vmatprep.subr.mxu0 0.0
    %2071 = vmatpush1.msra.mxu0 0.0
    %2072 = vmatprep.subr.mxu0 0.0
    %2073 = vmatpush1.msra.mxu0 0.0
    %2074 = vmatprep.mubr.f32.mxu0 0.0
    %2075 = vmatmul.mubr.f32.gmra.mrb[0].mxu0 %v2005
    %v2076 = vpop.f32.mrb[0].mxu0
    %v2077 = vadd.f32 0.0, %v2076
    %v2078 = vpop.f32.mrb[0].mxu0
    %2079 = vmatprep.mubr.f32.mxu0 0.0
    %2080 = vmatmul.mubr.f32.gmra.mrb[0].mxu0 %v2008
    %v2081 = vpop.f32.mrb[0].mxu0
    %v2082 = vadd.f32 0.0, %v2081
    %v2083 = vpop.f32.mrb[0].mxu0
    %2084 = vdwg.mxu0
    %v2085 = vadd.f32 %v1670, %v2077
    %v2086 = vadd.f32 %v1671, %v2082
    %v2087 = vadd.f32 %v329, %v2085
    %v2088 = vadd.f32 %v334, %v2086
    %v2089 = vld [vmem:[#allocation12] sm:$0x1]
    %v2090 = vlaneseq
    %v2091 = vshrl.u32 %v2090, 7
    %v2092 = vsub.s32 0, %v2091
    %v2093 = vrot.slane %v2089, %v2092
    %v2094 = vadd.f32 %v2087, %v2093
    %v2095 = vadd.f32 %v2088, %v2093
    %v2096 = vsel %vm346, %v2094, 0.0
    %2097 = vadd.xlane.f32.xlu0 %v2096
    %v2098 = vpop.xlane.xlu0 %2097
    %v2099 = vsel %vm346, %v2095, 0.0
    %2100 = vadd.xlane.f32.xlu0 %v2099
    %v2101 = vpop.xlane.xlu0 %2100
    %v2102 = vrcp.pop 32.0
    %v2103 = vmul.f32 %v2098, %v2102
    %v2104 = vmul.f32 %v2101, %v2102
    %v2105 = vsub.f32 %v2094, %v2103
    %v2106 = vsub.f32 %v2095, %v2104
    %v2107 = vmul.f32 %v2105, %v2105
    %v2108 = vmul.f32 %v2106, %v2106
    %v2109 = vsel %vm346, %v2107, 0.0
    %2110 = vadd.xlane.f32.xlu0 %v2109
    %v2111 = vpop.xlane.xlu0 %2110
    %v2112 = vsel %vm346, %v2108, 0.0
    %2113 = vadd.xlane.f32.xlu0 %v2112
    %v2114 = vpop.xlane.xlu0 %2113
    %v2115 = vmul.f32 %v2111, %v2102
    %v2116 = vmul.f32 %v2114, %v2102
    %v2117 = vadd.f32 %v2115, 1e-05
    %v2118 = vadd.f32 %v2116, 1e-05
    %v2119 = vrsqrt.pop %v2117
    %v2120 = vrsqrt.pop %v2118
    %v2121 = vmul.f32 %v2105, %v2119
    %v2122 = vmul.f32 %v2106, %v2120
    %v2123 = vld [vmem:[#allocation13] sm:$0x1]
    %v2124 = vlaneseq
    %v2125 = vshrl.u32 %v2124, 7
    %v2126 = vsub.s32 0, %v2125
    %v2127 = vrot.slane %v2123, %v2126
    %v2128 = vmul.f32 %v2121, %v2127
    %v2129 = vmul.f32 %v2122, %v2127
    %v2130 = vld [vmem:[#allocation15] sm:$0x1]
    %v2131 = vlaneseq
    %v2132 = vshrl.u32 %v2131, 7
    %v2133 = vsub.s32 0, %v2132
    %v2134 = vrot.slane %v2130, %v2133
    %v2135 = vadd.f32 %v2128, %v2134
    %v2136 = vadd.f32 %v2129, %v2134
    %s2137 = scalar_lea.vmem %s4, 32
    %v2138 = vld [vmem:[%s2137] sm:$0xff]
    %v2139 = vld [vmem:[%s2137 + $0x8] sm:$0xff]
    %v2140 = vld [vmem:[%s2137 + $0x10] sm:$0xff]
    %v2141 = vld [vmem:[%s2137 + $0x18] sm:$0xff]
    %v2142 = vld [vmem:[#allocation10 + $0x1] sm:$0x1]
    %v2143 = vlaneseq
    %v2144 = vshrl.u32 %v2143, 7
    %v2145 = vsub.s32 0, %v2144
    %v2146 = vrot.slane %v2142, %v2145
    %v2148 = vsel %vm346, %v2135, 0
    %v2151 = vsel %vm346, %v2136, 0
    %2153 = vmatprep.subr.mxu0 0.0
    %2154 = vmatpush1.msra.mxu0 %v2138
    %2155 = vmatprep.subr.mxu0 0.0
    %2156 = vmatpush1.msra.mxu0 %v2139
    %2157 = vmatprep.subr.mxu0 0.0
    %2158 = vmatpush1.msra.mxu0 %v2140
    %2159 = vmatprep.subr.mxu0 0.0
    %2160 = vmatpush1.msra.mxu0 %v2141
    %2161 = vmatprep.subr.mxu0 0.0
    %2162 = vmatpush1.msra.mxu0 0.0
    %2163 = vmatprep.subr.mxu0 0.0
    %2164 = vmatpush1.msra.mxu0 0.0
    %2165 = vmatprep.subr.mxu0 0.0
    %2166 = vmatpush1.msra.mxu0 0.0
    %2167 = vmatprep.subr.mxu0 0.0
    %2168 = vmatpush1.msra.mxu0 0.0
    %2169 = vmatprep.subr.mxu0 0.0
    %2170 = vmatpush1.msra.mxu0 0.0
    %2171 = vmatprep.subr.mxu0 0.0
    %2172 = vmatpush1.msra.mxu0 0.0
    %2173 = vmatprep.subr.mxu0 0.0
    %2174 = vmatpush1.msra.mxu0 0.0
    %2175 = vmatprep.subr.mxu0 0.0
    %2176 = vmatpush1.msra.mxu0 0.0
    %2177 = vmatprep.subr.mxu0 0.0
    %2178 = vmatpush1.msra.mxu0 0.0
    %2179 = vmatprep.subr.mxu0 0.0
    %2180 = vmatpush1.msra.mxu0 0.0
    %2181 = vmatprep.subr.mxu0 0.0
    %2182 = vmatpush1.msra.mxu0 0.0
    %2183 = vmatprep.subr.mxu0 0.0
    %2184 = vmatpush1.msra.mxu0 0.0
    %2185 = vmatprep.subr.mxu0 0.0
    %2186 = vmatpush1.msra.mxu0 0.0
    %2187 = vmatprep.subr.mxu0 0.0
    %2188 = vmatpush1.msra.mxu0 0.0
    %2189 = vmatprep.subr.mxu0 0.0
    %2190 = vmatpush1.msra.mxu0 0.0
    %2191 = vmatprep.subr.mxu0 0.0
    %2192 = vmatpush1.msra.mxu0 0.0
    %2193 = vmatprep.subr.mxu0 0.0
    %2194 = vmatpush1.msra.mxu0 0.0
    %2195 = vmatprep.subr.mxu0 0.0
    %2196 = vmatpush1.msra.mxu0 0.0
    %2197 = vmatprep.subr.mxu0 0.0
    %2198 = vmatpush1.msra.mxu0 0.0
    %2199 = vmatprep.subr.mxu0 0.0
    %2200 = vmatpush1.msra.mxu0 0.0
    %2201 = vmatprep.subr.mxu0 0.0
    %2202 = vmatpush1.msra.mxu0 0.0
    %2203 = vmatprep.subr.mxu0 0.0
    %2204 = vmatpush1.msra.mxu0 0.0
    %2205 = vmatprep.subr.mxu0 0.0
    %2206 = vmatpush1.msra.mxu0 0.0
    %2207 = vmatprep.subr.mxu0 0.0
    %2208 = vmatpush1.msra.mxu0 0.0
    %2209 = vmatprep.subr.mxu0 0.0
    %2210 = vmatpush1.msra.mxu0 0.0
    %2211 = vmatprep.subr.mxu0 0.0
    %2212 = vmatpush1.msra.mxu0 0.0
    %2213 = vmatprep.subr.mxu0 0.0
    %2214 = vmatpush1.msra.mxu0 0.0
    %2215 = vmatprep.subr.mxu0 0.0
    %2216 = vmatpush1.msra.mxu0 0.0
    %2217 = vmatprep.mubr.f32.mxu0 0.0
    %2218 = vmatmul.mubr.f32.gmra.mrb[0].mxu0 %v2148
    %v2219 = vpop.f32.mrb[0].mxu0
    %v2220 = vadd.f32 %v2146, %v2219
    %v2221 = vpop.f32.mrb[0].mxu0
    %2222 = vmatprep.mubr.f32.mxu0 0.0
    %2223 = vmatmul.mubr.f32.gmra.mrb[0].mxu0 %v2151
    %v2224 = vpop.f32.mrb[0].mxu0
    %v2225 = vadd.f32 %v2146, %v2224
    %v2226 = vpop.f32.mrb[0].mxu0
    %2227 = vdwg.mxu0
    %s2228 = scalar_lea.vmem %s6, 32
    %v2229 = vld [vmem:[%s2228] sm:$0xff]
    %v2230 = vld [vmem:[%s2228 + $0x8] sm:$0xff]
    %v2231 = vld [vmem:[%s2228 + $0x10] sm:$0xff]
    %v2232 = vld [vmem:[%s2228 + $0x18] sm:$0xff]
    %2234 = vrot.lane.b32.xlu0 %v2220, 96
    %v2235 = vpop.permute.xlu0 %2234
    %v2236 = vsel %vm435, %v2220, 0
    %v2238 = vsel %vm435, %v2235, 0
    %2240 = vmatprep.subr.mxu0 0.0
    %2241 = vmatpush1.xpose.msra.mxu0 %v2238
    %2242 = vmatprep.subr.mxu0 0.0
    %2243 = vmatpush1.xpose.msra.mxu0 0.0
    %2244 = vmatprep.subr.mxu0 0.0
    %2245 = vmatpush1.xpose.msra.mxu0 0.0
    %2246 = vmatprep.subr.mxu0 0.0
    %2247 = vmatpush1.xpose.msra.mxu0 0.0
    %2248 = vmatprep.subr.mxu0 0.0
    %2249 = vmatpush1.xpose.msra.mxu0 0.0
    %2250 = vmatprep.subr.mxu0 0.0
    %2251 = vmatpush1.xpose.msra.mxu0 0.0
    %2252 = vmatprep.subr.mxu0 0.0
    %2253 = vmatpush1.xpose.msra.mxu0 0.0
    %2254 = vmatprep.subr.mxu0 0.0
    %2255 = vmatpush1.xpose.msra.mxu0 0.0
    %2256 = vmatprep.subr.mxu0 0.0
    %2257 = vmatpush1.xpose.msra.mxu0 0.0
    %2258 = vmatprep.subr.mxu0 0.0
    %2259 = vmatpush1.xpose.msra.mxu0 0.0
    %2260 = vmatprep.subr.mxu0 0.0
    %2261 = vmatpush1.xpose.msra.mxu0 0.0
    %2262 = vmatprep.subr.mxu0 0.0
    %2263 = vmatpush1.xpose.msra.mxu0 0.0
    %2264 = vmatprep.subr.mxu0 0.0
    %2265 = vmatpush1.xpose.msra.mxu0 0.0
    %2266 = vmatprep.subr.mxu0 0.0
    %2267 = vmatpush1.xpose.msra.mxu0 0.0
    %2268 = vmatprep.subr.mxu0 0.0
    %2269 = vmatpush1.xpose.msra.mxu0 0.0
    %2270 = vmatprep.subr.mxu0 0.0
    %2271 = vmatpush1.xpose.msra.mxu0 0.0
    %2272 = vmatprep.subr.mxu0 0.0
    %2273 = vmatpush1.xpose.msra.mxu0 0.0
    %2274 = vmatprep.subr.mxu0 0.0
    %2275 = vmatpush1.xpose.msra.mxu0 0.0
    %2276 = vmatprep.subr.mxu0 0.0
    %2277 = vmatpush1.xpose.msra.mxu0 0.0
    %2278 = vmatprep.subr.mxu0 0.0
    %2279 = vmatpush1.xpose.msra.mxu0 0.0
    %2280 = vmatprep.subr.mxu0 0.0
    %2281 = vmatpush1.xpose.msra.mxu0 0.0
    %2282 = vmatprep.subr.mxu0 0.0
    %2283 = vmatpush1.xpose.msra.mxu0 0.0
    %2284 = vmatprep.subr.mxu0 0.0
    %2285 = vmatpush1.xpose.msra.mxu0 0.0
    %2286 = vmatprep.subr.mxu0 0.0
    %2287 = vmatpush1.xpose.msra.mxu0 0.0
    %2288 = vmatprep.subr.mxu0 0.0
    %2289 = vmatpush1.xpose.msra.mxu0 0.0
    %2290 = vmatprep.subr.mxu0 0.0
    %2291 = vmatpush1.xpose.msra.mxu0 0.0
    %2292 = vmatprep.subr.mxu0 0.0
    %2293 = vmatpush1.xpose.msra.mxu0 0.0
    %2294 = vmatprep.subr.mxu0 0.0
    %2295 = vmatpush1.xpose.msra.mxu0 0.0
    %2296 = vmatprep.subr.mxu0 0.0
    %2297 = vmatpush1.xpose.msra.mxu0 0.0
    %2298 = vmatprep.subr.mxu0 0.0
    %2299 = vmatpush1.xpose.msra.mxu0 0.0
    %2300 = vmatprep.subr.mxu0 0.0
    %2301 = vmatpush1.xpose.msra.mxu0 0.0
    %2302 = vmatprep.subr.mxu0 0.0
    %2303 = vmatpush1.xpose.msra.mxu0 0.0
    %2304 = vmatprep.mubr.f32.mxu0 0.0
    %2305 = vmatmul.mubr.f32.gmra.mrb[0].mxu0 %v2236
    %v2306 = vpop.f32.mrb[0].mxu0
    %v2307 = vadd.f32 0.0, %v2306
    %v2308 = vpop.f32.mrb[0].mxu0
    %2309 = vdwg.mxu0
    %v2310 = vmul.f32 %v2307, 0.35355338
    %v2311 = vsel %vm435, %v2310, -inf
    %2312 = vmax.xlane.f32.xlu0 %v2311
    %v2313 = vpop.xlane.xlu0 %2312
    %v2314 = vsub.f32 %v2310, %v2313
    %v2315 = vmul.f32 %v2314, 1.442695
    %v2316 = vpow.pop %v2315
    %v2317 = vsel %vm435, %v2316, 0.0
    %2318 = vadd.xlane.f32.xlu0 %v2317
    %v2319 = vpop.xlane.xlu0 %2318
    %v2320 = vrcp.pop %v2319
    %v2321 = vmul.f32 %v2316, %v2320
    %2322 = vrot.lane.b32.xlu0 %v2220, 64
    %v2323 = vpop.permute.xlu0 %2322
    %v2326 = vsel %vm435, %v2321, 0
    %2328 = vmatprep.subr.mxu0 0.0
    %2329 = vmatpush1.msra.mxu0 %v2323
    %2330 = vmatprep.subr.mxu0 0.0
    %2331 = vmatpush1.msra.mxu0 0.0
    %2332 = vmatprep.subr.mxu0 0.0
    %2333 = vmatpush1.msra.mxu0 0.0
    %2334 = vmatprep.subr.mxu0 0.0
    %2335 = vmatpush1.msra.mxu0 0.0
    %2336 = vmatprep.subr.mxu0 0.0
    %2337 = vmatpush1.msra.mxu0 0.0
    %2338 = vmatprep.subr.mxu0 0.0
    %2339 = vmatpush1.msra.mxu0 0.0
    %2340 = vmatprep.subr.mxu0 0.0
    %2341 = vmatpush1.msra.mxu0 0.0
    %2342 = vmatprep.subr.mxu0 0.0
    %2343 = vmatpush1.msra.mxu0 0.0
    %2344 = vmatprep.subr.mxu0 0.0
    %2345 = vmatpush1.msra.mxu0 0.0
    %2346 = vmatprep.subr.mxu0 0.0
    %2347 = vmatpush1.msra.mxu0 0.0
    %2348 = vmatprep.subr.mxu0 0.0
    %2349 = vmatpush1.msra.mxu0 0.0
    %2350 = vmatprep.subr.mxu0 0.0
    %2351 = vmatpush1.msra.mxu0 0.0
    %2352 = vmatprep.subr.mxu0 0.0
    %2353 = vmatpush1.msra.mxu0 0.0
    %2354 = vmatprep.subr.mxu0 0.0
    %2355 = vmatpush1.msra.mxu0 0.0
    %2356 = vmatprep.subr.mxu0 0.0
    %2357 = vmatpush1.msra.mxu0 0.0
    %2358 = vmatprep.subr.mxu0 0.0
    %2359 = vmatpush1.msra.mxu0 0.0
    %2360 = vmatprep.subr.mxu0 0.0
    %2361 = vmatpush1.msra.mxu0 0.0
    %2362 = vmatprep.subr.mxu0 0.0
    %2363 = vmatpush1.msra.mxu0 0.0
    %2364 = vmatprep.subr.mxu0 0.0
    %2365 = vmatpush1.msra.mxu0 0.0
    %2366 = vmatprep.subr.mxu0 0.0
    %2367 = vmatpush1.msra.mxu0 0.0
    %2368 = vmatprep.subr.mxu0 0.0
    %2369 = vmatpush1.msra.mxu0 0.0
    %2370 = vmatprep.subr.mxu0 0.0
    %2371 = vmatpush1.msra.mxu0 0.0
    %2372 = vmatprep.subr.mxu0 0.0
    %2373 = vmatpush1.msra.mxu0 0.0
    %2374 = vmatprep.subr.mxu0 0.0
    %2375 = vmatpush1.msra.mxu0 0.0
    %2376 = vmatprep.subr.mxu0 0.0
    %2377 = vmatpush1.msra.mxu0 0.0
    %2378 = vmatprep.subr.mxu0 0.0
    %2379 = vmatpush1.msra.mxu0 0.0
    %2380 = vmatprep.subr.mxu0 0.0
    %2381 = vmatpush1.msra.mxu0 0.0
    %2382 = vmatprep.subr.mxu0 0.0
    %2383 = vmatpush1.msra.mxu0 0.0
    %2384 = vmatprep.subr.mxu0 0.0
    %2385 = vmatpush1.msra.mxu0 0.0
    %2386 = vmatprep.subr.mxu0 0.0
    %2387 = vmatpush1.msra.mxu0 0.0
    %2388 = vmatprep.subr.mxu0 0.0
    %2389 = vmatpush1.msra.mxu0 0.0
    %2390 = vmatprep.subr.mxu0 0.0
    %2391 = vmatpush1.msra.mxu0 0.0
    %2392 = vmatprep.mubr.f32.mxu0 0.0
    %2393 = vmatmul.mubr.f32.gmra.mrb[0].mxu0 %v2326
    %v2394 = vpop.f32.mrb[0].mxu0
    %v2395 = vadd.f32 0.0, %v2394
    %v2396 = vpop.f32.mrb[0].mxu0
    %2397 = vdwg.mxu0
    %2399 = vrot.lane.b32.xlu0 %v2225, 96
    %v2400 = vpop.permute.xlu0 %2399
    %v2401 = vsel %vm435, %v2225, 0
    %v2403 = vsel %vm435, %v2400, 0
    %2405 = vmatprep.subr.mxu0 0.0
    %2406 = vmatpush1.xpose.msra.mxu0 %v2403
    %2407 = vmatprep.subr.mxu0 0.0
    %2408 = vmatpush1.xpose.msra.mxu0 0.0
    %2409 = vmatprep.subr.mxu0 0.0
    %2410 = vmatpush1.xpose.msra.mxu0 0.0
    %2411 = vmatprep.subr.mxu0 0.0
    %2412 = vmatpush1.xpose.msra.mxu0 0.0
    %2413 = vmatprep.subr.mxu0 0.0
    %2414 = vmatpush1.xpose.msra.mxu0 0.0
    %2415 = vmatprep.subr.mxu0 0.0
    %2416 = vmatpush1.xpose.msra.mxu0 0.0
    %2417 = vmatprep.subr.mxu0 0.0
    %2418 = vmatpush1.xpose.msra.mxu0 0.0
    %2419 = vmatprep.subr.mxu0 0.0
    %2420 = vmatpush1.xpose.msra.mxu0 0.0
    %2421 = vmatprep.subr.mxu0 0.0
    %2422 = vmatpush1.xpose.msra.mxu0 0.0
    %2423 = vmatprep.subr.mxu0 0.0
    %2424 = vmatpush1.xpose.msra.mxu0 0.0
    %2425 = vmatprep.subr.mxu0 0.0
    %2426 = vmatpush1.xpose.msra.mxu0 0.0
    %2427 = vmatprep.subr.mxu0 0.0
    %2428 = vmatpush1.xpose.msra.mxu0 0.0
    %2429 = vmatprep.subr.mxu0 0.0
    %2430 = vmatpush1.xpose.msra.mxu0 0.0
    %2431 = vmatprep.subr.mxu0 0.0
    %2432 = vmatpush1.xpose.msra.mxu0 0.0
    %2433 = vmatprep.subr.mxu0 0.0
    %2434 = vmatpush1.xpose.msra.mxu0 0.0
    %2435 = vmatprep.subr.mxu0 0.0
    %2436 = vmatpush1.xpose.msra.mxu0 0.0
    %2437 = vmatprep.subr.mxu0 0.0
    %2438 = vmatpush1.xpose.msra.mxu0 0.0
    %2439 = vmatprep.subr.mxu0 0.0
    %2440 = vmatpush1.xpose.msra.mxu0 0.0
    %2441 = vmatprep.subr.mxu0 0.0
    %2442 = vmatpush1.xpose.msra.mxu0 0.0
    %2443 = vmatprep.subr.mxu0 0.0
    %2444 = vmatpush1.xpose.msra.mxu0 0.0
    %2445 = vmatprep.subr.mxu0 0.0
    %2446 = vmatpush1.xpose.msra.mxu0 0.0
    %2447 = vmatprep.subr.mxu0 0.0
    %2448 = vmatpush1.xpose.msra.mxu0 0.0
    %2449 = vmatprep.subr.mxu0 0.0
    %2450 = vmatpush1.xpose.msra.mxu0 0.0
    %2451 = vmatprep.subr.mxu0 0.0
    %2452 = vmatpush1.xpose.msra.mxu0 0.0
    %2453 = vmatprep.subr.mxu0 0.0
    %2454 = vmatpush1.xpose.msra.mxu0 0.0
    %2455 = vmatprep.subr.mxu0 0.0
    %2456 = vmatpush1.xpose.msra.mxu0 0.0
    %2457 = vmatprep.subr.mxu0 0.0
    %2458 = vmatpush1.xpose.msra.mxu0 0.0
    %2459 = vmatprep.subr.mxu0 0.0
    %2460 = vmatpush1.xpose.msra.mxu0 0.0
    %2461 = vmatprep.subr.mxu0 0.0
    %2462 = vmatpush1.xpose.msra.mxu0 0.0
    %2463 = vmatprep.subr.mxu0 0.0
    %2464 = vmatpush1.xpose.msra.mxu0 0.0
    %2465 = vmatprep.subr.mxu0 0.0
    %2466 = vmatpush1.xpose.msra.mxu0 0.0
    %2467 = vmatprep.subr.mxu0 0.0
    %2468 = vmatpush1.xpose.msra.mxu0 0.0
    %2469 = vmatprep.mubr.f32.mxu0 0.0
    %2470 = vmatmul.mubr.f32.gmra.mrb[0].mxu0 %v2401
    %v2471 = vpop.f32.mrb[0].mxu0
    %v2472 = vadd.f32 0.0, %v2471
    %v2473 = vpop.f32.mrb[0].mxu0
    %2474 = vdwg.mxu0
    %v2475 = vmul.f32 %v2472, 0.35355338
    %v2476 = vsel %vm435, %v2475, -inf
    %2477 = vmax.xlane.f32.xlu0 %v2476
    %v2478 = vpop.xlane.xlu0 %2477
    %v2479 = vsub.f32 %v2475, %v2478
    %v2480 = vmul.f32 %v2479, 1.442695
    %v2481 = vpow.pop %v2480
    %v2482 = vsel %vm435, %v2481, 0.0
    %2483 = vadd.xlane.f32.xlu0 %v2482
    %v2484 = vpop.xlane.xlu0 %2483
    %v2485 = vrcp.pop %v2484
    %v2486 = vmul.f32 %v2481, %v2485
    %2487 = vrot.lane.b32.xlu0 %v2225, 64
    %v2488 = vpop.permute.xlu0 %2487
    %v2491 = vsel %vm435, %v2486, 0
    %2493 = vmatprep.subr.mxu0 0.0
    %2494 = vmatpush1.msra.mxu0 %v2488
    %2495 = vmatprep.subr.mxu0 0.0
    %2496 = vmatpush1.msra.mxu0 0.0
    %2497 = vmatprep.subr.mxu0 0.0
    %2498 = vmatpush1.msra.mxu0 0.0
    %2499 = vmatprep.subr.mxu0 0.0
    %2500 = vmatpush1.msra.mxu0 0.0
    %2501 = vmatprep.subr.mxu0 0.0
    %2502 = vmatpush1.msra.mxu0 0.0
    %2503 = vmatprep.subr.mxu0 0.0
    %2504 = vmatpush1.msra.mxu0 0.0
    %2505 = vmatprep.subr.mxu0 0.0
    %2506 = vmatpush1.msra.mxu0 0.0
    %2507 = vmatprep.subr.mxu0 0.0
    %2508 = vmatpush1.msra.mxu0 0.0
    %2509 = vmatprep.subr.mxu0 0.0
    %2510 = vmatpush1.msra.mxu0 0.0
    %2511 = vmatprep.subr.mxu0 0.0
    %2512 = vmatpush1.msra.mxu0 0.0
    %2513 = vmatprep.subr.mxu0 0.0
    %2514 = vmatpush1.msra.mxu0 0.0
    %2515 = vmatprep.subr.mxu0 0.0
    %2516 = vmatpush1.msra.mxu0 0.0
    %2517 = vmatprep.subr.mxu0 0.0
    %2518 = vmatpush1.msra.mxu0 0.0
    %2519 = vmatprep.subr.mxu0 0.0
    %2520 = vmatpush1.msra.mxu0 0.0
    %2521 = vmatprep.subr.mxu0 0.0
    %2522 = vmatpush1.msra.mxu0 0.0
    %2523 = vmatprep.subr.mxu0 0.0
    %2524 = vmatpush1.msra.mxu0 0.0
    %2525 = vmatprep.subr.mxu0 0.0
    %2526 = vmatpush1.msra.mxu0 0.0
    %2527 = vmatprep.subr.mxu0 0.0
    %2528 = vmatpush1.msra.mxu0 0.0
    %2529 = vmatprep.subr.mxu0 0.0
    %2530 = vmatpush1.msra.mxu0 0.0
    %2531 = vmatprep.subr.mxu0 0.0
    %2532 = vmatpush1.msra.mxu0 0.0
    %2533 = vmatprep.subr.mxu0 0.0
    %2534 = vmatpush1.msra.mxu0 0.0
    %2535 = vmatprep.subr.mxu0 0.0
    %2536 = vmatpush1.msra.mxu0 0.0
    %2537 = vmatprep.subr.mxu0 0.0
    %2538 = vmatpush1.msra.mxu0 0.0
    %2539 = vmatprep.subr.mxu0 0.0
    %2540 = vmatpush1.msra.mxu0 0.0
    %2541 = vmatprep.subr.mxu0 0.0
    %2542 = vmatpush1.msra.mxu0 0.0
    %2543 = vmatprep.subr.mxu0 0.0
    %2544 = vmatpush1.msra.mxu0 0.0
    %2545 = vmatprep.subr.mxu0 0.0
    %2546 = vmatpush1.msra.mxu0 0.0
    %2547 = vmatprep.subr.mxu0 0.0
    %2548 = vmatpush1.msra.mxu0 0.0
    %2549 = vmatprep.subr.mxu0 0.0
    %2550 = vmatpush1.msra.mxu0 0.0
    %2551 = vmatprep.subr.mxu0 0.0
    %2552 = vmatpush1.msra.mxu0 0.0
    %2553 = vmatprep.subr.mxu0 0.0
    %2554 = vmatpush1.msra.mxu0 0.0
    %2555 = vmatprep.subr.mxu0 0.0
    %2556 = vmatpush1.msra.mxu0 0.0
    %2557 = vmatprep.mubr.f32.mxu0 0.0
    %2558 = vmatmul.mubr.f32.gmra.mrb[0].mxu0 %v2491
    %v2559 = vpop.f32.mrb[0].mxu0
    %v2560 = vadd.f32 0.0, %v2559
    %v2561 = vpop.f32.mrb[0].mxu0
    %2562 = vdwg.mxu0
    %2563 = vrot.lane.b32.xlu0 %v2220, 120
    %v2564 = vpop.permute.xlu0 %2563
    %2565 = vrot.lane.b32.xlu0 %v2220, 88
    %v2566 = vpop.permute.xlu0 %2565
    %v2567 = vsel %vm435, %v2564, 0
    %v2569 = vsel %vm435, %v2566, 0
    %2571 = vmatprep.subr.mxu0 0.0
    %2572 = vmatpush1.xpose.msra.mxu0 %v2569
    %2573 = vmatprep.subr.mxu0 0.0
    %2574 = vmatpush1.xpose.msra.mxu0 0.0
    %2575 = vmatprep.subr.mxu0 0.0
    %2576 = vmatpush1.xpose.msra.mxu0 0.0
    %2577 = vmatprep.subr.mxu0 0.0
    %2578 = vmatpush1.xpose.msra.mxu0 0.0
    %2579 = vmatprep.subr.mxu0 0.0
    %2580 = vmatpush1.xpose.msra.mxu0 0.0
    %2581 = vmatprep.subr.mxu0 0.0
    %2582 = vmatpush1.xpose.msra.mxu0 0.0
    %2583 = vmatprep.subr.mxu0 0.0
    %2584 = vmatpush1.xpose.msra.mxu0 0.0
    %2585 = vmatprep.subr.mxu0 0.0
    %2586 = vmatpush1.xpose.msra.mxu0 0.0
    %2587 = vmatprep.subr.mxu0 0.0
    %2588 = vmatpush1.xpose.msra.mxu0 0.0
    %2589 = vmatprep.subr.mxu0 0.0
    %2590 = vmatpush1.xpose.msra.mxu0 0.0
    %2591 = vmatprep.subr.mxu0 0.0
    %2592 = vmatpush1.xpose.msra.mxu0 0.0
    %2593 = vmatprep.subr.mxu0 0.0
    %2594 = vmatpush1.xpose.msra.mxu0 0.0
    %2595 = vmatprep.subr.mxu0 0.0
    %2596 = vmatpush1.xpose.msra.mxu0 0.0
    %2597 = vmatprep.subr.mxu0 0.0
    %2598 = vmatpush1.xpose.msra.mxu0 0.0
    %2599 = vmatprep.subr.mxu0 0.0
    %2600 = vmatpush1.xpose.msra.mxu0 0.0
    %2601 = vmatprep.subr.mxu0 0.0
    %2602 = vmatpush1.xpose.msra.mxu0 0.0
    %2603 = vmatprep.subr.mxu0 0.0
    %2604 = vmatpush1.xpose.msra.mxu0 0.0
    %2605 = vmatprep.subr.mxu0 0.0
    %2606 = vmatpush1.xpose.msra.mxu0 0.0
    %2607 = vmatprep.subr.mxu0 0.0
    %2608 = vmatpush1.xpose.msra.mxu0 0.0
    %2609 = vmatprep.subr.mxu0 0.0
    %2610 = vmatpush1.xpose.msra.mxu0 0.0
    %2611 = vmatprep.subr.mxu0 0.0
    %2612 = vmatpush1.xpose.msra.mxu0 0.0
    %2613 = vmatprep.subr.mxu0 0.0
    %2614 = vmatpush1.xpose.msra.mxu0 0.0
    %2615 = vmatprep.subr.mxu0 0.0
    %2616 = vmatpush1.xpose.msra.mxu0 0.0
    %2617 = vmatprep.subr.mxu0 0.0
    %2618 = vmatpush1.xpose.msra.mxu0 0.0
    %2619 = vmatprep.subr.mxu0 0.0
    %2620 = vmatpush1.xpose.msra.mxu0 0.0
    %2621 = vmatprep.subr.mxu0 0.0
    %2622 = vmatpush1.xpose.msra.mxu0 0.0
    %2623 = vmatprep.subr.mxu0 0.0
    %2624 = vmatpush1.xpose.msra.mxu0 0.0
    %2625 = vmatprep.subr.mxu0 0.0
    %2626 = vmatpush1.xpose.msra.mxu0 0.0
    %2627 = vmatprep.subr.mxu0 0.0
    %2628 = vmatpush1.xpose.msra.mxu0 0.0
    %2629 = vmatprep.subr.mxu0 0.0
    %2630 = vmatpush1.xpose.msra.mxu0 0.0
    %2631 = vmatprep.subr.mxu0 0.0
    %2632 = vmatpush1.xpose.msra.mxu0 0.0
    %2633 = vmatprep.subr.mxu0 0.0
    %2634 = vmatpush1.xpose.msra.mxu0 0.0
    %2635 = vmatprep.mubr.f32.mxu0 0.0
    %2636 = vmatmul.mubr.f32.gmra.mrb[0].mxu0 %v2567
    %v2637 = vpop.f32.mrb[0].mxu0
    %v2638 = vadd.f32 0.0, %v2637
    %v2639 = vpop.f32.mrb[0].mxu0
    %2640 = vdwg.mxu0
    %v2641 = vmul.f32 %v2638, 0.35355338
    %v2642 = vsel %vm435, %v2641, -inf
    %2643 = vmax.xlane.f32.xlu0 %v2642
    %v2644 = vpop.xlane.xlu0 %2643
    %v2645 = vsub.f32 %v2641, %v2644
    %v2646 = vmul.f32 %v2645, 1.442695
    %v2647 = vpow.pop %v2646
    %v2648 = vsel %vm435, %v2647, 0.0
    %2649 = vadd.xlane.f32.xlu0 %v2648
    %v2650 = vpop.xlane.xlu0 %2649
    %v2651 = vrcp.pop %v2650
    %v2652 = vmul.f32 %v2647, %v2651
    %2653 = vrot.lane.b32.xlu0 %v2220, 56
    %v2654 = vpop.permute.xlu0 %2653
    %v2657 = vsel %vm435, %v2652, 0
    %2659 = vmatprep.subr.mxu0 0.0
    %2660 = vmatpush1.msra.mxu0 %v2654
    %2661 = vmatprep.subr.mxu0 0.0
    %2662 = vmatpush1.msra.mxu0 0.0
    %2663 = vmatprep.subr.mxu0 0.0
    %2664 = vmatpush1.msra.mxu0 0.0
    %2665 = vmatprep.subr.mxu0 0.0
    %2666 = vmatpush1.msra.mxu0 0.0
    %2667 = vmatprep.subr.mxu0 0.0
    %2668 = vmatpush1.msra.mxu0 0.0
    %2669 = vmatprep.subr.mxu0 0.0
    %2670 = vmatpush1.msra.mxu0 0.0
    %2671 = vmatprep.subr.mxu0 0.0
    %2672 = vmatpush1.msra.mxu0 0.0
    %2673 = vmatprep.subr.mxu0 0.0
    %2674 = vmatpush1.msra.mxu0 0.0
    %2675 = vmatprep.subr.mxu0 0.0
    %2676 = vmatpush1.msra.mxu0 0.0
    %2677 = vmatprep.subr.mxu0 0.0
    %2678 = vmatpush1.msra.mxu0 0.0
    %2679 = vmatprep.subr.mxu0 0.0
    %2680 = vmatpush1.msra.mxu0 0.0
    %2681 = vmatprep.subr.mxu0 0.0
    %2682 = vmatpush1.msra.mxu0 0.0
    %2683 = vmatprep.subr.mxu0 0.0
    %2684 = vmatpush1.msra.mxu0 0.0
    %2685 = vmatprep.subr.mxu0 0.0
    %2686 = vmatpush1.msra.mxu0 0.0
    %2687 = vmatprep.subr.mxu0 0.0
    %2688 = vmatpush1.msra.mxu0 0.0
    %2689 = vmatprep.subr.mxu0 0.0
    %2690 = vmatpush1.msra.mxu0 0.0
    %2691 = vmatprep.subr.mxu0 0.0
    %2692 = vmatpush1.msra.mxu0 0.0
    %2693 = vmatprep.subr.mxu0 0.0
    %2694 = vmatpush1.msra.mxu0 0.0
    %2695 = vmatprep.subr.mxu0 0.0
    %2696 = vmatpush1.msra.mxu0 0.0
    %2697 = vmatprep.subr.mxu0 0.0
    %2698 = vmatpush1.msra.mxu0 0.0
    %2699 = vmatprep.subr.mxu0 0.0
    %2700 = vmatpush1.msra.mxu0 0.0
    %2701 = vmatprep.subr.mxu0 0.0
    %2702 = vmatpush1.msra.mxu0 0.0
    %2703 = vmatprep.subr.mxu0 0.0
    %2704 = vmatpush1.msra.mxu0 0.0
    %2705 = vmatprep.subr.mxu0 0.0
    %2706 = vmatpush1.msra.mxu0 0.0
    %2707 = vmatprep.subr.mxu0 0.0
    %2708 = vmatpush1.msra.mxu0 0.0
    %2709 = vmatprep.subr.mxu0 0.0
    %2710 = vmatpush1.msra.mxu0 0.0
    %2711 = vmatprep.subr.mxu0 0.0
    %2712 = vmatpush1.msra.mxu0 0.0
    %2713 = vmatprep.subr.mxu0 0.0
    %2714 = vmatpush1.msra.mxu0 0.0
    %2715 = vmatprep.subr.mxu0 0.0
    %2716 = vmatpush1.msra.mxu0 0.0
    %2717 = vmatprep.subr.mxu0 0.0
    %2718 = vmatpush1.msra.mxu0 0.0
    %2719 = vmatprep.subr.mxu0 0.0
    %2720 = vmatpush1.msra.mxu0 0.0
    %2721 = vmatprep.subr.mxu0 0.0
    %2722 = vmatpush1.msra.mxu0 0.0
    %2723 = vmatprep.mubr.f32.mxu0 0.0
    %2724 = vmatmul.mubr.f32.gmra.mrb[0].mxu0 %v2657
    %v2725 = vpop.f32.mrb[0].mxu0
    %v2726 = vadd.f32 0.0, %v2725
    %v2727 = vpop.f32.mrb[0].mxu0
    %2728 = vdwg.mxu0
    %2729 = vrot.lane.b32.xlu0 %v2225, 120
    %v2730 = vpop.permute.xlu0 %2729
    %2731 = vrot.lane.b32.xlu0 %v2225, 88
    %v2732 = vpop.permute.xlu0 %2731
    %v2733 = vsel %vm435, %v2730, 0
    %v2735 = vsel %vm435, %v2732, 0
    %2737 = vmatprep.subr.mxu0 0.0
    %2738 = vmatpush1.xpose.msra.mxu0 %v2735
    %2739 = vmatprep.subr.mxu0 0.0
    %2740 = vmatpush1.xpose.msra.mxu0 0.0
    %2741 = vmatprep.subr.mxu0 0.0
    %2742 = vmatpush1.xpose.msra.mxu0 0.0
    %2743 = vmatprep.subr.mxu0 0.0
    %2744 = vmatpush1.xpose.msra.mxu0 0.0
    %2745 = vmatprep.subr.mxu0 0.0
    %2746 = vmatpush1.xpose.msra.mxu0 0.0
    %2747 = vmatprep.subr.mxu0 0.0
    %2748 = vmatpush1.xpose.msra.mxu0 0.0
    %2749 = vmatprep.subr.mxu0 0.0
    %2750 = vmatpush1.xpose.msra.mxu0 0.0
    %2751 = vmatprep.subr.mxu0 0.0
    %2752 = vmatpush1.xpose.msra.mxu0 0.0
    %2753 = vmatprep.subr.mxu0 0.0
    %2754 = vmatpush1.xpose.msra.mxu0 0.0
    %2755 = vmatprep.subr.mxu0 0.0
    %2756 = vmatpush1.xpose.msra.mxu0 0.0
    %2757 = vmatprep.subr.mxu0 0.0
    %2758 = vmatpush1.xpose.msra.mxu0 0.0
    %2759 = vmatprep.subr.mxu0 0.0
    %2760 = vmatpush1.xpose.msra.mxu0 0.0
    %2761 = vmatprep.subr.mxu0 0.0
    %2762 = vmatpush1.xpose.msra.mxu0 0.0
    %2763 = vmatprep.subr.mxu0 0.0
    %2764 = vmatpush1.xpose.msra.mxu0 0.0
    %2765 = vmatprep.subr.mxu0 0.0
    %2766 = vmatpush1.xpose.msra.mxu0 0.0
    %2767 = vmatprep.subr.mxu0 0.0
    %2768 = vmatpush1.xpose.msra.mxu0 0.0
    %2769 = vmatprep.subr.mxu0 0.0
    %2770 = vmatpush1.xpose.msra.mxu0 0.0
    %2771 = vmatprep.subr.mxu0 0.0
    %2772 = vmatpush1.xpose.msra.mxu0 0.0
    %2773 = vmatprep.subr.mxu0 0.0
    %2774 = vmatpush1.xpose.msra.mxu0 0.0
    %2775 = vmatprep.subr.mxu0 0.0
    %2776 = vmatpush1.xpose.msra.mxu0 0.0
    %2777 = vmatprep.subr.mxu0 0.0
    %2778 = vmatpush1.xpose.msra.mxu0 0.0
    %2779 = vmatprep.subr.mxu0 0.0
    %2780 = vmatpush1.xpose.msra.mxu0 0.0
    %2781 = vmatprep.subr.mxu0 0.0
    %2782 = vmatpush1.xpose.msra.mxu0 0.0
    %2783 = vmatprep.subr.mxu0 0.0
    %2784 = vmatpush1.xpose.msra.mxu0 0.0
    %2785 = vmatprep.subr.mxu0 0.0
    %2786 = vmatpush1.xpose.msra.mxu0 0.0
    %2787 = vmatprep.subr.mxu0 0.0
    %2788 = vmatpush1.xpose.msra.mxu0 0.0
    %2789 = vmatprep.subr.mxu0 0.0
    %2790 = vmatpush1.xpose.msra.mxu0 0.0
    %2791 = vmatprep.subr.mxu0 0.0
    %2792 = vmatpush1.xpose.msra.mxu0 0.0
    %2793 = vmatprep.subr.mxu0 0.0
    %2794 = vmatpush1.xpose.msra.mxu0 0.0
    %2795 = vmatprep.subr.mxu0 0.0
    %2796 = vmatpush1.xpose.msra.mxu0 0.0
    %2797 = vmatprep.subr.mxu0 0.0
    %2798 = vmatpush1.xpose.msra.mxu0 0.0
    %2799 = vmatprep.subr.mxu0 0.0
    %2800 = vmatpush1.xpose.msra.mxu0 0.0
    %2801 = vmatprep.mubr.f32.mxu0 0.0
    %2802 = vmatmul.mubr.f32.gmra.mrb[0].mxu0 %v2733
    %v2803 = vpop.f32.mrb[0].mxu0
    %v2804 = vadd.f32 0.0, %v2803
    %v2805 = vpop.f32.mrb[0].mxu0
    %2806 = vdwg.mxu0
    %v2807 = vmul.f32 %v2804, 0.35355338
    %v2808 = vsel %vm435, %v2807, -inf
    %2809 = vmax.xlane.f32.xlu0 %v2808
    %v2810 = vpop.xlane.xlu0 %2809
    %v2811 = vsub.f32 %v2807, %v2810
    %v2812 = vmul.f32 %v2811, 1.442695
    %v2813 = vpow.pop %v2812
    %v2814 = vsel %vm435, %v2813, 0.0
    %2815 = vadd.xlane.f32.xlu0 %v2814
    %v2816 = vpop.xlane.xlu0 %2815
    %v2817 = vrcp.pop %v2816
    %v2818 = vmul.f32 %v2813, %v2817
    %2819 = vrot.lane.b32.xlu0 %v2225, 56
    %v2820 = vpop.permute.xlu0 %2819
    %v2823 = vsel %vm435, %v2818, 0
    %2825 = vmatprep.subr.mxu0 0.0
    %2826 = vmatpush1.msra.mxu0 %v2820
    %2827 = vmatprep.subr.mxu0 0.0
    %2828 = vmatpush1.msra.mxu0 0.0
    %2829 = vmatprep.subr.mxu0 0.0
    %2830 = vmatpush1.msra.mxu0 0.0
    %2831 = vmatprep.subr.mxu0 0.0
    %2832 = vmatpush1.msra.mxu0 0.0
    %2833 = vmatprep.subr.mxu0 0.0
    %2834 = vmatpush1.msra.mxu0 0.0
    %2835 = vmatprep.subr.mxu0 0.0
    %2836 = vmatpush1.msra.mxu0 0.0
    %2837 = vmatprep.subr.mxu0 0.0
    %2838 = vmatpush1.msra.mxu0 0.0
    %2839 = vmatprep.subr.mxu0 0.0
    %2840 = vmatpush1.msra.mxu0 0.0
    %2841 = vmatprep.subr.mxu0 0.0
    %2842 = vmatpush1.msra.mxu0 0.0
    %2843 = vmatprep.subr.mxu0 0.0
    %2844 = vmatpush1.msra.mxu0 0.0
    %2845 = vmatprep.subr.mxu0 0.0
    %2846 = vmatpush1.msra.mxu0 0.0
    %2847 = vmatprep.subr.mxu0 0.0
    %2848 = vmatpush1.msra.mxu0 0.0
    %2849 = vmatprep.subr.mxu0 0.0
    %2850 = vmatpush1.msra.mxu0 0.0
    %2851 = vmatprep.subr.mxu0 0.0
    %2852 = vmatpush1.msra.mxu0 0.0
    %2853 = vmatprep.subr.mxu0 0.0
    %2854 = vmatpush1.msra.mxu0 0.0
    %2855 = vmatprep.subr.mxu0 0.0
    %2856 = vmatpush1.msra.mxu0 0.0
    %2857 = vmatprep.subr.mxu0 0.0
    %2858 = vmatpush1.msra.mxu0 0.0
    %2859 = vmatprep.subr.mxu0 0.0
    %2860 = vmatpush1.msra.mxu0 0.0
    %2861 = vmatprep.subr.mxu0 0.0
    %2862 = vmatpush1.msra.mxu0 0.0
    %2863 = vmatprep.subr.mxu0 0.0
    %2864 = vmatpush1.msra.mxu0 0.0
    %2865 = vmatprep.subr.mxu0 0.0
    %2866 = vmatpush1.msra.mxu0 0.0
    %2867 = vmatprep.subr.mxu0 0.0
    %2868 = vmatpush1.msra.mxu0 0.0
    %2869 = vmatprep.subr.mxu0 0.0
    %2870 = vmatpush1.msra.mxu0 0.0
    %2871 = vmatprep.subr.mxu0 0.0
    %2872 = vmatpush1.msra.mxu0 0.0
    %2873 = vmatprep.subr.mxu0 0.0
    %2874 = vmatpush1.msra.mxu0 0.0
    %2875 = vmatprep.subr.mxu0 0.0
    %2876 = vmatpush1.msra.mxu0 0.0
    %2877 = vmatprep.subr.mxu0 0.0
    %2878 = vmatpush1.msra.mxu0 0.0
    %2879 = vmatprep.subr.mxu0 0.0
    %2880 = vmatpush1.msra.mxu0 0.0
    %2881 = vmatprep.subr.mxu0 0.0
    %2882 = vmatpush1.msra.mxu0 0.0
    %2883 = vmatprep.subr.mxu0 0.0
    %2884 = vmatpush1.msra.mxu0 0.0
    %2885 = vmatprep.subr.mxu0 0.0
    %2886 = vmatpush1.msra.mxu0 0.0
    %2887 = vmatprep.subr.mxu0 0.0
    %2888 = vmatpush1.msra.mxu0 0.0
    %2889 = vmatprep.mubr.f32.mxu0 0.0
    %2890 = vmatmul.mubr.f32.gmra.mrb[0].mxu0 %v2823
    %v2891 = vpop.f32.mrb[0].mxu0
    %v2892 = vadd.f32 0.0, %v2891
    %v2893 = vpop.f32.mrb[0].mxu0
    %2894 = vdwg.mxu0
    %v2896 = vsel %vm435, %v2726, 0
    %v2899 = vsel %vm435, %v2892, 0
    %2901 = vmatprep.subr.mxu0 0.0
    %2902 = vmatpush1.msra.mxu0 %v2230
    %2903 = vmatprep.subr.mxu0 0.0
    %2904 = vmatpush1.msra.mxu0 0.0
    %2905 = vmatprep.subr.mxu0 0.0
    %2906 = vmatpush1.msra.mxu0 0.0
    %2907 = vmatprep.subr.mxu0 0.0
    %2908 = vmatpush1.msra.mxu0 0.0
    %2909 = vmatprep.subr.mxu0 0.0
    %2910 = vmatpush1.msra.mxu0 0.0
    %2911 = vmatprep.subr.mxu0 0.0
    %2912 = vmatpush1.msra.mxu0 0.0
    %2913 = vmatprep.subr.mxu0 0.0
    %2914 = vmatpush1.msra.mxu0 0.0
    %2915 = vmatprep.subr.mxu0 0.0
    %2916 = vmatpush1.msra.mxu0 0.0
    %2917 = vmatprep.subr.mxu0 0.0
    %2918 = vmatpush1.msra.mxu0 0.0
    %2919 = vmatprep.subr.mxu0 0.0
    %2920 = vmatpush1.msra.mxu0 0.0
    %2921 = vmatprep.subr.mxu0 0.0
    %2922 = vmatpush1.msra.mxu0 0.0
    %2923 = vmatprep.subr.mxu0 0.0
    %2924 = vmatpush1.msra.mxu0 0.0
    %2925 = vmatprep.subr.mxu0 0.0
    %2926 = vmatpush1.msra.mxu0 0.0
    %2927 = vmatprep.subr.mxu0 0.0
    %2928 = vmatpush1.msra.mxu0 0.0
    %2929 = vmatprep.subr.mxu0 0.0
    %2930 = vmatpush1.msra.mxu0 0.0
    %2931 = vmatprep.subr.mxu0 0.0
    %2932 = vmatpush1.msra.mxu0 0.0
    %2933 = vmatprep.subr.mxu0 0.0
    %2934 = vmatpush1.msra.mxu0 0.0
    %2935 = vmatprep.subr.mxu0 0.0
    %2936 = vmatpush1.msra.mxu0 0.0
    %2937 = vmatprep.subr.mxu0 0.0
    %2938 = vmatpush1.msra.mxu0 0.0
    %2939 = vmatprep.subr.mxu0 0.0
    %2940 = vmatpush1.msra.mxu0 0.0
    %2941 = vmatprep.subr.mxu0 0.0
    %2942 = vmatpush1.msra.mxu0 0.0
    %2943 = vmatprep.subr.mxu0 0.0
    %2944 = vmatpush1.msra.mxu0 0.0
    %2945 = vmatprep.subr.mxu0 0.0
    %2946 = vmatpush1.msra.mxu0 0.0
    %2947 = vmatprep.subr.mxu0 0.0
    %2948 = vmatpush1.msra.mxu0 0.0
    %2949 = vmatprep.subr.mxu0 0.0
    %2950 = vmatpush1.msra.mxu0 0.0
    %2951 = vmatprep.subr.mxu0 0.0
    %2952 = vmatpush1.msra.mxu0 0.0
    %2953 = vmatprep.subr.mxu0 0.0
    %2954 = vmatpush1.msra.mxu0 0.0
    %2955 = vmatprep.subr.mxu0 0.0
    %2956 = vmatpush1.msra.mxu0 0.0
    %2957 = vmatprep.subr.mxu0 0.0
    %2958 = vmatpush1.msra.mxu0 0.0
    %2959 = vmatprep.subr.mxu0 0.0
    %2960 = vmatpush1.msra.mxu0 0.0
    %2961 = vmatprep.subr.mxu0 0.0
    %2962 = vmatpush1.msra.mxu0 0.0
    %2963 = vmatprep.subr.mxu0 0.0
    %2964 = vmatpush1.msra.mxu0 0.0
    %2965 = vmatprep.mubr.f32.mxu0 0.0
    %2966 = vmatmul.mubr.f32.gmra.mrb[0].mxu0 %v2896
    %v2967 = vpop.f32.mrb[0].mxu0
    %v2968 = vadd.f32 0.0, %v2967
    %v2969 = vpop.f32.mrb[0].mxu0
    %2970 = vmatprep.mubr.f32.mxu0 0.0
    %2971 = vmatmul.mubr.f32.gmra.mrb[0].mxu0 %v2899
    %v2972 = vpop.f32.mrb[0].mxu0
    %v2973 = vadd.f32 0.0, %v2972
    %v2974 = vpop.f32.mrb[0].mxu0
    %2975 = vdwg.mxu0
    %v2977 = vsel %vm435, %v2395, 0
    %v2980 = vsel %vm435, %v2560, 0
    %2982 = vmatprep.subr.mxu0 0.0
    %2983 = vmatpush1.msra.mxu0 %v2229
    %2984 = vmatprep.subr.mxu0 0.0
    %2985 = vmatpush1.msra.mxu0 0.0
    %2986 = vmatprep.subr.mxu0 0.0
    %2987 = vmatpush1.msra.mxu0 0.0
    %2988 = vmatprep.subr.mxu0 0.0
    %2989 = vmatpush1.msra.mxu0 0.0
    %2990 = vmatprep.subr.mxu0 0.0
    %2991 = vmatpush1.msra.mxu0 0.0
    %2992 = vmatprep.subr.mxu0 0.0
    %2993 = vmatpush1.msra.mxu0 0.0
    %2994 = vmatprep.subr.mxu0 0.0
    %2995 = vmatpush1.msra.mxu0 0.0
    %2996 = vmatprep.subr.mxu0 0.0
    %2997 = vmatpush1.msra.mxu0 0.0
    %2998 = vmatprep.subr.mxu0 0.0
    %2999 = vmatpush1.msra.mxu0 0.0
    %3000 = vmatprep.subr.mxu0 0.0
    %3001 = vmatpush1.msra.mxu0 0.0
    %3002 = vmatprep.subr.mxu0 0.0
    %3003 = vmatpush1.msra.mxu0 0.0
    %3004 = vmatprep.subr.mxu0 0.0
    %3005 = vmatpush1.msra.mxu0 0.0
    %3006 = vmatprep.subr.mxu0 0.0
    %3007 = vmatpush1.msra.mxu0 0.0
    %3008 = vmatprep.subr.mxu0 0.0
    %3009 = vmatpush1.msra.mxu0 0.0
    %3010 = vmatprep.subr.mxu0 0.0
    %3011 = vmatpush1.msra.mxu0 0.0
    %3012 = vmatprep.subr.mxu0 0.0
    %3013 = vmatpush1.msra.mxu0 0.0
    %3014 = vmatprep.subr.mxu0 0.0
    %3015 = vmatpush1.msra.mxu0 0.0
    %3016 = vmatprep.subr.mxu0 0.0
    %3017 = vmatpush1.msra.mxu0 0.0
    %3018 = vmatprep.subr.mxu0 0.0
    %3019 = vmatpush1.msra.mxu0 0.0
    %3020 = vmatprep.subr.mxu0 0.0
    %3021 = vmatpush1.msra.mxu0 0.0
    %3022 = vmatprep.subr.mxu0 0.0
    %3023 = vmatpush1.msra.mxu0 0.0
    %3024 = vmatprep.subr.mxu0 0.0
    %3025 = vmatpush1.msra.mxu0 0.0
    %3026 = vmatprep.subr.mxu0 0.0
    %3027 = vmatpush1.msra.mxu0 0.0
    %3028 = vmatprep.subr.mxu0 0.0
    %3029 = vmatpush1.msra.mxu0 0.0
    %3030 = vmatprep.subr.mxu0 0.0
    %3031 = vmatpush1.msra.mxu0 0.0
    %3032 = vmatprep.subr.mxu0 0.0
    %3033 = vmatpush1.msra.mxu0 0.0
    %3034 = vmatprep.subr.mxu0 0.0
    %3035 = vmatpush1.msra.mxu0 0.0
    %3036 = vmatprep.subr.mxu0 0.0
    %3037 = vmatpush1.msra.mxu0 0.0
    %3038 = vmatprep.subr.mxu0 0.0
    %3039 = vmatpush1.msra.mxu0 0.0
    %3040 = vmatprep.subr.mxu0 0.0
    %3041 = vmatpush1.msra.mxu0 0.0
    %3042 = vmatprep.subr.mxu0 0.0
    %3043 = vmatpush1.msra.mxu0 0.0
    %3044 = vmatprep.subr.mxu0 0.0
    %3045 = vmatpush1.msra.mxu0 0.0
    %3046 = vmatprep.mubr.f32.mxu0 0.0
    %3047 = vmatmul.mubr.f32.gmra.mrb[0].mxu0 %v2977
    %v3048 = vpop.f32.mrb[0].mxu0
    %v3049 = vadd.f32 %v2968, %v3048
    %v3050 = vpop.f32.mrb[0].mxu0
    %3051 = vmatprep.mubr.f32.mxu0 0.0
    %3052 = vmatmul.mubr.f32.gmra.mrb[0].mxu0 %v2980
    %v3053 = vpop.f32.mrb[0].mxu0
    %v3054 = vadd.f32 %v2973, %v3053
    %v3055 = vpop.f32.mrb[0].mxu0
    %3056 = vdwg.mxu0
    %3057 = vrot.lane.b32.xlu0 %v2220, 112
    %v3058 = vpop.permute.xlu0 %3057
    %3059 = vrot.lane.b32.xlu0 %v2220, 80
    %v3060 = vpop.permute.xlu0 %3059
    %v3061 = vsel %vm435, %v3058, 0
    %v3063 = vsel %vm435, %v3060, 0
    %3065 = vmatprep.subr.mxu0 0.0
    %3066 = vmatpush1.xpose.msra.mxu0 %v3063
    %3067 = vmatprep.subr.mxu0 0.0
    %3068 = vmatpush1.xpose.msra.mxu0 0.0
    %3069 = vmatprep.subr.mxu0 0.0
    %3070 = vmatpush1.xpose.msra.mxu0 0.0
    %3071 = vmatprep.subr.mxu0 0.0
    %3072 = vmatpush1.xpose.msra.mxu0 0.0
    %3073 = vmatprep.subr.mxu0 0.0
    %3074 = vmatpush1.xpose.msra.mxu0 0.0
    %3075 = vmatprep.subr.mxu0 0.0
    %3076 = vmatpush1.xpose.msra.mxu0 0.0
    %3077 = vmatprep.subr.mxu0 0.0
    %3078 = vmatpush1.xpose.msra.mxu0 0.0
    %3079 = vmatprep.subr.mxu0 0.0
    %3080 = vmatpush1.xpose.msra.mxu0 0.0
    %3081 = vmatprep.subr.mxu0 0.0
    %3082 = vmatpush1.xpose.msra.mxu0 0.0
    %3083 = vmatprep.subr.mxu0 0.0
    %3084 = vmatpush1.xpose.msra.mxu0 0.0
    %3085 = vmatprep.subr.mxu0 0.0
    %3086 = vmatpush1.xpose.msra.mxu0 0.0
    %3087 = vmatprep.subr.mxu0 0.0
    %3088 = vmatpush1.xpose.msra.mxu0 0.0
    %3089 = vmatprep.subr.mxu0 0.0
    %3090 = vmatpush1.xpose.msra.mxu0 0.0
    %3091 = vmatprep.subr.mxu0 0.0
    %3092 = vmatpush1.xpose.msra.mxu0 0.0
    %3093 = vmatprep.subr.mxu0 0.0
    %3094 = vmatpush1.xpose.msra.mxu0 0.0
    %3095 = vmatprep.subr.mxu0 0.0
    %3096 = vmatpush1.xpose.msra.mxu0 0.0
    %3097 = vmatprep.subr.mxu0 0.0
    %3098 = vmatpush1.xpose.msra.mxu0 0.0
    %3099 = vmatprep.subr.mxu0 0.0
    %3100 = vmatpush1.xpose.msra.mxu0 0.0
    %3101 = vmatprep.subr.mxu0 0.0
    %3102 = vmatpush1.xpose.msra.mxu0 0.0
    %3103 = vmatprep.subr.mxu0 0.0
    %3104 = vmatpush1.xpose.msra.mxu0 0.0
    %3105 = vmatprep.subr.mxu0 0.0
    %3106 = vmatpush1.xpose.msra.mxu0 0.0
    %3107 = vmatprep.subr.mxu0 0.0
    %3108 = vmatpush1.xpose.msra.mxu0 0.0
    %3109 = vmatprep.subr.mxu0 0.0
    %3110 = vmatpush1.xpose.msra.mxu0 0.0
    %3111 = vmatprep.subr.mxu0 0.0
    %3112 = vmatpush1.xpose.msra.mxu0 0.0
    %3113 = vmatprep.subr.mxu0 0.0
    %3114 = vmatpush1.xpose.msra.mxu0 0.0
    %3115 = vmatprep.subr.mxu0 0.0
    %3116 = vmatpush1.xpose.msra.mxu0 0.0
    %3117 = vmatprep.subr.mxu0 0.0
    %3118 = vmatpush1.xpose.msra.mxu0 0.0
    %3119 = vmatprep.subr.mxu0 0.0
    %3120 = vmatpush1.xpose.msra.mxu0 0.0
    %3121 = vmatprep.subr.mxu0 0.0
    %3122 = vmatpush1.xpose.msra.mxu0 0.0
    %3123 = vmatprep.subr.mxu0 0.0
    %3124 = vmatpush1.xpose.msra.mxu0 0.0
    %3125 = vmatprep.subr.mxu0 0.0
    %3126 = vmatpush1.xpose.msra.mxu0 0.0
    %3127 = vmatprep.subr.mxu0 0.0
    %3128 = vmatpush1.xpose.msra.mxu0 0.0
    %3129 = vmatprep.mubr.f32.mxu0 0.0
    %3130 = vmatmul.mubr.f32.gmra.mrb[0].mxu0 %v3061
    %v3131 = vpop.f32.mrb[0].mxu0
    %v3132 = vadd.f32 0.0, %v3131
    %v3133 = vpop.f32.mrb[0].mxu0
    %3134 = vdwg.mxu0
    %v3135 = vmul.f32 %v3132, 0.35355338
    %v3136 = vsel %vm435, %v3135, -inf
    %3137 = vmax.xlane.f32.xlu0 %v3136
    %v3138 = vpop.xlane.xlu0 %3137
    %v3139 = vsub.f32 %v3135, %v3138
    %v3140 = vmul.f32 %v3139, 1.442695
    %v3141 = vpow.pop %v3140
    %v3142 = vsel %vm435, %v3141, 0.0
    %3143 = vadd.xlane.f32.xlu0 %v3142
    %v3144 = vpop.xlane.xlu0 %3143
    %v3145 = vrcp.pop %v3144
    %v3146 = vmul.f32 %v3141, %v3145
    %3147 = vrot.lane.b32.xlu0 %v2220, 48
    %v3148 = vpop.permute.xlu0 %3147
    %v3151 = vsel %vm435, %v3146, 0
    %3153 = vmatprep.subr.mxu0 0.0
    %3154 = vmatpush1.msra.mxu0 %v3148
    %3155 = vmatprep.subr.mxu0 0.0
    %3156 = vmatpush1.msra.mxu0 0.0
    %3157 = vmatprep.subr.mxu0 0.0
    %3158 = vmatpush1.msra.mxu0 0.0
    %3159 = vmatprep.subr.mxu0 0.0
    %3160 = vmatpush1.msra.mxu0 0.0
    %3161 = vmatprep.subr.mxu0 0.0
    %3162 = vmatpush1.msra.mxu0 0.0
    %3163 = vmatprep.subr.mxu0 0.0
    %3164 = vmatpush1.msra.mxu0 0.0
    %3165 = vmatprep.subr.mxu0 0.0
    %3166 = vmatpush1.msra.mxu0 0.0
    %3167 = vmatprep.subr.mxu0 0.0
    %3168 = vmatpush1.msra.mxu0 0.0
    %3169 = vmatprep.subr.mxu0 0.0
    %3170 = vmatpush1.msra.mxu0 0.0
    %3171 = vmatprep.subr.mxu0 0.0
    %3172 = vmatpush1.msra.mxu0 0.0
    %3173 = vmatprep.subr.mxu0 0.0
    %3174 = vmatpush1.msra.mxu0 0.0
    %3175 = vmatprep.subr.mxu0 0.0
    %3176 = vmatpush1.msra.mxu0 0.0
    %3177 = vmatprep.subr.mxu0 0.0
    %3178 = vmatpush1.msra.mxu0 0.0
    %3179 = vmatprep.subr.mxu0 0.0
    %3180 = vmatpush1.msra.mxu0 0.0
    %3181 = vmatprep.subr.mxu0 0.0
    %3182 = vmatpush1.msra.mxu0 0.0
    %3183 = vmatprep.subr.mxu0 0.0
    %3184 = vmatpush1.msra.mxu0 0.0
    %3185 = vmatprep.subr.mxu0 0.0
    %3186 = vmatpush1.msra.mxu0 0.0
    %3187 = vmatprep.subr.mxu0 0.0
    %3188 = vmatpush1.msra.mxu0 0.0
    %3189 = vmatprep.subr.mxu0 0.0
    %3190 = vmatpush1.msra.mxu0 0.0
    %3191 = vmatprep.subr.mxu0 0.0
    %3192 = vmatpush1.msra.mxu0 0.0
    %3193 = vmatprep.subr.mxu0 0.0
    %3194 = vmatpush1.msra.mxu0 0.0
    %3195 = vmatprep.subr.mxu0 0.0
    %3196 = vmatpush1.msra.mxu0 0.0
    %3197 = vmatprep.subr.mxu0 0.0
    %3198 = vmatpush1.msra.mxu0 0.0
    %3199 = vmatprep.subr.mxu0 0.0
    %3200 = vmatpush1.msra.mxu0 0.0
    %3201 = vmatprep.subr.mxu0 0.0
    %3202 = vmatpush1.msra.mxu0 0.0
    %3203 = vmatprep.subr.mxu0 0.0
    %3204 = vmatpush1.msra.mxu0 0.0
    %3205 = vmatprep.subr.mxu0 0.0
    %3206 = vmatpush1.msra.mxu0 0.0
    %3207 = vmatprep.subr.mxu0 0.0
    %3208 = vmatpush1.msra.mxu0 0.0
    %3209 = vmatprep.subr.mxu0 0.0
    %3210 = vmatpush1.msra.mxu0 0.0
    %3211 = vmatprep.subr.mxu0 0.0
    %3212 = vmatpush1.msra.mxu0 0.0
    %3213 = vmatprep.subr.mxu0 0.0
    %3214 = vmatpush1.msra.mxu0 0.0
    %3215 = vmatprep.subr.mxu0 0.0
    %3216 = vmatpush1.msra.mxu0 0.0
    %3217 = vmatprep.mubr.f32.mxu0 0.0
    %3218 = vmatmul.mubr.f32.gmra.mrb[0].mxu0 %v3151
    %v3219 = vpop.f32.mrb[0].mxu0
    %v3220 = vadd.f32 0.0, %v3219
    %v3221 = vpop.f32.mrb[0].mxu0
    %3222 = vdwg.mxu0
    %3223 = vrot.lane.b32.xlu0 %v2225, 112
    %v3224 = vpop.permute.xlu0 %3223
    %3225 = vrot.lane.b32.xlu0 %v2225, 80
    %v3226 = vpop.permute.xlu0 %3225
    %v3227 = vsel %vm435, %v3224, 0
    %v3229 = vsel %vm435, %v3226, 0
    %3231 = vmatprep.subr.mxu0 0.0
    %3232 = vmatpush1.xpose.msra.mxu0 %v3229
    %3233 = vmatprep.subr.mxu0 0.0
    %3234 = vmatpush1.xpose.msra.mxu0 0.0
    %3235 = vmatprep.subr.mxu0 0.0
    %3236 = vmatpush1.xpose.msra.mxu0 0.0
    %3237 = vmatprep.subr.mxu0 0.0
    %3238 = vmatpush1.xpose.msra.mxu0 0.0
    %3239 = vmatprep.subr.mxu0 0.0
    %3240 = vmatpush1.xpose.msra.mxu0 0.0
    %3241 = vmatprep.subr.mxu0 0.0
    %3242 = vmatpush1.xpose.msra.mxu0 0.0
    %3243 = vmatprep.subr.mxu0 0.0
    %3244 = vmatpush1.xpose.msra.mxu0 0.0
    %3245 = vmatprep.subr.mxu0 0.0
    %3246 = vmatpush1.xpose.msra.mxu0 0.0
    %3247 = vmatprep.subr.mxu0 0.0
    %3248 = vmatpush1.xpose.msra.mxu0 0.0
    %3249 = vmatprep.subr.mxu0 0.0
    %3250 = vmatpush1.xpose.msra.mxu0 0.0
    %3251 = vmatprep.subr.mxu0 0.0
    %3252 = vmatpush1.xpose.msra.mxu0 0.0
    %3253 = vmatprep.subr.mxu0 0.0
    %3254 = vmatpush1.xpose.msra.mxu0 0.0
    %3255 = vmatprep.subr.mxu0 0.0
    %3256 = vmatpush1.xpose.msra.mxu0 0.0
    %3257 = vmatprep.subr.mxu0 0.0
    %3258 = vmatpush1.xpose.msra.mxu0 0.0
    %3259 = vmatprep.subr.mxu0 0.0
    %3260 = vmatpush1.xpose.msra.mxu0 0.0
    %3261 = vmatprep.subr.mxu0 0.0
    %3262 = vmatpush1.xpose.msra.mxu0 0.0
    %3263 = vmatprep.subr.mxu0 0.0
    %3264 = vmatpush1.xpose.msra.mxu0 0.0
    %3265 = vmatprep.subr.mxu0 0.0
    %3266 = vmatpush1.xpose.msra.mxu0 0.0
    %3267 = vmatprep.subr.mxu0 0.0
    %3268 = vmatpush1.xpose.msra.mxu0 0.0
    %3269 = vmatprep.subr.mxu0 0.0
    %3270 = vmatpush1.xpose.msra.mxu0 0.0
    %3271 = vmatprep.subr.mxu0 0.0
    %3272 = vmatpush1.xpose.msra.mxu0 0.0
    %3273 = vmatprep.subr.mxu0 0.0
    %3274 = vmatpush1.xpose.msra.mxu0 0.0
    %3275 = vmatprep.subr.mxu0 0.0
    %3276 = vmatpush1.xpose.msra.mxu0 0.0
    %3277 = vmatprep.subr.mxu0 0.0
    %3278 = vmatpush1.xpose.msra.mxu0 0.0
    %3279 = vmatprep.subr.mxu0 0.0
    %3280 = vmatpush1.xpose.msra.mxu0 0.0
    %3281 = vmatprep.subr.mxu0 0.0
    %3282 = vmatpush1.xpose.msra.mxu0 0.0
    %3283 = vmatprep.subr.mxu0 0.0
    %3284 = vmatpush1.xpose.msra.mxu0 0.0
    %3285 = vmatprep.subr.mxu0 0.0
    %3286 = vmatpush1.xpose.msra.mxu0 0.0
    %3287 = vmatprep.subr.mxu0 0.0
    %3288 = vmatpush1.xpose.msra.mxu0 0.0
    %3289 = vmatprep.subr.mxu0 0.0
    %3290 = vmatpush1.xpose.msra.mxu0 0.0
    %3291 = vmatprep.subr.mxu0 0.0
    %3292 = vmatpush1.xpose.msra.mxu0 0.0
    %3293 = vmatprep.subr.mxu0 0.0
    %3294 = vmatpush1.xpose.msra.mxu0 0.0
    %3295 = vmatprep.mubr.f32.mxu0 0.0
    %3296 = vmatmul.mubr.f32.gmra.mrb[0].mxu0 %v3227
    %v3297 = vpop.f32.mrb[0].mxu0
    %v3298 = vadd.f32 0.0, %v3297
    %v3299 = vpop.f32.mrb[0].mxu0
    %3300 = vdwg.mxu0
    %v3301 = vmul.f32 %v3298, 0.35355338
    %v3302 = vsel %vm435, %v3301, -inf
    %3303 = vmax.xlane.f32.xlu0 %v3302
    %v3304 = vpop.xlane.xlu0 %3303
    %v3305 = vsub.f32 %v3301, %v3304
    %v3306 = vmul.f32 %v3305, 1.442695
    %v3307 = vpow.pop %v3306
    %v3308 = vsel %vm435, %v3307, 0.0
    %3309 = vadd.xlane.f32.xlu0 %v3308
    %v3310 = vpop.xlane.xlu0 %3309
    %v3311 = vrcp.pop %v3310
    %v3312 = vmul.f32 %v3307, %v3311
    %3313 = vrot.lane.b32.xlu0 %v2225, 48
    %v3314 = vpop.permute.xlu0 %3313
    %v3317 = vsel %vm435, %v3312, 0
    %3319 = vmatprep.subr.mxu0 0.0
    %3320 = vmatpush1.msra.mxu0 %v3314
    %3321 = vmatprep.subr.mxu0 0.0
    %3322 = vmatpush1.msra.mxu0 0.0
    %3323 = vmatprep.subr.mxu0 0.0
    %3324 = vmatpush1.msra.mxu0 0.0
    %3325 = vmatprep.subr.mxu0 0.0
    %3326 = vmatpush1.msra.mxu0 0.0
    %3327 = vmatprep.subr.mxu0 0.0
    %3328 = vmatpush1.msra.mxu0 0.0
    %3329 = vmatprep.subr.mxu0 0.0
    %3330 = vmatpush1.msra.mxu0 0.0
    %3331 = vmatprep.subr.mxu0 0.0
    %3332 = vmatpush1.msra.mxu0 0.0
    %3333 = vmatprep.subr.mxu0 0.0
    %3334 = vmatpush1.msra.mxu0 0.0
    %3335 = vmatprep.subr.mxu0 0.0
    %3336 = vmatpush1.msra.mxu0 0.0
    %3337 = vmatprep.subr.mxu0 0.0
    %3338 = vmatpush1.msra.mxu0 0.0
    %3339 = vmatprep.subr.mxu0 0.0
    %3340 = vmatpush1.msra.mxu0 0.0
    %3341 = vmatprep.subr.mxu0 0.0
    %3342 = vmatpush1.msra.mxu0 0.0
    %3343 = vmatprep.subr.mxu0 0.0
    %3344 = vmatpush1.msra.mxu0 0.0
    %3345 = vmatprep.subr.mxu0 0.0
    %3346 = vmatpush1.msra.mxu0 0.0
    %3347 = vmatprep.subr.mxu0 0.0
    %3348 = vmatpush1.msra.mxu0 0.0
    %3349 = vmatprep.subr.mxu0 0.0
    %3350 = vmatpush1.msra.mxu0 0.0
    %3351 = vmatprep.subr.mxu0 0.0
    %3352 = vmatpush1.msra.mxu0 0.0
    %3353 = vmatprep.subr.mxu0 0.0
    %3354 = vmatpush1.msra.mxu0 0.0
    %3355 = vmatprep.subr.mxu0 0.0
    %3356 = vmatpush1.msra.mxu0 0.0
    %3357 = vmatprep.subr.mxu0 0.0
    %3358 = vmatpush1.msra.mxu0 0.0
    %3359 = vmatprep.subr.mxu0 0.0
    %3360 = vmatpush1.msra.mxu0 0.0
    %3361 = vmatprep.subr.mxu0 0.0
    %3362 = vmatpush1.msra.mxu0 0.0
    %3363 = vmatprep.subr.mxu0 0.0
    %3364 = vmatpush1.msra.mxu0 0.0
    %3365 = vmatprep.subr.mxu0 0.0
    %3366 = vmatpush1.msra.mxu0 0.0
    %3367 = vmatprep.subr.mxu0 0.0
    %3368 = vmatpush1.msra.mxu0 0.0
    %3369 = vmatprep.subr.mxu0 0.0
    %3370 = vmatpush1.msra.mxu0 0.0
    %3371 = vmatprep.subr.mxu0 0.0
    %3372 = vmatpush1.msra.mxu0 0.0
    %3373 = vmatprep.subr.mxu0 0.0
    %3374 = vmatpush1.msra.mxu0 0.0
    %3375 = vmatprep.subr.mxu0 0.0
    %3376 = vmatpush1.msra.mxu0 0.0
    %3377 = vmatprep.subr.mxu0 0.0
    %3378 = vmatpush1.msra.mxu0 0.0
    %3379 = vmatprep.subr.mxu0 0.0
    %3380 = vmatpush1.msra.mxu0 0.0
    %3381 = vmatprep.subr.mxu0 0.0
    %3382 = vmatpush1.msra.mxu0 0.0
    %3383 = vmatprep.mubr.f32.mxu0 0.0
    %3384 = vmatmul.mubr.f32.gmra.mrb[0].mxu0 %v3317
    %v3385 = vpop.f32.mrb[0].mxu0
    %v3386 = vadd.f32 0.0, %v3385
    %v3387 = vpop.f32.mrb[0].mxu0
    %3388 = vdwg.mxu0
    %v3390 = vsel %vm435, %v3220, 0
    %v3393 = vsel %vm435, %v3386, 0
    %3395 = vmatprep.subr.mxu0 0.0
    %3396 = vmatpush1.msra.mxu0 %v2231
    %3397 = vmatprep.subr.mxu0 0.0
    %3398 = vmatpush1.msra.mxu0 0.0
    %3399 = vmatprep.subr.mxu0 0.0
    %3400 = vmatpush1.msra.mxu0 0.0
    %3401 = vmatprep.subr.mxu0 0.0
    %3402 = vmatpush1.msra.mxu0 0.0
    %3403 = vmatprep.subr.mxu0 0.0
    %3404 = vmatpush1.msra.mxu0 0.0
    %3405 = vmatprep.subr.mxu0 0.0
    %3406 = vmatpush1.msra.mxu0 0.0
    %3407 = vmatprep.subr.mxu0 0.0
    %3408 = vmatpush1.msra.mxu0 0.0
    %3409 = vmatprep.subr.mxu0 0.0
    %3410 = vmatpush1.msra.mxu0 0.0
    %3411 = vmatprep.subr.mxu0 0.0
    %3412 = vmatpush1.msra.mxu0 0.0
    %3413 = vmatprep.subr.mxu0 0.0
    %3414 = vmatpush1.msra.mxu0 0.0
    %3415 = vmatprep.subr.mxu0 0.0
    %3416 = vmatpush1.msra.mxu0 0.0
    %3417 = vmatprep.subr.mxu0 0.0
    %3418 = vmatpush1.msra.mxu0 0.0
    %3419 = vmatprep.subr.mxu0 0.0
    %3420 = vmatpush1.msra.mxu0 0.0
    %3421 = vmatprep.subr.mxu0 0.0
    %3422 = vmatpush1.msra.mxu0 0.0
    %3423 = vmatprep.subr.mxu0 0.0
    %3424 = vmatpush1.msra.mxu0 0.0
    %3425 = vmatprep.subr.mxu0 0.0
    %3426 = vmatpush1.msra.mxu0 0.0
    %3427 = vmatprep.subr.mxu0 0.0
    %3428 = vmatpush1.msra.mxu0 0.0
    %3429 = vmatprep.subr.mxu0 0.0
    %3430 = vmatpush1.msra.mxu0 0.0
    %3431 = vmatprep.subr.mxu0 0.0
    %3432 = vmatpush1.msra.mxu0 0.0
    %3433 = vmatprep.subr.mxu0 0.0
    %3434 = vmatpush1.msra.mxu0 0.0
    %3435 = vmatprep.subr.mxu0 0.0
    %3436 = vmatpush1.msra.mxu0 0.0
    %3437 = vmatprep.subr.mxu0 0.0
    %3438 = vmatpush1.msra.mxu0 0.0
    %3439 = vmatprep.subr.mxu0 0.0
    %3440 = vmatpush1.msra.mxu0 0.0
    %3441 = vmatprep.subr.mxu0 0.0
    %3442 = vmatpush1.msra.mxu0 0.0
    %3443 = vmatprep.subr.mxu0 0.0
    %3444 = vmatpush1.msra.mxu0 0.0
    %3445 = vmatprep.subr.mxu0 0.0
    %3446 = vmatpush1.msra.mxu0 0.0
    %3447 = vmatprep.subr.mxu0 0.0
    %3448 = vmatpush1.msra.mxu0 0.0
    %3449 = vmatprep.subr.mxu0 0.0
    %3450 = vmatpush1.msra.mxu0 0.0
    %3451 = vmatprep.subr.mxu0 0.0
    %3452 = vmatpush1.msra.mxu0 0.0
    %3453 = vmatprep.subr.mxu0 0.0
    %3454 = vmatpush1.msra.mxu0 0.0
    %3455 = vmatprep.subr.mxu0 0.0
    %3456 = vmatpush1.msra.mxu0 0.0
    %3457 = vmatprep.subr.mxu0 0.0
    %3458 = vmatpush1.msra.mxu0 0.0
    %3459 = vmatprep.mubr.f32.mxu0 0.0
    %3460 = vmatmul.mubr.f32.gmra.mrb[0].mxu0 %v3390
    %v3461 = vpop.f32.mrb[0].mxu0
    %v3462 = vadd.f32 0.0, %v3461
    %v3463 = vpop.f32.mrb[0].mxu0
    %3464 = vmatprep.mubr.f32.mxu0 0.0
    %3465 = vmatmul.mubr.f32.gmra.mrb[0].mxu0 %v3393
    %v3466 = vpop.f32.mrb[0].mxu0
    %v3467 = vadd.f32 0.0, %v3466
    %v3468 = vpop.f32.mrb[0].mxu0
    %3469 = vdwg.mxu0
    %v3470 = vadd.f32 %v3049, %v3462
    %v3471 = vadd.f32 %v3054, %v3467
    %3472 = vrot.lane.b32.xlu0 %v2220, 104
    %v3473 = vpop.permute.xlu0 %3472
    %3474 = vrot.lane.b32.xlu0 %v2220, 72
    %v3475 = vpop.permute.xlu0 %3474
    %v3476 = vsel %vm435, %v3473, 0
    %v3478 = vsel %vm435, %v3475, 0
    %3480 = vmatprep.subr.mxu0 0.0
    %3481 = vmatpush1.xpose.msra.mxu0 %v3478
    %3482 = vmatprep.subr.mxu0 0.0
    %3483 = vmatpush1.xpose.msra.mxu0 0.0
    %3484 = vmatprep.subr.mxu0 0.0
    %3485 = vmatpush1.xpose.msra.mxu0 0.0
    %3486 = vmatprep.subr.mxu0 0.0
    %3487 = vmatpush1.xpose.msra.mxu0 0.0
    %3488 = vmatprep.subr.mxu0 0.0
    %3489 = vmatpush1.xpose.msra.mxu0 0.0
    %3490 = vmatprep.subr.mxu0 0.0
    %3491 = vmatpush1.xpose.msra.mxu0 0.0
    %3492 = vmatprep.subr.mxu0 0.0
    %3493 = vmatpush1.xpose.msra.mxu0 0.0
    %3494 = vmatprep.subr.mxu0 0.0
    %3495 = vmatpush1.xpose.msra.mxu0 0.0
    %3496 = vmatprep.subr.mxu0 0.0
    %3497 = vmatpush1.xpose.msra.mxu0 0.0
    %3498 = vmatprep.subr.mxu0 0.0
    %3499 = vmatpush1.xpose.msra.mxu0 0.0
    %3500 = vmatprep.subr.mxu0 0.0
    %3501 = vmatpush1.xpose.msra.mxu0 0.0
    %3502 = vmatprep.subr.mxu0 0.0
    %3503 = vmatpush1.xpose.msra.mxu0 0.0
    %3504 = vmatprep.subr.mxu0 0.0
    %3505 = vmatpush1.xpose.msra.mxu0 0.0
    %3506 = vmatprep.subr.mxu0 0.0
    %3507 = vmatpush1.xpose.msra.mxu0 0.0
    %3508 = vmatprep.subr.mxu0 0.0
    %3509 = vmatpush1.xpose.msra.mxu0 0.0
    %3510 = vmatprep.subr.mxu0 0.0
    %3511 = vmatpush1.xpose.msra.mxu0 0.0
    %3512 = vmatprep.subr.mxu0 0.0
    %3513 = vmatpush1.xpose.msra.mxu0 0.0
    %3514 = vmatprep.subr.mxu0 0.0
    %3515 = vmatpush1.xpose.msra.mxu0 0.0
    %3516 = vmatprep.subr.mxu0 0.0
    %3517 = vmatpush1.xpose.msra.mxu0 0.0
    %3518 = vmatprep.subr.mxu0 0.0
    %3519 = vmatpush1.xpose.msra.mxu0 0.0
    %3520 = vmatprep.subr.mxu0 0.0
    %3521 = vmatpush1.xpose.msra.mxu0 0.0
    %3522 = vmatprep.subr.mxu0 0.0
    %3523 = vmatpush1.xpose.msra.mxu0 0.0
    %3524 = vmatprep.subr.mxu0 0.0
    %3525 = vmatpush1.xpose.msra.mxu0 0.0
    %3526 = vmatprep.subr.mxu0 0.0
    %3527 = vmatpush1.xpose.msra.mxu0 0.0
    %3528 = vmatprep.subr.mxu0 0.0
    %3529 = vmatpush1.xpose.msra.mxu0 0.0
    %3530 = vmatprep.subr.mxu0 0.0
    %3531 = vmatpush1.xpose.msra.mxu0 0.0
    %3532 = vmatprep.subr.mxu0 0.0
    %3533 = vmatpush1.xpose.msra.mxu0 0.0
    %3534 = vmatprep.subr.mxu0 0.0
    %3535 = vmatpush1.xpose.msra.mxu0 0.0
    %3536 = vmatprep.subr.mxu0 0.0
    %3537 = vmatpush1.xpose.msra.mxu0 0.0
    %3538 = vmatprep.subr.mxu0 0.0
    %3539 = vmatpush1.xpose.msra.mxu0 0.0
    %3540 = vmatprep.subr.mxu0 0.0
    %3541 = vmatpush1.xpose.msra.mxu0 0.0
    %3542 = vmatprep.subr.mxu0 0.0
    %3543 = vmatpush1.xpose.msra.mxu0 0.0
    %3544 = vmatprep.mubr.f32.mxu0 0.0
    %3545 = vmatmul.mubr.f32.gmra.mrb[0].mxu0 %v3476
    %v3546 = vpop.f32.mrb[0].mxu0
    %v3547 = vadd.f32 0.0, %v3546
    %v3548 = vpop.f32.mrb[0].mxu0
    %3549 = vdwg.mxu0
    %v3550 = vmul.f32 %v3547, 0.35355338
    %v3551 = vsel %vm435, %v3550, -inf
    %3552 = vmax.xlane.f32.xlu0 %v3551
    %v3553 = vpop.xlane.xlu0 %3552
    %v3554 = vsub.f32 %v3550, %v3553
    %v3555 = vmul.f32 %v3554, 1.442695
    %v3556 = vpow.pop %v3555
    %v3557 = vsel %vm435, %v3556, 0.0
    %3558 = vadd.xlane.f32.xlu0 %v3557
    %v3559 = vpop.xlane.xlu0 %3558
    %v3560 = vrcp.pop %v3559
    %v3561 = vmul.f32 %v3556, %v3560
    %3562 = vrot.lane.b32.xlu0 %v2220, 40
    %v3563 = vpop.permute.xlu0 %3562
    %v3566 = vsel %vm435, %v3561, 0
    %3568 = vmatprep.subr.mxu0 0.0
    %3569 = vmatpush1.msra.mxu0 %v3563
    %3570 = vmatprep.subr.mxu0 0.0
    %3571 = vmatpush1.msra.mxu0 0.0
    %3572 = vmatprep.subr.mxu0 0.0
    %3573 = vmatpush1.msra.mxu0 0.0
    %3574 = vmatprep.subr.mxu0 0.0
    %3575 = vmatpush1.msra.mxu0 0.0
    %3576 = vmatprep.subr.mxu0 0.0
    %3577 = vmatpush1.msra.mxu0 0.0
    %3578 = vmatprep.subr.mxu0 0.0
    %3579 = vmatpush1.msra.mxu0 0.0
    %3580 = vmatprep.subr.mxu0 0.0
    %3581 = vmatpush1.msra.mxu0 0.0
    %3582 = vmatprep.subr.mxu0 0.0
    %3583 = vmatpush1.msra.mxu0 0.0
    %3584 = vmatprep.subr.mxu0 0.0
    %3585 = vmatpush1.msra.mxu0 0.0
    %3586 = vmatprep.subr.mxu0 0.0
    %3587 = vmatpush1.msra.mxu0 0.0
    %3588 = vmatprep.subr.mxu0 0.0
    %3589 = vmatpush1.msra.mxu0 0.0
    %3590 = vmatprep.subr.mxu0 0.0
    %3591 = vmatpush1.msra.mxu0 0.0
    %3592 = vmatprep.subr.mxu0 0.0
    %3593 = vmatpush1.msra.mxu0 0.0
    %3594 = vmatprep.subr.mxu0 0.0
    %3595 = vmatpush1.msra.mxu0 0.0
    %3596 = vmatprep.subr.mxu0 0.0
    %3597 = vmatpush1.msra.mxu0 0.0
    %3598 = vmatprep.subr.mxu0 0.0
    %3599 = vmatpush1.msra.mxu0 0.0
    %3600 = vmatprep.subr.mxu0 0.0
    %3601 = vmatpush1.msra.mxu0 0.0
    %3602 = vmatprep.subr.mxu0 0.0
    %3603 = vmatpush1.msra.mxu0 0.0
    %3604 = vmatprep.subr.mxu0 0.0
    %3605 = vmatpush1.msra.mxu0 0.0
    %3606 = vmatprep.subr.mxu0 0.0
    %3607 = vmatpush1.msra.mxu0 0.0
    %3608 = vmatprep.subr.mxu0 0.0
    %3609 = vmatpush1.msra.mxu0 0.0
    %3610 = vmatprep.subr.mxu0 0.0
    %3611 = vmatpush1.msra.mxu0 0.0
    %3612 = vmatprep.subr.mxu0 0.0
    %3613 = vmatpush1.msra.mxu0 0.0
    %3614 = vmatprep.subr.mxu0 0.0
    %3615 = vmatpush1.msra.mxu0 0.0
    %3616 = vmatprep.subr.mxu0 0.0
    %3617 = vmatpush1.msra.mxu0 0.0
    %3618 = vmatprep.subr.mxu0 0.0
    %3619 = vmatpush1.msra.mxu0 0.0
    %3620 = vmatprep.subr.mxu0 0.0
    %3621 = vmatpush1.msra.mxu0 0.0
    %3622 = vmatprep.subr.mxu0 0.0
    %3623 = vmatpush1.msra.mxu0 0.0
    %3624 = vmatprep.subr.mxu0 0.0
    %3625 = vmatpush1.msra.mxu0 0.0
    %3626 = vmatprep.subr.mxu0 0.0
    %3627 = vmatpush1.msra.mxu0 0.0
    %3628 = vmatprep.subr.mxu0 0.0
    %3629 = vmatpush1.msra.mxu0 0.0
    %3630 = vmatprep.subr.mxu0 0.0
    %3631 = vmatpush1.msra.mxu0 0.0
    %3632 = vmatprep.mubr.f32.mxu0 0.0
    %3633 = vmatmul.mubr.f32.gmra.mrb[0].mxu0 %v3566
    %v3634 = vpop.f32.mrb[0].mxu0
    %v3635 = vadd.f32 0.0, %v3634
    %v3636 = vpop.f32.mrb[0].mxu0
    %3637 = vdwg.mxu0
    %3638 = vrot.lane.b32.xlu0 %v2225, 104
    %v3639 = vpop.permute.xlu0 %3638
    %3640 = vrot.lane.b32.xlu0 %v2225, 72
    %v3641 = vpop.permute.xlu0 %3640
    %v3642 = vsel %vm435, %v3639, 0
    %v3644 = vsel %vm435, %v3641, 0
    %3646 = vmatprep.subr.mxu0 0.0
    %3647 = vmatpush1.xpose.msra.mxu0 %v3644
    %3648 = vmatprep.subr.mxu0 0.0
    %3649 = vmatpush1.xpose.msra.mxu0 0.0
    %3650 = vmatprep.subr.mxu0 0.0
    %3651 = vmatpush1.xpose.msra.mxu0 0.0
    %3652 = vmatprep.subr.mxu0 0.0
    %3653 = vmatpush1.xpose.msra.mxu0 0.0
    %3654 = vmatprep.subr.mxu0 0.0
    %3655 = vmatpush1.xpose.msra.mxu0 0.0
    %3656 = vmatprep.subr.mxu0 0.0
    %3657 = vmatpush1.xpose.msra.mxu0 0.0
    %3658 = vmatprep.subr.mxu0 0.0
    %3659 = vmatpush1.xpose.msra.mxu0 0.0
    %3660 = vmatprep.subr.mxu0 0.0
    %3661 = vmatpush1.xpose.msra.mxu0 0.0
    %3662 = vmatprep.subr.mxu0 0.0
    %3663 = vmatpush1.xpose.msra.mxu0 0.0
    %3664 = vmatprep.subr.mxu0 0.0
    %3665 = vmatpush1.xpose.msra.mxu0 0.0
    %3666 = vmatprep.subr.mxu0 0.0
    %3667 = vmatpush1.xpose.msra.mxu0 0.0
    %3668 = vmatprep.subr.mxu0 0.0
    %3669 = vmatpush1.xpose.msra.mxu0 0.0
    %3670 = vmatprep.subr.mxu0 0.0
    %3671 = vmatpush1.xpose.msra.mxu0 0.0
    %3672 = vmatprep.subr.mxu0 0.0
    %3673 = vmatpush1.xpose.msra.mxu0 0.0
    %3674 = vmatprep.subr.mxu0 0.0
    %3675 = vmatpush1.xpose.msra.mxu0 0.0
    %3676 = vmatprep.subr.mxu0 0.0
    %3677 = vmatpush1.xpose.msra.mxu0 0.0
    %3678 = vmatprep.subr.mxu0 0.0
    %3679 = vmatpush1.xpose.msra.mxu0 0.0
    %3680 = vmatprep.subr.mxu0 0.0
    %3681 = vmatpush1.xpose.msra.mxu0 0.0
    %3682 = vmatprep.subr.mxu0 0.0
    %3683 = vmatpush1.xpose.msra.mxu0 0.0
    %3684 = vmatprep.subr.mxu0 0.0
    %3685 = vmatpush1.xpose.msra.mxu0 0.0
    %3686 = vmatprep.subr.mxu0 0.0
    %3687 = vmatpush1.xpose.msra.mxu0 0.0
    %3688 = vmatprep.subr.mxu0 0.0
    %3689 = vmatpush1.xpose.msra.mxu0 0.0
    %3690 = vmatprep.subr.mxu0 0.0
    %3691 = vmatpush1.xpose.msra.mxu0 0.0
    %3692 = vmatprep.subr.mxu0 0.0
    %3693 = vmatpush1.xpose.msra.mxu0 0.0
    %3694 = vmatprep.subr.mxu0 0.0
    %3695 = vmatpush1.xpose.msra.mxu0 0.0
    %3696 = vmatprep.subr.mxu0 0.0
    %3697 = vmatpush1.xpose.msra.mxu0 0.0
    %3698 = vmatprep.subr.mxu0 0.0
    %3699 = vmatpush1.xpose.msra.mxu0 0.0
    %3700 = vmatprep.subr.mxu0 0.0
    %3701 = vmatpush1.xpose.msra.mxu0 0.0
    %3702 = vmatprep.subr.mxu0 0.0
    %3703 = vmatpush1.xpose.msra.mxu0 0.0
    %3704 = vmatprep.subr.mxu0 0.0
    %3705 = vmatpush1.xpose.msra.mxu0 0.0
    %3706 = vmatprep.subr.mxu0 0.0
    %3707 = vmatpush1.xpose.msra.mxu0 0.0
    %3708 = vmatprep.subr.mxu0 0.0
    %3709 = vmatpush1.xpose.msra.mxu0 0.0
    %3710 = vmatprep.mubr.f32.mxu0 0.0
    %3711 = vmatmul.mubr.f32.gmra.mrb[0].mxu0 %v3642
    %v3712 = vpop.f32.mrb[0].mxu0
    %v3713 = vadd.f32 0.0, %v3712
    %v3714 = vpop.f32.mrb[0].mxu0
    %3715 = vdwg.mxu0
    %v3716 = vmul.f32 %v3713, 0.35355338
    %v3717 = vsel %vm435, %v3716, -inf
    %3718 = vmax.xlane.f32.xlu0 %v3717
    %v3719 = vpop.xlane.xlu0 %3718
    %v3720 = vsub.f32 %v3716, %v3719
    %v3721 = vmul.f32 %v3720, 1.442695
    %v3722 = vpow.pop %v3721
    %v3723 = vsel %vm435, %v3722, 0.0
    %3724 = vadd.xlane.f32.xlu0 %v3723
    %v3725 = vpop.xlane.xlu0 %3724
    %v3726 = vrcp.pop %v3725
    %v3727 = vmul.f32 %v3722, %v3726
    %3728 = vrot.lane.b32.xlu0 %v2225, 40
    %v3729 = vpop.permute.xlu0 %3728
    %v3732 = vsel %vm435, %v3727, 0
    %3734 = vmatprep.subr.mxu0 0.0
    %3735 = vmatpush1.msra.mxu0 %v3729
    %3736 = vmatprep.subr.mxu0 0.0
    %3737 = vmatpush1.msra.mxu0 0.0
    %3738 = vmatprep.subr.mxu0 0.0
    %3739 = vmatpush1.msra.mxu0 0.0
    %3740 = vmatprep.subr.mxu0 0.0
    %3741 = vmatpush1.msra.mxu0 0.0
    %3742 = vmatprep.subr.mxu0 0.0
    %3743 = vmatpush1.msra.mxu0 0.0
    %3744 = vmatprep.subr.mxu0 0.0
    %3745 = vmatpush1.msra.mxu0 0.0
    %3746 = vmatprep.subr.mxu0 0.0
    %3747 = vmatpush1.msra.mxu0 0.0
    %3748 = vmatprep.subr.mxu0 0.0
    %3749 = vmatpush1.msra.mxu0 0.0
    %3750 = vmatprep.subr.mxu0 0.0
    %3751 = vmatpush1.msra.mxu0 0.0
    %3752 = vmatprep.subr.mxu0 0.0
    %3753 = vmatpush1.msra.mxu0 0.0
    %3754 = vmatprep.subr.mxu0 0.0
    %3755 = vmatpush1.msra.mxu0 0.0
    %3756 = vmatprep.subr.mxu0 0.0
    %3757 = vmatpush1.msra.mxu0 0.0
    %3758 = vmatprep.subr.mxu0 0.0
    %3759 = vmatpush1.msra.mxu0 0.0
    %3760 = vmatprep.subr.mxu0 0.0
    %3761 = vmatpush1.msra.mxu0 0.0
    %3762 = vmatprep.subr.mxu0 0.0
    %3763 = vmatpush1.msra.mxu0 0.0
    %3764 = vmatprep.subr.mxu0 0.0
    %3765 = vmatpush1.msra.mxu0 0.0
    %3766 = vmatprep.subr.mxu0 0.0
    %3767 = vmatpush1.msra.mxu0 0.0
    %3768 = vmatprep.subr.mxu0 0.0
    %3769 = vmatpush1.msra.mxu0 0.0
    %3770 = vmatprep.subr.mxu0 0.0
    %3771 = vmatpush1.msra.mxu0 0.0
    %3772 = vmatprep.subr.mxu0 0.0
    %3773 = vmatpush1.msra.mxu0 0.0
    %3774 = vmatprep.subr.mxu0 0.0
    %3775 = vmatpush1.msra.mxu0 0.0
    %3776 = vmatprep.subr.mxu0 0.0
    %3777 = vmatpush1.msra.mxu0 0.0
    %3778 = vmatprep.subr.mxu0 0.0
    %3779 = vmatpush1.msra.mxu0 0.0
    %3780 = vmatprep.subr.mxu0 0.0
    %3781 = vmatpush1.msra.mxu0 0.0
    %3782 = vmatprep.subr.mxu0 0.0
    %3783 = vmatpush1.msra.mxu0 0.0
    %3784 = vmatprep.subr.mxu0 0.0
    %3785 = vmatpush1.msra.mxu0 0.0
    %3786 = vmatprep.subr.mxu0 0.0
    %3787 = vmatpush1.msra.mxu0 0.0
    %3788 = vmatprep.subr.mxu0 0.0
    %3789 = vmatpush1.msra.mxu0 0.0
    %3790 = vmatprep.subr.mxu0 0.0
    %3791 = vmatpush1.msra.mxu0 0.0
    %3792 = vmatprep.subr.mxu0 0.0
    %3793 = vmatpush1.msra.mxu0 0.0
    %3794 = vmatprep.subr.mxu0 0.0
    %3795 = vmatpush1.msra.mxu0 0.0
    %3796 = vmatprep.subr.mxu0 0.0
    %3797 = vmatpush1.msra.mxu0 0.0
    %3798 = vmatprep.mubr.f32.mxu0 0.0
    %3799 = vmatmul.mubr.f32.gmra.mrb[0].mxu0 %v3732
    %v3800 = vpop.f32.mrb[0].mxu0
    %v3801 = vadd.f32 0.0, %v3800
    %v3802 = vpop.f32.mrb[0].mxu0
    %3803 = vdwg.mxu0
    %v3805 = vsel %vm435, %v3635, 0
    %v3808 = vsel %vm435, %v3801, 0
    %3810 = vmatprep.subr.mxu0 0.0
    %3811 = vmatpush1.msra.mxu0 %v2232
    %3812 = vmatprep.subr.mxu0 0.0
    %3813 = vmatpush1.msra.mxu0 0.0
    %3814 = vmatprep.subr.mxu0 0.0
    %3815 = vmatpush1.msra.mxu0 0.0
    %3816 = vmatprep.subr.mxu0 0.0
    %3817 = vmatpush1.msra.mxu0 0.0
    %3818 = vmatprep.subr.mxu0 0.0
    %3819 = vmatpush1.msra.mxu0 0.0
    %3820 = vmatprep.subr.mxu0 0.0
    %3821 = vmatpush1.msra.mxu0 0.0
    %3822 = vmatprep.subr.mxu0 0.0
    %3823 = vmatpush1.msra.mxu0 0.0
    %3824 = vmatprep.subr.mxu0 0.0
    %3825 = vmatpush1.msra.mxu0 0.0
    %3826 = vmatprep.subr.mxu0 0.0
    %3827 = vmatpush1.msra.mxu0 0.0
    %3828 = vmatprep.subr.mxu0 0.0
    %3829 = vmatpush1.msra.mxu0 0.0
    %3830 = vmatprep.subr.mxu0 0.0
    %3831 = vmatpush1.msra.mxu0 0.0
    %3832 = vmatprep.subr.mxu0 0.0
    %3833 = vmatpush1.msra.mxu0 0.0
    %3834 = vmatprep.subr.mxu0 0.0
    %3835 = vmatpush1.msra.mxu0 0.0
    %3836 = vmatprep.subr.mxu0 0.0
    %3837 = vmatpush1.msra.mxu0 0.0
    %3838 = vmatprep.subr.mxu0 0.0
    %3839 = vmatpush1.msra.mxu0 0.0
    %3840 = vmatprep.subr.mxu0 0.0
    %3841 = vmatpush1.msra.mxu0 0.0
    %3842 = vmatprep.subr.mxu0 0.0
    %3843 = vmatpush1.msra.mxu0 0.0
    %3844 = vmatprep.subr.mxu0 0.0
    %3845 = vmatpush1.msra.mxu0 0.0
    %3846 = vmatprep.subr.mxu0 0.0
    %3847 = vmatpush1.msra.mxu0 0.0
    %3848 = vmatprep.subr.mxu0 0.0
    %3849 = vmatpush1.msra.mxu0 0.0
    %3850 = vmatprep.subr.mxu0 0.0
    %3851 = vmatpush1.msra.mxu0 0.0
    %3852 = vmatprep.subr.mxu0 0.0
    %3853 = vmatpush1.msra.mxu0 0.0
    %3854 = vmatprep.subr.mxu0 0.0
    %3855 = vmatpush1.msra.mxu0 0.0
    %3856 = vmatprep.subr.mxu0 0.0
    %3857 = vmatpush1.msra.mxu0 0.0
    %3858 = vmatprep.subr.mxu0 0.0
    %3859 = vmatpush1.msra.mxu0 0.0
    %3860 = vmatprep.subr.mxu0 0.0
    %3861 = vmatpush1.msra.mxu0 0.0
    %3862 = vmatprep.subr.mxu0 0.0
    %3863 = vmatpush1.msra.mxu0 0.0
    %3864 = vmatprep.subr.mxu0 0.0
    %3865 = vmatpush1.msra.mxu0 0.0
    %3866 = vmatprep.subr.mxu0 0.0
    %3867 = vmatpush1.msra.mxu0 0.0
    %3868 = vmatprep.subr.mxu0 0.0
    %3869 = vmatpush1.msra.mxu0 0.0
    %3870 = vmatprep.subr.mxu0 0.0
    %3871 = vmatpush1.msra.mxu0 0.0
    %3872 = vmatprep.subr.mxu0 0.0
    %3873 = vmatpush1.msra.mxu0 0.0
    %3874 = vmatprep.mubr.f32.mxu0 0.0
    %3875 = vmatmul.mubr.f32.gmra.mrb[0].mxu0 %v3805
    %v3876 = vpop.f32.mrb[0].mxu0
    %v3877 = vadd.f32 0.0, %v3876
    %v3878 = vpop.f32.mrb[0].mxu0
    %3879 = vmatprep.mubr.f32.mxu0 0.0
    %3880 = vmatmul.mubr.f32.gmra.mrb[0].mxu0 %v3808
    %v3881 = vpop.f32.mrb[0].mxu0
    %v3882 = vadd.f32 0.0, %v3881
    %v3883 = vpop.f32.mrb[0].mxu0
    %3884 = vdwg.mxu0
    %v3885 = vadd.f32 %v3470, %v3877
    %v3886 = vadd.f32 %v3471, %v3882
    %v3887 = vadd.f32 %v2135, %v3885
    %v3888 = vadd.f32 %v2136, %v3886
    %v3889 = vld [vmem:[#allocation12 + $0x1] sm:$0x1]
    %v3890 = vlaneseq
    %v3891 = vshrl.u32 %v3890, 7
    %v3892 = vsub.s32 0, %v3891
    %v3893 = vrot.slane %v3889, %v3892
    %v3894 = vadd.f32 %v3887, %v3893
    %v3895 = vadd.f32 %v3888, %v3893
    %v3896 = vsel %vm346, %v3894, 0.0
    %3897 = vadd.xlane.f32.xlu0 %v3896
    %v3898 = vpop.xlane.xlu0 %3897
    %v3899 = vsel %vm346, %v3895, 0.0
    %3900 = vadd.xlane.f32.xlu0 %v3899
    %v3901 = vpop.xlane.xlu0 %3900
    %v3902 = vmul.f32 %v3898, %v2102
    %v3903 = vmul.f32 %v3901, %v2102
    %v3904 = vsub.f32 %v3894, %v3902
    %v3905 = vsub.f32 %v3895, %v3903
    %v3906 = vmul.f32 %v3904, %v3904
    %v3907 = vmul.f32 %v3905, %v3905
    %v3908 = vsel %vm346, %v3906, 0.0
    %3909 = vadd.xlane.f32.xlu0 %v3908
    %v3910 = vpop.xlane.xlu0 %3909
    %v3911 = vsel %vm346, %v3907, 0.0
    %3912 = vadd.xlane.f32.xlu0 %v3911
    %v3913 = vpop.xlane.xlu0 %3912
    %v3914 = vmul.f32 %v3910, %v2102
    %v3915 = vmul.f32 %v3913, %v2102
    %v3916 = vadd.f32 %v3914, 1e-05
    %v3917 = vadd.f32 %v3915, 1e-05
    %v3918 = vrsqrt.pop %v3916
    %v3919 = vrsqrt.pop %v3917
    %v3920 = vmul.f32 %v3904, %v3918
    %v3921 = vmul.f32 %v3905, %v3919
    %v3922 = vld [vmem:[#allocation13 + $0x1] sm:$0x1]
    %v3923 = vlaneseq
    %v3924 = vshrl.u32 %v3923, 7
    %v3925 = vsub.s32 0, %v3924
    %v3926 = vrot.slane %v3922, %v3925
    %v3927 = vmul.f32 %v3920, %v3926
    %v3928 = vmul.f32 %v3921, %v3926
    %v3929 = vld [vmem:[#allocation15 + $0x1] sm:$0x1]
    %v3930 = vlaneseq
    %v3931 = vshrl.u32 %v3930, 7
    %v3932 = vsub.s32 0, %v3931
    %v3933 = vrot.slane %v3929, %v3932
    %v3934 = vadd.f32 %v3927, %v3933
    %v3935 = vadd.f32 %v3928, %v3933
    %v3936 = vld [vmem:[%s10] sm:$0xff]
    %v3937 = vld [vmem:[%s10 + $0x8] sm:$0xff]
    %v3938 = vld [vmem:[%s10 + $0x10] sm:$0xff]
    %v3939 = vld [vmem:[%s10 + $0x18] sm:$0xff]
    %v3941 = vsel %vm346, %v3934, 0
    %v3944 = vsel %vm346, %v3935, 0
    %3946 = vmatprep.subr.mxu0 0.0
    %3947 = vmatpush1.msra.mxu0 %v3936
    %3948 = vmatprep.subr.mxu0 0.0
    %3949 = vmatpush1.msra.mxu0 %v3937
    %3950 = vmatprep.subr.mxu0 0.0
    %3951 = vmatpush1.msra.mxu0 %v3938
    %3952 = vmatprep.subr.mxu0 0.0
    %3953 = vmatpush1.msra.mxu0 %v3939
    %3954 = vmatprep.subr.mxu0 0.0
    %3955 = vmatpush1.msra.mxu0 0.0
    %3956 = vmatprep.subr.mxu0 0.0
    %3957 = vmatpush1.msra.mxu0 0.0
    %3958 = vmatprep.subr.mxu0 0.0
    %3959 = vmatpush1.msra.mxu0 0.0
    %3960 = vmatprep.subr.mxu0 0.0
    %3961 = vmatpush1.msra.mxu0 0.0
    %3962 = vmatprep.subr.mxu0 0.0
    %3963 = vmatpush1.msra.mxu0 0.0
    %3964 = vmatprep.subr.mxu0 0.0
    %3965 = vmatpush1.msra.mxu0 0.0
    %3966 = vmatprep.subr.mxu0 0.0
    %3967 = vmatpush1.msra.mxu0 0.0
    %3968 = vmatprep.subr.mxu0 0.0
    %3969 = vmatpush1.msra.mxu0 0.0
    %3970 = vmatprep.subr.mxu0 0.0
    %3971 = vmatpush1.msra.mxu0 0.0
    %3972 = vmatprep.subr.mxu0 0.0
    %3973 = vmatpush1.msra.mxu0 0.0
    %3974 = vmatprep.subr.mxu0 0.0
    %3975 = vmatpush1.msra.mxu0 0.0
    %3976 = vmatprep.subr.mxu0 0.0
    %3977 = vmatpush1.msra.mxu0 0.0
    %3978 = vmatprep.subr.mxu0 0.0
    %3979 = vmatpush1.msra.mxu0 0.0
    %3980 = vmatprep.subr.mxu0 0.0
    %3981 = vmatpush1.msra.mxu0 0.0
    %3982 = vmatprep.subr.mxu0 0.0
    %3983 = vmatpush1.msra.mxu0 0.0
    %3984 = vmatprep.subr.mxu0 0.0
    %3985 = vmatpush1.msra.mxu0 0.0
    %3986 = vmatprep.subr.mxu0 0.0
    %3987 = vmatpush1.msra.mxu0 0.0
    %3988 = vmatprep.subr.mxu0 0.0
    %3989 = vmatpush1.msra.mxu0 0.0
    %3990 = vmatprep.subr.mxu0 0.0
    %3991 = vmatpush1.msra.mxu0 0.0
    %3992 = vmatprep.subr.mxu0 0.0
    %3993 = vmatpush1.msra.mxu0 0.0
    %3994 = vmatprep.subr.mxu0 0.0
    %3995 = vmatpush1.msra.mxu0 0.0
    %3996 = vmatprep.subr.mxu0 0.0
    %3997 = vmatpush1.msra.mxu0 0.0
    %3998 = vmatprep.subr.mxu0 0.0
    %3999 = vmatpush1.msra.mxu0 0.0
    %4000 = vmatprep.subr.mxu0 0.0
    %4001 = vmatpush1.msra.mxu0 0.0
    %4002 = vmatprep.subr.mxu0 0.0
    %4003 = vmatpush1.msra.mxu0 0.0
    %4004 = vmatprep.subr.mxu0 0.0
    %4005 = vmatpush1.msra.mxu0 0.0
    %4006 = vmatprep.subr.mxu0 0.0
    %4007 = vmatpush1.msra.mxu0 0.0
    %4008 = vmatprep.subr.mxu0 0.0
    %4009 = vmatpush1.msra.mxu0 0.0
    %4010 = vmatprep.mubr.f32.mxu0 0.0
    %4011 = vmatmul.mubr.f32.gmra.mrb[0].mxu0 %v3941
    %v4012 = vpop.f32.mrb[0].mxu0
    %v4013 = vadd.f32 0.0, %v4012
    %v4014 = vpop.f32.mrb[0].mxu0
    %4015 = vmatprep.mubr.f32.mxu0 0.0
    %4016 = vmatmul.mubr.f32.gmra.mrb[0].mxu0 %v3944
    %v4017 = vpop.f32.mrb[0].mxu0
    %v4018 = vadd.f32 0.0, %v4017
    %v4019 = vpop.f32.mrb[0].mxu0
    %4020 = vdwg.mxu0
    %v4021 = vld [vmem:[#allocation16] sm:$0xff]
    %v4022 = vld [vmem:[#allocation16 + $0x8] sm:$0xff]
    %v4023 = vld [vmem:[#allocation16 + $0x10] sm:$0xff]
    %v4024 = vld [vmem:[#allocation16 + $0x18] sm:$0xff]
    %4025 = vmatprep.subr.mxu0 0.0
    %4026 = vmatpush1.msra.mxu0 %v4021
    %4027 = vmatprep.subr.mxu0 0.0
    %4028 = vmatpush1.msra.mxu0 %v4022
    %4029 = vmatprep.subr.mxu0 0.0
    %4030 = vmatpush1.msra.mxu0 %v4023
    %4031 = vmatprep.subr.mxu0 0.0
    %4032 = vmatpush1.msra.mxu0 %v4024
    %4033 = vmatprep.subr.mxu0 0.0
    %4034 = vmatpush1.msra.mxu0 0.0
    %4035 = vmatprep.subr.mxu0 0.0
    %4036 = vmatpush1.msra.mxu0 0.0
    %4037 = vmatprep.subr.mxu0 0.0
    %4038 = vmatpush1.msra.mxu0 0.0
    %4039 = vmatprep.subr.mxu0 0.0
    %4040 = vmatpush1.msra.mxu0 0.0
    %4041 = vmatprep.subr.mxu0 0.0
    %4042 = vmatpush1.msra.mxu0 0.0
    %4043 = vmatprep.subr.mxu0 0.0
    %4044 = vmatpush1.msra.mxu0 0.0
    %4045 = vmatprep.subr.mxu0 0.0
    %4046 = vmatpush1.msra.mxu0 0.0
    %4047 = vmatprep.subr.mxu0 0.0
    %4048 = vmatpush1.msra.mxu0 0.0
    %4049 = vmatprep.subr.mxu0 0.0
    %4050 = vmatpush1.msra.mxu0 0.0
    %4051 = vmatprep.subr.mxu0 0.0
    %4052 = vmatpush1.msra.mxu0 0.0
    %4053 = vmatprep.subr.mxu0 0.0
    %4054 = vmatpush1.msra.mxu0 0.0
    %4055 = vmatprep.subr.mxu0 0.0
    %4056 = vmatpush1.msra.mxu0 0.0
    %4057 = vmatprep.subr.mxu0 0.0
    %4058 = vmatpush1.msra.mxu0 0.0
    %4059 = vmatprep.subr.mxu0 0.0
    %4060 = vmatpush1.msra.mxu0 0.0
    %4061 = vmatprep.subr.mxu0 0.0
    %4062 = vmatpush1.msra.mxu0 0.0
    %4063 = vmatprep.subr.mxu0 0.0
    %4064 = vmatpush1.msra.mxu0 0.0
    %4065 = vmatprep.subr.mxu0 0.0
    %4066 = vmatpush1.msra.mxu0 0.0
    %4067 = vmatprep.subr.mxu0 0.0
    %4068 = vmatpush1.msra.mxu0 0.0
    %4069 = vmatprep.subr.mxu0 0.0
    %4070 = vmatpush1.msra.mxu0 0.0
    %4071 = vmatprep.subr.mxu0 0.0
    %4072 = vmatpush1.msra.mxu0 0.0
    %4073 = vmatprep.subr.mxu0 0.0
    %4074 = vmatpush1.msra.mxu0 0.0
    %4075 = vmatprep.subr.mxu0 0.0
    %4076 = vmatpush1.msra.mxu0 0.0
    %4077 = vmatprep.subr.mxu0 0.0
    %4078 = vmatpush1.msra.mxu0 0.0
    %4079 = vmatprep.subr.mxu0 0.0
    %4080 = vmatpush1.msra.mxu0 0.0
    %4081 = vmatprep.subr.mxu0 0.0
    %4082 = vmatpush1.msra.mxu0 0.0
    %4083 = vmatprep.subr.mxu0 0.0
    %4084 = vmatpush1.msra.mxu0 0.0
    %4085 = vmatprep.subr.mxu0 0.0
    %4086 = vmatpush1.msra.mxu0 0.0
    %4087 = vmatprep.subr.mxu0 0.0
    %4088 = vmatpush1.msra.mxu0 0.0
    %4089 = vmatprep.mubr.f32.mxu0 0.0
    %4090 = vmatmul.mubr.f32.gmra.mrb[0].mxu0 %v3941
    %v4091 = vpop.f32.mrb[0].mxu0
    %v4092 = vadd.f32 0.0, %v4091
    %v4093 = vpop.f32.mrb[0].mxu0
    %4094 = vmatprep.mubr.f32.mxu0 0.0
    %4095 = vmatmul.mubr.f32.gmra.mrb[0].mxu0 %v3944
    %v4096 = vpop.f32.mrb[0].mxu0
    %v4097 = vadd.f32 0.0, %v4096
    %v4098 = vpop.f32.mrb[0].mxu0
    %4099 = vdwg.mxu0
    %vm4102 = vcmask 1040384
    %v4103 = vrot.slane %v4092, 7
    %v4104 = vrot.slane %v4097, 7
    %v4105 = vsel %vm4102, %v4103, %v4104
    %v4108 = vadd.f32 %v4013, %v4103
    %v4109 = vadd.f32 %v4018, %v4105
    %v4110 = vld [vmem:[%s12] sm:$0x1]
    %v4112 = vlaneseq
    %v4113 = vshrl.u32 %v4112, 7
    %v4114 = vsub.s32 0, %v4113
    %v4115 = vrot.slane %v4110, %v4114
    %v4117 = vadd.f32 %v4108, %v4115
    %v4118 = vadd.f32 %v4109, %v4115
    %v4119 = vmax.f32 %v4117, 0.0
    %v4120 = vmax.f32 %v4118, 0.0
    %v4121 = vld [vmem:[%s13] sm:$0xff]
    %v4122 = vld [vmem:[%s13 + $0x8] sm:$0xff]
    %v4123 = vld [vmem:[%s13 + $0x10] sm:$0xff]
    %v4124 = vld [vmem:[%s13 + $0x18] sm:$0xff]
    %v4125 = vld [vmem:[%s13 + $0x20] sm:$0xff]
    %v4126 = vld [vmem:[%s13 + $0x28] sm:$0xff]
    %v4127 = vld [vmem:[%s13 + $0x30] sm:$0xff]
    %v4128 = vld [vmem:[%s13 + $0x38] sm:$0xff]
    %v4129 = vld [vmem:[%s13 + $0x40] sm:$0xff]
    %v4130 = vld [vmem:[%s13 + $0x48] sm:$0xff]
    %v4131 = vld [vmem:[%s13 + $0x50] sm:$0xff]
    %v4132 = vld [vmem:[%s13 + $0x58] sm:$0xff]
    %v4133 = vld [vmem:[%s13 + $0x60] sm:$0xff]
    %v4134 = vld [vmem:[%s13 + $0x68] sm:$0xff]
    %v4135 = vld [vmem:[%s13 + $0x70] sm:$0xff]
    %v4136 = vld [vmem:[%s13 + $0x78] sm:$0xff]
    %v4137 = vld [vmem:[%s14] sm:$0x1]
    %v4139 = vlaneseq
    %v4140 = vshrl.u32 %v4139, 7
    %v4141 = vsub.s32 0, %v4140
    %v4142 = vrot.slane %v4137, %v4141
    %vm4146 = vcmask 1046528
    %v4147 = vrot.slane %v4119, 1
    %v4148 = vrot.slane %v4120, 1
    %v4149 = vsel %vm4146, %v4147, %v4148
    %4152 = vmatprep.subr.mxu0 0.0
    %4153 = vmatpush1.msra.mxu0 %v4121
    %4154 = vmatprep.subr.mxu0 0.0
    %4155 = vmatpush1.msra.mxu0 %v4122
    %4156 = vmatprep.subr.mxu0 0.0
    %4157 = vmatpush1.msra.mxu0 %v4123
    %4158 = vmatprep.subr.mxu0 0.0
    %4159 = vmatpush1.msra.mxu0 %v4124
    %4160 = vmatprep.subr.mxu0 0.0
    %4161 = vmatpush1.msra.mxu0 %v4125
    %4162 = vmatprep.subr.mxu0 0.0
    %4163 = vmatpush1.msra.mxu0 %v4126
    %4164 = vmatprep.subr.mxu0 0.0
    %4165 = vmatpush1.msra.mxu0 %v4127
    %4166 = vmatprep.subr.mxu0 0.0
    %4167 = vmatpush1.msra.mxu0 %v4128
    %4168 = vmatprep.subr.mxu0 0.0
    %4169 = vmatpush1.msra.mxu0 %v4129
    %4170 = vmatprep.subr.mxu0 0.0
    %4171 = vmatpush1.msra.mxu0 %v4130
    %4172 = vmatprep.subr.mxu0 0.0
    %4173 = vmatpush1.msra.mxu0 %v4131
    %4174 = vmatprep.subr.mxu0 0.0
    %4175 = vmatpush1.msra.mxu0 %v4132
    %4176 = vmatprep.subr.mxu0 0.0
    %4177 = vmatpush1.msra.mxu0 %v4133
    %4178 = vmatprep.subr.mxu0 0.0
    %4179 = vmatpush1.msra.mxu0 %v4134
    %4180 = vmatprep.subr.mxu0 0.0
    %4181 = vmatpush1.msra.mxu0 %v4135
    %4182 = vmatprep.subr.mxu0 0.0
    %4183 = vmatpush1.msra.mxu0 %v4136
    %4184 = vmatprep.subr.mxu0 0.0
    %4185 = vmatpush1.msra.mxu0 0.0
    %4186 = vmatprep.subr.mxu0 0.0
    %4187 = vmatpush1.msra.mxu0 0.0
    %4188 = vmatprep.subr.mxu0 0.0
    %4189 = vmatpush1.msra.mxu0 0.0
    %4190 = vmatprep.subr.mxu0 0.0
    %4191 = vmatpush1.msra.mxu0 0.0
    %4192 = vmatprep.subr.mxu0 0.0
    %4193 = vmatpush1.msra.mxu0 0.0
    %4194 = vmatprep.subr.mxu0 0.0
    %4195 = vmatpush1.msra.mxu0 0.0
    %4196 = vmatprep.subr.mxu0 0.0
    %4197 = vmatpush1.msra.mxu0 0.0
    %4198 = vmatprep.subr.mxu0 0.0
    %4199 = vmatpush1.msra.mxu0 0.0
    %4200 = vmatprep.subr.mxu0 0.0
    %4201 = vmatpush1.msra.mxu0 0.0
    %4202 = vmatprep.subr.mxu0 0.0
    %4203 = vmatpush1.msra.mxu0 0.0
    %4204 = vmatprep.subr.mxu0 0.0
    %4205 = vmatpush1.msra.mxu0 0.0
    %4206 = vmatprep.subr.mxu0 0.0
    %4207 = vmatpush1.msra.mxu0 0.0
    %4208 = vmatprep.subr.mxu0 0.0
    %4209 = vmatpush1.msra.mxu0 0.0
    %4210 = vmatprep.subr.mxu0 0.0
    %4211 = vmatpush1.msra.mxu0 0.0
    %4212 = vmatprep.subr.mxu0 0.0
    %4213 = vmatpush1.msra.mxu0 0.0
    %4214 = vmatprep.subr.mxu0 0.0
    %4215 = vmatpush1.msra.mxu0 0.0
    %4216 = vmatprep.mubr.f32.mxu0 0.0
    %4217 = vmatmul.mubr.f32.gmra.mrb[0].mxu0 %v4149
    %v4218 = vpop.f32.mrb[0].mxu0
    %v4219 = vadd.f32 %v4142, %v4218
    %v4220 = vpop.f32.mrb[0].mxu0
    %4221 = vmatprep.mubr.f32.mxu0 0.0
    %4222 = vmatmul.mubr.f32.gmra.mrb[0].mxu0 %v4148
    %v4223 = vpop.f32.mrb[0].mxu0
    %v4224 = vadd.f32 %v4142, %v4223
    %v4225 = vpop.f32.mrb[0].mxu0
    %4226 = vdwg.mxu0
    %vm4227 = vcmask 63488
    %4228 = vst.msk [vmem:[#allocation18] sm:$0x7f] %vm4227, %v4219
    %4230 = vrot.lane.b32.xlu0 %v4224, 8
    %v4231 = vpop.permute.xlu0 %4230
    %vm4233 = vcmask 129088
    %4234 = vst.msk [vmem:[#allocation18] sm:$0x7f] %vm4233, %v4231
    // Predicated region
    $region98: #{tpu_custom_call.1} parent=1 // pred_check
      _
    $region99: #{tpu_custom_call.1} parent=1 // pred_check_branch
      %4236 = sbr.rel (0) target = $region101
    $region100: #{tpu_custom_call.1} parent=1 // pred_region
      %s4238 = ssub.s32 128, 128
      %4239 = vsyncadd [#allocation4], %s4238
      %s4241 = sshll.u32 [#allocation18], 4
      %s4242 = int_to_ptr.vmem [resolvable:$true] %s4241
      %4244 = dma.vmem_to_hbm [thread:$0]  %s4242, 128, %s15, [#allocation4]
    $region101: #{tpu_custom_call.1} parent=1 // pred_fallthru
      _
    // Predicated region
    $region102: #{tpu_custom_call.1} parent=1 // pred_check
      _
    $region103: #{tpu_custom_call.1} parent=1 // pred_check_branch
      %4246 = sbr.rel (0) target = $region105
    $region104: #{tpu_custom_call.1} parent=1 // pred_region
      %4247 = dma.done [#allocation4], 128
    $region105: #{tpu_custom_call.1} parent=1 // pred_fallthru
      _
    %4248 = vsyncpa [#allocation3], 1
    %4249 = vsyncpa [#allocation8], 1
    %4250 = vsyncpa [#allocation11], 1
    %4251 = vsyncpa [#allocation14], 1
    %4252 = vsyncpa [#allocation17], 1
    %4253 = vsyncpa [#allocation4], 1
    %4254 = vsyncpa [#allocation5], 1

</llo_original>
